<compile_context>
chip_gen: v7x
topology: tpu7x:2x2x1
jax: 0.10.0
libtpu: 0.0.40
codegen_flags: <defaults>
</compile_context>

<pallas_src>
import functools
import math

import jax
import jax.numpy as jnp
from jax.experimental import pallas as pl
from jax.experimental.pallas import tpu as pltpu


# ----------------------------------------------------------------------------
# Fused forward kernel: phi_x -> BiGRU layer 0 -> BiGRU layer 1 -> output head
# ----------------------------------------------------------------------------
def _fused_birnn_kernel(
    # inputs -------------------------------------------------------------
    x_ref,                                     # (M, D)   time-major, M = T*B
    phi_w_ref, phi_b_ref,                      # (D, H), (1, H)
    wih0f_ref, bx0f_ref, wih0b_ref, bx0b_ref,  # (H, 3H), (1, 3H) per direction
    whh0_ref, bhn0f_ref, bhn0b_ref,            # (2H, 6H) block-diag, (1, H) x2
    wih1ff_ref, wih1fb_ref, bx1f_ref,          # (H, 3H) x2, (1, 3H)   fwd dir
    wih1bf_ref, wih1bb_ref, bx1b_ref,          # (H, 3H) x2, (1, 3H)   bwd dir
    whh1_ref, bhn1f_ref, bhn1b_ref,            # (2H, 6H), (1, H) x2
    o1wf_ref, o1wb_ref, o1b_ref,               # (H, H) x2, (1, H)
    o2w_ref, o2b_ref,                          # (H, D), (1, D)
    # outputs ------------------------------------------------------------
    o_ref,                                     # (M, D)
    # scratch ------------------------------------------------------------
    gxf_s, gxb_s,                              # (M, 3H) per-direction input gates [r|z|n]
    yf_s, yb_s,                                # (M, H)  per-direction hidden outputs
    *, T, B, H, unroll):
    f32 = jnp.float32

    # ----- phi_x (Linear+ReLU) + layer-0 input projections: hoisted throughput
    #       matmuls, results stay in VMEM scratch (no HBM round-trip).
    phi = jnp.dot(x_ref[...], phi_w_ref[...], preferred_element_type=f32)
    phi = jnp.maximum(phi + phi_b_ref[...], 0.0)                         # (M, H)
    gxf_s[...] = jnp.dot(phi, wih0f_ref[...], preferred_element_type=f32) + bx0f_ref[...]
    gxb_s[...] = jnp.dot(phi, wih0b_ref[...], preferred_element_type=f32) + bx0b_ref[...]

    def bigru_layer(whh_blk, bhn_f, bhn_b):
        """One bidirectional GRU layer.  Both directions share one fori_loop;
        hidden states are carried in vregs; the two h@W_hh matmuls per step are
        fused through the block-diagonal (2H, 6H) weight (one MXU issue/step)."""

        def gate(gx, gh, off, h, bhn):
            r = jax.nn.sigmoid(gx[:, 0:H] + gh[:, off:off + H])
            z = jax.nn.sigmoid(gx[:, H:2 * H] + gh[:, off + H:off + 2 * H])
            n = jnp.tanh(gx[:, 2 * H:3 * H] + r * (gh[:, off + 2 * H:off + 3 * H] + bhn))
            return (1.0 - z) * n + z * h

        def step(i, carry):
            hf, hb = carry
            tf = pl.multiple_of(i * B, B)                 # fwd time row offset
            tb = pl.multiple_of((T - 1 - i) * B, B)       # bwd time row offset
            gxf = gxf_s[pl.ds(tf, B), :]                  # (B, 3H)
            gxb = gxb_s[pl.ds(tb, B), :]                  # (B, 3H)
            hcat = jnp.concatenate([hf, hb], axis=-1)     # (B, 2H)
            gh = jnp.dot(hcat, whh_blk, preferred_element_type=f32)    # (B, 6H)
            hf_new = gate(gxf, gh, 0, hf, bhn_f)
            hb_new = gate(gxb, gh, 3 * H, hb, bhn_b)
            yf_s[pl.ds(tf, B), :] = hf_new
            yb_s[pl.ds(tb, B), :] = hb_new
            return hf_new, hb_new

        h0 = jnp.zeros((B, H), f32)
        jax.lax.fori_loop(0, T, step, (h0, h0), unroll=unroll)

    # ----- layer 0 recurrence
    bigru_layer(whh0_ref[...], bhn0f_ref[...], bhn0b_ref[...])

    # ----- layer-1 input projections: fwd/bwd halves consumed via pre-split
    #       weights (two matmuls summed) -- the (.,2H) concat never exists.
    y0f, y0b = yf_s[...], yb_s[...]
    gxf_s[...] = (jnp.dot(y0f, wih1ff_ref[...], preferred_element_type=f32)
                  + jnp.dot(y0b, wih1fb_ref[...], preferred_element_type=f32)
                  + bx1f_ref[...])
    gxb_s[...] = (jnp.dot(y0f, wih1bf_ref[...], preferred_element_type=f32)
                  + jnp.dot(y0b, wih1bb_ref[...], preferred_element_type=f32)
                  + bx1b_ref[...])
    # TODO(synk): inter-layer GRU dropout (p=0.5) is train-mode only; identity here.

    # ----- layer 1 recurrence (reuses the same scratches)
    bigru_layer(whh1_ref[...], bhn1f_ref[...], bhn1b_ref[...])

    # ----- output head: Linear(2H->H)+Dropout(id)+ReLU+Linear(H->D)+Tanh, fused.
    mid = (jnp.dot(yf_s[...], o1wf_ref[...], preferred_element_type=f32)
           + jnp.dot(yb_s[...], o1wb_ref[...], preferred_element_type=f32)
           + o1b_ref[...])
    mid = jnp.maximum(mid, 0.0)
    out = jnp.dot(mid, o2w_ref[...], preferred_element_type=f32) + o2b_ref[...]
    # TODO(synk): for large M, D(<128) last dim lowers to masked stores; pad D to
    #             128 or emit a transposed (D, M) slab for lane-dense stores.
    o_ref[...] = jnp.tanh(out).astype(o_ref.dtype)


# ----------------------------------------------------------------------------
# Parameter construction / packing
# ----------------------------------------------------------------------------
def _uniform(key, shape, fan_in):
    bound = 1.0 / math.sqrt(fan_in)
    return jax.random.uniform(key, shape, jnp.float32, -bound, bound)


def init_params(key, input_dim, hidden_dim):
    """Deterministic PyTorch-style uniform init, fused-gate layout [r | z | n]."""
    H = hidden_dim
    keys = iter(jax.random.split(key, 64))
    p = {"hidden_dim": H, "input_dim": input_dim}

    # phi_x: Linear(input_dim -> H)
    p["phi_w"] = _uniform(next(keys), (input_dim, H), input_dim)
    p["phi_b"] = _uniform(next(keys), (1, H), input_dim)

    # GRU: 2 layers, bidirectional.
    for layer in range(2):
        in_dim = H if layer == 0 else 2 * H
        for direction in ("fwd", "bwd"):
            w_ih = _uniform(next(keys), (in_dim, 3 * H), H)   # W_i{r,z,n}^T, (D, 3H)
            w_hh = _uniform(next(keys), (H, 3 * H), H)        # W_h{r,z,n}^T, (H, 3H)
            b_ih = _uniform(next(keys), (1, 3 * H), H)
            b_hh = _uniform(next(keys), (1, 3 * H), H)
            # Fold b_hh for r/z into the input-projection bias; keep b_hn separate
            # (it is multiplied by r inside the recurrence).
            bx = b_ih + jnp.concatenate(
                [b_hh[:, :2 * H], jnp.zeros((1, H), jnp.float32)], axis=1)
            bhn = b_hh[:, 2 * H:3 * H]
            p[f"gru_l{layer}_{direction}"] = (w_ih, w_hh, bx, bhn)

    # outputlayer: Linear(2H -> H) + Dropout + ReLU + Linear(H -> input_dim) + Tanh
    p["out1_w"] = _uniform(next(keys), (2 * H, H), 2 * H)
    p["out1_b"] = _uniform(next(keys), (1, H), 2 * H)
    p["out2_w"] = _uniform(next(keys), (H, input_dim), H)
    p["out2_b"] = _uniform(next(keys), (1, input_dim), H)
    return p


def _block_diag(a, b):
    """[[a, 0], [0, b]] for a,b of shape (H, 3H) -> (2H, 6H)."""
    return jnp.concatenate(
        [jnp.concatenate([a, jnp.zeros_like(b)], axis=1),
         jnp.concatenate([jnp.zeros_like(a), b], axis=1)], axis=0)


def pack_params(p):
    """One-time (outside jit) reorganization into the fused kernel's layout:
    block-diagonal h->gates weights, layer-1 / output-head weights pre-split
    along their 2H (fwd|bwd) input dim."""
    H = p["hidden_dim"]
    wih_f0, whh_f0, bx_f0, bhn_f0 = p["gru_l0_fwd"]
    wih_b0, whh_b0, bx_b0, bhn_b0 = p["gru_l0_bwd"]
    wih_f1, whh_f1, bx_f1, bhn_f1 = p["gru_l1_fwd"]
    wih_b1, whh_b1, bx_b1, bhn_b1 = p["gru_l1_bwd"]
    kernel_args = (
        p["phi_w"], p["phi_b"],
        wih_f0, bx_f0, wih_b0, bx_b0,
        _block_diag(whh_f0, whh_b0), bhn_f0, bhn_b0,
        wih_f1[:H], wih_f1[H:], bx_f1,
        wih_b1[:H], wih_b1[H:], bx_b1,
        _block_diag(whh_f1, whh_b1), bhn_f1, bhn_b1,
        p["out1_w"][:H], p["out1_w"][H:], p["out1_b"],
        p["out2_w"], p["out2_b"],
    )
    return {"hidden_dim": H, "input_dim": p["input_dim"],
            "kernel_args": tuple(jnp.asarray(a) for a in kernel_args)}


# ----------------------------------------------------------------------------
# Forward pass (inference semantics): everything in ONE pallas_call
# ----------------------------------------------------------------------------
def birnn_based_gen_forward(packed, x_o):
    """x_o: (B, T, input_dim) -> (B, T, input_dim)."""
    B, T, D = x_o.shape
    H = packed["hidden_dim"]
    M = T * B
    x_flat = jnp.transpose(x_o, (1, 0, 2)).reshape(M, D)   # time-major rows t*B+b
    args = (x_flat,) + packed["kernel_args"]

    out_flat = pl.pallas_call(
        functools.partial(_fused_birnn_kernel, T=T, B=B, H=H,
                          unroll=True if T <= 16 else 4),
        out_shape=jax.ShapeDtypeStruct((M, D), jnp.float32),
        in_specs=[pl.BlockSpec(memory_space=pltpu.MemorySpace.VMEM)] * len(args),
        out_specs=pl.BlockSpec(memory_space=pltpu.MemorySpace.VMEM),
        scratch_shapes=[
            pltpu.VMEM((M, 3 * H), jnp.float32),   # fwd input gates [r|z|n]
            pltpu.VMEM((M, 3 * H), jnp.float32),   # bwd input gates [r|z|n]
            pltpu.VMEM((M, H), jnp.float32),       # fwd hidden-state outputs
            pltpu.VMEM((M, H), jnp.float32),       # bwd hidden-state outputs
        ],
    )(*args)

    return jnp.transpose(out_flat.reshape(T, B, D), (1, 0, 2))


# ----------------------------------------------------------------------------
# Pure-JAX reference (same eval-mode semantics) for a numerical cross-check
# ----------------------------------------------------------------------------
def reference_forward(p, x_o):
    H = p["hidden_dim"]
    Bsz, T, D = x_o.shape

    def gru_dir(x_seq, wih, whh, bx, bhn, reverse):
        def cell(h, x_t):
            gx = x_t @ wih + bx
            gh = h @ whh
            r = jax.nn.sigmoid(gx[:, :H] + gh[:, :H])
            z = jax.nn.sigmoid(gx[:, H:2 * H] + gh[:, H:2 * H])
            n = jnp.tanh(gx[:, 2 * H:] + r * (gh[:, 2 * H:] + bhn))
            h_new = (1.0 - z) * n + z * h
            return h_new, h_new
        xs = jnp.transpose(x_seq, (1, 0, 2))
        xs = xs[::-1] if reverse else xs
        _, ys = jax.lax.scan(cell, jnp.zeros((Bsz, H), jnp.float32), xs)
        ys = ys[::-1] if reverse else ys
        return jnp.transpose(ys, (1, 0, 2))

    out = jax.nn.relu(x_o @ p["phi_w"] + p["phi_b"])
    for layer in range(2):
        wf = p[f"gru_l{layer}_fwd"]
        wb = p[f"gru_l{layer}_bwd"]
        out = jnp.concatenate(
            [gru_dir(out, *wf, reverse=False), gru_dir(out, *wb, reverse=True)],
            axis=-1)
    mid = jax.nn.relu(out @ p["out1_w"] + p["out1_b"])
    return jnp.tanh(mid @ p["out2_w"] + p["out2_b"])


# ----------------------------------------------------------------------------
if __name__ == "__main__":
    key = jax.random.PRNGKey(0)
    B, T, INPUT_DIM, LATENT_DIM = 2, 8, 4, 32   # params = {'input_dim': 4, 'latent_dim': 32, ...}

    k_params, k_x = jax.random.split(key)
    raw_params = init_params(k_params, INPUT_DIM, LATENT_DIM)
    packed = pack_params(raw_params)
    x_o = jax.random.normal(k_x, (B, T, INPUT_DIM), jnp.float32)

    fwd = jax.jit(lambda x: birnn_based_gen_forward(packed, x))
    y = fwd(x_o)
    jax.block_until_ready(y)

    assert y.shape == (B, T, INPUT_DIM), y.shape
    assert y.dtype == jnp.float32
    assert bool(jnp.all(jnp.isfinite(y)))
    assert bool(jnp.all(jnp.abs(y) <= 1.0))   # final Tanh bounds the output

    y_ref = reference_forward(raw_params, x_o)
    assert bool(jnp.allclose(y, y_ref, atol=1e-3, rtol=1e-3)), \
        float(jnp.max(jnp.abs(y - y_ref)))

    print("KERNEL_OK")
</pallas_src>

<mosaic_0001>
module attributes {stable_mosaic.version = 11 : i64} {
  func.func @_fused_birnn_kernel(%arg0: memref<16x4xf32, #tpu.memory_space<vmem>>, %arg1: memref<4x32xf32, #tpu.memory_space<vmem>>, %arg2: memref<1x32xf32, #tpu.memory_space<vmem>>, %arg3: memref<32x96xf32, #tpu.memory_space<vmem>>, %arg4: memref<1x96xf32, #tpu.memory_space<vmem>>, %arg5: memref<32x96xf32, #tpu.memory_space<vmem>>, %arg6: memref<1x96xf32, #tpu.memory_space<vmem>>, %arg7: memref<64x192xf32, #tpu.memory_space<vmem>>, %arg8: memref<1x32xf32, #tpu.memory_space<vmem>>, %arg9: memref<1x32xf32, #tpu.memory_space<vmem>>, %arg10: memref<32x96xf32, #tpu.memory_space<vmem>>, %arg11: memref<32x96xf32, #tpu.memory_space<vmem>>, %arg12: memref<1x96xf32, #tpu.memory_space<vmem>>, %arg13: memref<32x96xf32, #tpu.memory_space<vmem>>, %arg14: memref<32x96xf32, #tpu.memory_space<vmem>>, %arg15: memref<1x96xf32, #tpu.memory_space<vmem>>, %arg16: memref<64x192xf32, #tpu.memory_space<vmem>>, %arg17: memref<1x32xf32, #tpu.memory_space<vmem>>, %arg18: memref<1x32xf32, #tpu.memory_space<vmem>>, %arg19: memref<32x32xf32, #tpu.memory_space<vmem>>, %arg20: memref<32x32xf32, #tpu.memory_space<vmem>>, %arg21: memref<1x32xf32, #tpu.memory_space<vmem>>, %arg22: memref<32x4xf32, #tpu.memory_space<vmem>>, %arg23: memref<1x4xf32, #tpu.memory_space<vmem>>, %arg24: memref<16x4xf32, #tpu.memory_space<vmem>>, %arg25: memref<16x96xf32, #tpu.memory_space<vmem>>, %arg26: memref<16x96xf32, #tpu.memory_space<vmem>>, %arg27: memref<16x32xf32, #tpu.memory_space<vmem>>, %arg28: memref<16x32xf32, #tpu.memory_space<vmem>>) attributes {dimension_semantics = [], scalar_prefetch = 0 : i64, scratch_operands = 4 : i64, tpu.core_type = #tpu.core_type<tc>} {
    %c0 = arith.constant 0 : index
    %c0_0 = arith.constant 0 : index
    %0 = vector.load %arg0[%c0, %c0_0] : memref<16x4xf32, #tpu.memory_space<vmem>>, vector<16x4xf32>
    %c0_1 = arith.constant 0 : index
    %c0_2 = arith.constant 0 : index
    %1 = vector.load %arg1[%c0_1, %c0_2] : memref<4x32xf32, #tpu.memory_space<vmem>>, vector<4x32xf32>
    %cst = arith.constant dense<0.000000e+00> : vector<16x32xf32>
    %2 = tpu.matmul %0, %1, %cst {dimension_numbers = #tpu.dot_dimension_numbers<[1], [0], [0], [1], [0, 0, 1, 1], [], []>} : vector<16x4xf32>, vector<4x32xf32>, vector<16x32xf32> -> vector<16x32xf32>
    %c0_3 = arith.constant 0 : index
    %c0_4 = arith.constant 0 : index
    %3 = vector.load %arg2[%c0_3, %c0_4] : memref<1x32xf32, #tpu.memory_space<vmem>>, vector<1x32xf32>
    %4 = vector.broadcast %3 : vector<1x32xf32> to vector<16x32xf32>
    %5 = arith.addf %2, %4 : vector<16x32xf32>
    %cst_5 = arith.constant 0.000000e+00 : f32
    %6 = vector.broadcast %cst_5 : f32 to vector<16x32xf32>
    %7 = arith.maximumf %5, %6 : vector<16x32xf32>
    %c0_6 = arith.constant 0 : index
    %c0_7 = arith.constant 0 : index
    %8 = vector.load %arg3[%c0_6, %c0_7] : memref<32x96xf32, #tpu.memory_space<vmem>>, vector<32x96xf32>
    %cst_8 = arith.constant dense<0.000000e+00> : vector<16x96xf32>
    %9 = tpu.matmul %7, %8, %cst_8 {dimension_numbers = #tpu.dot_dimension_numbers<[1], [0], [0], [1], [0, 0, 1, 1], [], []>} : vector<16x32xf32>, vector<32x96xf32>, vector<16x96xf32> -> vector<16x96xf32>
    %c0_9 = arith.constant 0 : index
    %c0_10 = arith.constant 0 : index
    %10 = vector.load %arg4[%c0_9, %c0_10] : memref<1x96xf32, #tpu.memory_space<vmem>>, vector<1x96xf32>
    %11 = vector.broadcast %10 : vector<1x96xf32> to vector<16x96xf32>
    %12 = arith.addf %9, %11 : vector<16x96xf32>
    %c0_11 = arith.constant 0 : index
    %c0_12 = arith.constant 0 : index
    %13 = vector.load %arg25[%c0_11, %c0_12] : memref<16x96xf32, #tpu.memory_space<vmem>>, vector<16x96xf32>
    tpu.vector_store %arg25[%c0_11, %c0_12], %12 {strides = array<i32>} : memref<16x96xf32, #tpu.memory_space<vmem>>, vector<16x96xf32>,
    %c0_13 = arith.constant 0 : index
    %c0_14 = arith.constant 0 : index
    %14 = vector.load %arg5[%c0_13, %c0_14] : memref<32x96xf32, #tpu.memory_space<vmem>>, vector<32x96xf32>
    %cst_15 = arith.constant dense<0.000000e+00> : vector<16x96xf32>
    %15 = tpu.matmul %7, %14, %cst_15 {dimension_numbers = #tpu.dot_dimension_numbers<[1], [0], [0], [1], [0, 0, 1, 1], [], []>} : vector<16x32xf32>, vector<32x96xf32>, vector<16x96xf32> -> vector<16x96xf32>
    %c0_16 = arith.constant 0 : index
    %c0_17 = arith.constant 0 : index
    %16 = vector.load %arg6[%c0_16, %c0_17] : memref<1x96xf32, #tpu.memory_space<vmem>>, vector<1x96xf32>
    %17 = vector.broadcast %16 : vector<1x96xf32> to vector<16x96xf32>
    %18 = arith.addf %15, %17 : vector<16x96xf32>
    %c0_18 = arith.constant 0 : index
    %c0_19 = arith.constant 0 : index
    %19 = vector.load %arg26[%c0_18, %c0_19] : memref<16x96xf32, #tpu.memory_space<vmem>>, vector<16x96xf32>
    tpu.vector_store %arg26[%c0_18, %c0_19], %18 {strides = array<i32>} : memref<16x96xf32, #tpu.memory_space<vmem>>, vector<16x96xf32>,
    %c0_20 = arith.constant 0 : index
    %c0_21 = arith.constant 0 : index
    %20 = vector.load %arg7[%c0_20, %c0_21] : memref<64x192xf32, #tpu.memory_space<vmem>>, vector<64x192xf32>
    %c0_22 = arith.constant 0 : index
    %c0_23 = arith.constant 0 : index
    %21 = vector.load %arg8[%c0_22, %c0_23] : memref<1x32xf32, #tpu.memory_space<vmem>>, vector<1x32xf32>
    %c0_24 = arith.constant 0 : index
    %c0_25 = arith.constant 0 : index
    %22 = vector.load %arg9[%c0_24, %c0_25] : memref<1x32xf32, #tpu.memory_space<vmem>>, vector<1x32xf32>
    %cst_26 = arith.constant 0.000000e+00 : f32
    %23 = vector.broadcast %cst_26 : f32 to vector<2x32xf32>
    %c0_i32 = arith.constant 0 : i32
    %c2_i32 = arith.constant 2 : i32
    %24 = arith.muli %c0_i32, %c2_i32 : i32
    %25 = tpu.assume_multiple %24, 2 : i32
    %c7_i32 = arith.constant 7 : i32
    %26 = arith.subi %c7_i32, %c0_i32 : i32
    %c2_i32_27 = arith.constant 2 : i32
    %27 = arith.muli %26, %c2_i32_27 : i32
    %28 = tpu.assume_multiple %27, 2 : i32
    %29 = arith.index_cast %25 : i32 to index
    %c0_28 = arith.constant 0 : index
    %30 = vector.load %arg25[%29, %c0_28] : memref<16x96xf32, #tpu.memory_space<vmem>>, vector<2x96xf32>
    %31 = arith.index_cast %28 : i32 to index
    %c0_29 = arith.constant 0 : index
    %32 = vector.load %arg26[%31, %c0_29] : memref<16x96xf32, #tpu.memory_space<vmem>>, vector<2x96xf32>
    %33 = tpu.concatenate %23, %23 in 1 : vector<2x32xf32>, vector<2x32xf32> -> vector<2x64xf32>
    %cst_30 = arith.constant dense<0.000000e+00> : vector<2x192xf32>
    %34 = tpu.matmul %33, %20, %cst_30 {dimension_numbers = #tpu.dot_dimension_numbers<[1], [0], [0], [1], [0, 0, 1, 1], [], []>} : vector<2x64xf32>, vector<64x192xf32>, vector<2x192xf32> -> vector<2x192xf32>
    %35 = vector.extract_strided_slice %30 {offsets = [0, 0], sizes = [2, 32], strides = [1, 1]} : vector<2x96xf32> to vector<2x32xf32>
    %36 = vector.extract_strided_slice %34 {offsets = [0, 0], sizes = [2, 32], strides = [1, 1]} : vector<2x192xf32> to vector<2x32xf32>
    %37 = arith.addf %35, %36 : vector<2x32xf32>
    %38 = arith.negf %37 : vector<2x32xf32>
    %39 = math.exp %38 : vector<2x32xf32>
    %cst_31 = arith.constant 1.000000e+00 : f32
    %40 = vector.broadcast %cst_31 : f32 to vector<2x32xf32>
    %41 = arith.addf %40, %39 : vector<2x32xf32>
    %42 = arith.divf %40, %41 : vector<2x32xf32>
    %43 = vector.extract_strided_slice %30 {offsets = [0, 32], sizes = [2, 32], strides = [1, 1]} : vector<2x96xf32> to vector<2x32xf32>
    %44 = vector.extract_strided_slice %34 {offsets = [0, 32], sizes = [2, 32], strides = [1, 1]} : vector<2x192xf32> to vector<2x32xf32>
    %45 = arith.addf %43, %44 : vector<2x32xf32>
    %46 = arith.negf %45 : vector<2x32xf32>
    %47 = math.exp %46 : vector<2x32xf32>
    %cst_32 = arith.constant 1.000000e+00 : f32
    %48 = vector.broadcast %cst_32 : f32 to vector<2x32xf32>
    %49 = arith.addf %48, %47 : vector<2x32xf32>
    %50 = arith.divf %48, %49 : vector<2x32xf32>
    %51 = vector.extract_strided_slice %30 {offsets = [0, 64], sizes = [2, 32], strides = [1, 1]} : vector<2x96xf32> to vector<2x32xf32>
    %52 = vector.extract_strided_slice %34 {offsets = [0, 64], sizes = [2, 32], strides = [1, 1]} : vector<2x192xf32> to vector<2x32xf32>
    %53 = vector.broadcast %21 : vector<1x32xf32> to vector<2x32xf32>
    %54 = arith.addf %52, %53 : vector<2x32xf32>
    %55 = arith.mulf %42, %54 : vector<2x32xf32>
    %56 = arith.addf %51, %55 : vector<2x32xf32>
    %57 = math.tanh %56 : vector<2x32xf32>
    %cst_33 = arith.constant 1.000000e+00 : f32
    %58 = vector.broadcast %cst_33 : f32 to vector<2x32xf32>
    %59 = arith.subf %58, %50 : vector<2x32xf32>
    %60 = arith.mulf %59, %57 : vector<2x32xf32>
    %61 = arith.mulf %50, %23 : vector<2x32xf32>
    %62 = arith.addf %60, %61 : vector<2x32xf32>
    %63 = vector.extract_strided_slice %32 {offsets = [0, 0], sizes = [2, 32], strides = [1, 1]} : vector<2x96xf32> to vector<2x32xf32>
    %64 = vector.extract_strided_slice %34 {offsets = [0, 96], sizes = [2, 32], strides = [1, 1]} : vector<2x192xf32> to vector<2x32xf32>
    %65 = arith.addf %63, %64 : vector<2x32xf32>
    %66 = arith.negf %65 : vector<2x32xf32>
    %67 = math.exp %66 : vector<2x32xf32>
    %cst_34 = arith.constant 1.000000e+00 : f32
    %68 = vector.broadcast %cst_34 : f32 to vector<2x32xf32>
    %69 = arith.addf %68, %67 : vector<2x32xf32>
    %70 = arith.divf %68, %69 : vector<2x32xf32>
    %71 = vector.extract_strided_slice %32 {offsets = [0, 32], sizes = [2, 32], strides = [1, 1]} : vector<2x96xf32> to vector<2x32xf32>
    %72 = vector.extract_strided_slice %34 {offsets = [0, 128], sizes = [2, 32], strides = [1, 1]} : vector<2x192xf32> to vector<2x32xf32>
    %73 = arith.addf %71, %72 : vector<2x32xf32>
    %74 = arith.negf %73 : vector<2x32xf32>
    %75 = math.exp %74 : vector<2x32xf32>
    %cst_35 = arith.constant 1.000000e+00 : f32
    %76 = vector.broadcast %cst_35 : f32 to vector<2x32xf32>
    %77 = arith.addf %76, %75 : vector<2x32xf32>
    %78 = arith.divf %76, %77 : vector<2x32xf32>
    %79 = vector.extract_strided_slice %32 {offsets = [0, 64], sizes = [2, 32], strides = [1, 1]} : vector<2x96xf32> to vector<2x32xf32>
    %80 = vector.extract_strided_slice %34 {offsets = [0, 160], sizes = [2, 32], strides = [1, 1]} : vector<2x192xf32> to vector<2x32xf32>
    %81 = vector.broadcast %22 : vector<1x32xf32> to vector<2x32xf32>
    %82 = arith.addf %80, %81 : vector<2x32xf32>
    %83 = arith.mulf %70, %82 : vector<2x32xf32>
    %84 = arith.addf %79, %83 : vector<2x32xf32>
    %85 = math.tanh %84 : vector<2x32xf32>
    %cst_36 = arith.constant 1.000000e+00 : f32
    %86 = vector.broadcast %cst_36 : f32 to vector<2x32xf32>
    %87 = arith.subf %86, %78 : vector<2x32xf32>
    %88 = arith.mulf %87, %85 : vector<2x32xf32>
    %89 = arith.mulf %78, %23 : vector<2x32xf32>
    %90 = arith.addf %88, %89 : vector<2x32xf32>
    %91 = arith.index_cast %25 : i32 to index
    %c0_37 = arith.constant 0 : index
    %92 = vector.load %arg27[%91, %c0_37] : memref<16x32xf32, #tpu.memory_space<vmem>>, vector<2x32xf32>
    tpu.vector_store %arg27[%91, %c0_37], %62 {strides = array<i32>} : memref<16x32xf32, #tpu.memory_space<vmem>>, vector<2x32xf32>,
    %93 = arith.index_cast %28 : i32 to index
    %c0_38 = arith.constant 0 : index
    %94 = vector.load %arg28[%93, %c0_38] : memref<16x32xf32, #tpu.memory_space<vmem>>, vector<2x32xf32>
    tpu.vector_store %arg28[%93, %c0_38], %90 {strides = array<i32>} : memref<16x32xf32, #tpu.memory_space<vmem>>, vector<2x32xf32>,
    %c1_i32 = arith.constant 1 : i32
    %c2_i32_39 = arith.constant 2 : i32
    %95 = arith.muli %c1_i32, %c2_i32_39 : i32
    %96 = tpu.assume_multiple %95, 2 : i32
    %c7_i32_40 = arith.constant 7 : i32
    %97 = arith.subi %c7_i32_40, %c1_i32 : i32
    %c2_i32_41 = arith.constant 2 : i32
    %98 = arith.muli %97, %c2_i32_41 : i32
    %99 = tpu.assume_multiple %98, 2 : i32
    %100 = arith.index_cast %96 : i32 to index
    %c0_42 = arith.constant 0 : index
    %101 = vector.load %arg25[%100, %c0_42] : memref<16x96xf32, #tpu.memory_space<vmem>>, vector<2x96xf32>
    %102 = arith.index_cast %99 : i32 to index
    %c0_43 = arith.constant 0 : index
    %103 = vector.load %arg26[%102, %c0_43] : memref<16x96xf32, #tpu.memory_space<vmem>>, vector<2x96xf32>
    %104 = tpu.concatenate %62, %90 in 1 : vector<2x32xf32>, vector<2x32xf32> -> vector<2x64xf32>
    %cst_44 = arith.constant dense<0.000000e+00> : vector<2x192xf32>
    %105 = tpu.matmul %104, %20, %cst_44 {dimension_numbers = #tpu.dot_dimension_numbers<[1], [0], [0], [1], [0, 0, 1, 1], [], []>} : vector<2x64xf32>, vector<64x192xf32>, vector<2x192xf32> -> vector<2x192xf32>
    %106 = vector.extract_strided_slice %101 {offsets = [0, 0], sizes = [2, 32], strides = [1, 1]} : vector<2x96xf32> to vector<2x32xf32>
    %107 = vector.extract_strided_slice %105 {offsets = [0, 0], sizes = [2, 32], strides = [1, 1]} : vector<2x192xf32> to vector<2x32xf32>
    %108 = arith.addf %106, %107 : vector<2x32xf32>
    %109 = arith.negf %108 : vector<2x32xf32>
    %110 = math.exp %109 : vector<2x32xf32>
    %cst_45 = arith.constant 1.000000e+00 : f32
    %111 = vector.broadcast %cst_45 : f32 to vector<2x32xf32>
    %112 = arith.addf %111, %110 : vector<2x32xf32>
    %113 = arith.divf %111, %112 : vector<2x32xf32>
    %114 = vector.extract_strided_slice %101 {offsets = [0, 32], sizes = [2, 32], strides = [1, 1]} : vector<2x96xf32> to vector<2x32xf32>
    %115 = vector.extract_strided_slice %105 {offsets = [0, 32], sizes = [2, 32], strides = [1, 1]} : vector<2x192xf32> to vector<2x32xf32>
    %116 = arith.addf %114, %115 : vector<2x32xf32>
    %117 = arith.negf %116 : vector<2x32xf32>
    %118 = math.exp %117 : vector<2x32xf32>
    %cst_46 = arith.constant 1.000000e+00 : f32
    %119 = vector.broadcast %cst_46 : f32 to vector<2x32xf32>
    %120 = arith.addf %119, %118 : vector<2x32xf32>
    %121 = arith.divf %119, %120 : vector<2x32xf32>
    %122 = vector.extract_strided_slice %101 {offsets = [0, 64], sizes = [2, 32], strides = [1, 1]} : vector<2x96xf32> to vector<2x32xf32>
    %123 = vector.extract_strided_slice %105 {offsets = [0, 64], sizes = [2, 32], strides = [1, 1]} : vector<2x192xf32> to vector<2x32xf32>
    %124 = vector.broadcast %21 : vector<1x32xf32> to vector<2x32xf32>
    %125 = arith.addf %123, %124 : vector<2x32xf32>
    %126 = arith.mulf %113, %125 : vector<2x32xf32>
    %127 = arith.addf %122, %126 : vector<2x32xf32>
    %128 = math.tanh %127 : vector<2x32xf32>
    %cst_47 = arith.constant 1.000000e+00 : f32
    %129 = vector.broadcast %cst_47 : f32 to vector<2x32xf32>
    %130 = arith.subf %129, %121 : vector<2x32xf32>
    %131 = arith.mulf %130, %128 : vector<2x32xf32>
    %132 = arith.mulf %121, %62 : vector<2x32xf32>
    %133 = arith.addf %131, %132 : vector<2x32xf32>
    %134 = vector.extract_strided_slice %103 {offsets = [0, 0], sizes = [2, 32], strides = [1, 1]} : vector<2x96xf32> to vector<2x32xf32>
    %135 = vector.extract_strided_slice %105 {offsets = [0, 96], sizes = [2, 32], strides = [1, 1]} : vector<2x192xf32> to vector<2x32xf32>
    %136 = arith.addf %134, %135 : vector<2x32xf32>
    %137 = arith.negf %136 : vector<2x32xf32>
    %138 = math.exp %137 : vector<2x32xf32>
    %cst_48 = arith.constant 1.000000e+00 : f32
    %139 = vector.broadcast %cst_48 : f32 to vector<2x32xf32>
    %140 = arith.addf %139, %138 : vector<2x32xf32>
    %141 = arith.divf %139, %140 : vector<2x32xf32>
    %142 = vector.extract_strided_slice %103 {offsets = [0, 32], sizes = [2, 32], strides = [1, 1]} : vector<2x96xf32> to vector<2x32xf32>
    %143 = vector.extract_strided_slice %105 {offsets = [0, 128], sizes = [2, 32], strides = [1, 1]} : vector<2x192xf32> to vector<2x32xf32>
    %144 = arith.addf %142, %143 : vector<2x32xf32>
    %145 = arith.negf %144 : vector<2x32xf32>
    %146 = math.exp %145 : vector<2x32xf32>
    %cst_49 = arith.constant 1.000000e+00 : f32
    %147 = vector.broadcast %cst_49 : f32 to vector<2x32xf32>
    %148 = arith.addf %147, %146 : vector<2x32xf32>
    %149 = arith.divf %147, %148 : vector<2x32xf32>
    %150 = vector.extract_strided_slice %103 {offsets = [0, 64], sizes = [2, 32], strides = [1, 1]} : vector<2x96xf32> to vector<2x32xf32>
    %151 = vector.extract_strided_slice %105 {offsets = [0, 160], sizes = [2, 32], strides = [1, 1]} : vector<2x192xf32> to vector<2x32xf32>
    %152 = vector.broadcast %22 : vector<1x32xf32> to vector<2x32xf32>
    %153 = arith.addf %151, %152 : vector<2x32xf32>
    %154 = arith.mulf %141, %153 : vector<2x32xf32>
    %155 = arith.addf %150, %154 : vector<2x32xf32>
    %156 = math.tanh %155 : vector<2x32xf32>
    %cst_50 = arith.constant 1.000000e+00 : f32
    %157 = vector.broadcast %cst_50 : f32 to vector<2x32xf32>
    %158 = arith.subf %157, %149 : vector<2x32xf32>
    %159 = arith.mulf %158, %156 : vector<2x32xf32>
    %160 = arith.mulf %149, %90 : vector<2x32xf32>
    %161 = arith.addf %159, %160 : vector<2x32xf32>
    %162 = arith.index_cast %96 : i32 to index
    %c0_51 = arith.constant 0 : index
    %163 = vector.load %arg27[%162, %c0_51] : memref<16x32xf32, #tpu.memory_space<vmem>>, vector<2x32xf32>
    tpu.vector_store %arg27[%162, %c0_51], %133 {strides = array<i32>} : memref<16x32xf32, #tpu.memory_space<vmem>>, vector<2x32xf32>,
    %164 = arith.index_cast %99 : i32 to index
    %c0_52 = arith.constant 0 : index
    %165 = vector.load %arg28[%164, %c0_52] : memref<16x32xf32, #tpu.memory_space<vmem>>, vector<2x32xf32>
    tpu.vector_store %arg28[%164, %c0_52], %161 {strides = array<i32>} : memref<16x32xf32, #tpu.memory_space<vmem>>, vector<2x32xf32>,
    %c2_i32_53 = arith.constant 2 : i32
    %c2_i32_54 = arith.constant 2 : i32
    %166 = arith.muli %c2_i32_53, %c2_i32_54 : i32
    %167 = tpu.assume_multiple %166, 2 : i32
    %c7_i32_55 = arith.constant 7 : i32
    %168 = arith.subi %c7_i32_55, %c2_i32_53 : i32
    %c2_i32_56 = arith.constant 2 : i32
    %169 = arith.muli %168, %c2_i32_56 : i32
    %170 = tpu.assume_multiple %169, 2 : i32
    %171 = arith.index_cast %167 : i32 to index
    %c0_57 = arith.constant 0 : index
    %172 = vector.load %arg25[%171, %c0_57] : memref<16x96xf32, #tpu.memory_space<vmem>>, vector<2x96xf32>
    %173 = arith.index_cast %170 : i32 to index
    %c0_58 = arith.constant 0 : index
    %174 = vector.load %arg26[%173, %c0_58] : memref<16x96xf32, #tpu.memory_space<vmem>>, vector<2x96xf32>
    %175 = tpu.concatenate %133, %161 in 1 : vector<2x32xf32>, vector<2x32xf32> -> vector<2x64xf32>
    %cst_59 = arith.constant dense<0.000000e+00> : vector<2x192xf32>
    %176 = tpu.matmul %175, %20, %cst_59 {dimension_numbers = #tpu.dot_dimension_numbers<[1], [0], [0], [1], [0, 0, 1, 1], [], []>} : vector<2x64xf32>, vector<64x192xf32>, vector<2x192xf32> -> vector<2x192xf32>
    %177 = vector.extract_strided_slice %172 {offsets = [0, 0], sizes = [2, 32], strides = [1, 1]} : vector<2x96xf32> to vector<2x32xf32>
    %178 = vector.extract_strided_slice %176 {offsets = [0, 0], sizes = [2, 32], strides = [1, 1]} : vector<2x192xf32> to vector<2x32xf32>
    %179 = arith.addf %177, %178 : vector<2x32xf32>
    %180 = arith.negf %179 : vector<2x32xf32>
    %181 = math.exp %180 : vector<2x32xf32>
    %cst_60 = arith.constant 1.000000e+00 : f32
    %182 = vector.broadcast %cst_60 : f32 to vector<2x32xf32>
    %183 = arith.addf %182, %181 : vector<2x32xf32>
    %184 = arith.divf %182, %183 : vector<2x32xf32>
    %185 = vector.extract_strided_slice %172 {offsets = [0, 32], sizes = [2, 32], strides = [1, 1]} : vector<2x96xf32> to vector<2x32xf32>
    %186 = vector.extract_strided_slice %176 {offsets = [0, 32], sizes = [2, 32], strides = [1, 1]} : vector<2x192xf32> to vector<2x32xf32>
    %187 = arith.addf %185, %186 : vector<2x32xf32>
    %188 = arith.negf %187 : vector<2x32xf32>
    %189 = math.exp %188 : vector<2x32xf32>
    %cst_61 = arith.constant 1.000000e+00 : f32
    %190 = vector.broadcast %cst_61 : f32 to vector<2x32xf32>
    %191 = arith.addf %190, %189 : vector<2x32xf32>
    %192 = arith.divf %190, %191 : vector<2x32xf32>
    %193 = vector.extract_strided_slice %172 {offsets = [0, 64], sizes = [2, 32], strides = [1, 1]} : vector<2x96xf32> to vector<2x32xf32>
    %194 = vector.extract_strided_slice %176 {offsets = [0, 64], sizes = [2, 32], strides = [1, 1]} : vector<2x192xf32> to vector<2x32xf32>
    %195 = vector.broadcast %21 : vector<1x32xf32> to vector<2x32xf32>
    %196 = arith.addf %194, %195 : vector<2x32xf32>
    %197 = arith.mulf %184, %196 : vector<2x32xf32>
    %198 = arith.addf %193, %197 : vector<2x32xf32>
    %199 = math.tanh %198 : vector<2x32xf32>
    %cst_62 = arith.constant 1.000000e+00 : f32
    %200 = vector.broadcast %cst_62 : f32 to vector<2x32xf32>
    %201 = arith.subf %200, %192 : vector<2x32xf32>
    %202 = arith.mulf %201, %199 : vector<2x32xf32>
    %203 = arith.mulf %192, %133 : vector<2x32xf32>
    %204 = arith.addf %202, %203 : vector<2x32xf32>
    %205 = vector.extract_strided_slice %174 {offsets = [0, 0], sizes = [2, 32], strides = [1, 1]} : vector<2x96xf32> to vector<2x32xf32>
    %206 = vector.extract_strided_slice %176 {offsets = [0, 96], sizes = [2, 32], strides = [1, 1]} : vector<2x192xf32> to vector<2x32xf32>
    %207 = arith.addf %205, %206 : vector<2x32xf32>
    %208 = arith.negf %207 : vector<2x32xf32>
    %209 = math.exp %208 : vector<2x32xf32>
    %cst_63 = arith.constant 1.000000e+00 : f32
    %210 = vector.broadcast %cst_63 : f32 to vector<2x32xf32>
    %211 = arith.addf %210, %209 : vector<2x32xf32>
    %212 = arith.divf %210, %211 : vector<2x32xf32>
    %213 = vector.extract_strided_slice %174 {offsets = [0, 32], sizes = [2, 32], strides = [1, 1]} : vector<2x96xf32> to vector<2x32xf32>
    %214 = vector.extract_strided_slice %176 {offsets = [0, 128], sizes = [2, 32], strides = [1, 1]} : vector<2x192xf32> to vector<2x32xf32>
    %215 = arith.addf %213, %214 : vector<2x32xf32>
    %216 = arith.negf %215 : vector<2x32xf32>
    %217 = math.exp %216 : vector<2x32xf32>
    %cst_64 = arith.constant 1.000000e+00 : f32
    %218 = vector.broadcast %cst_64 : f32 to vector<2x32xf32>
    %219 = arith.addf %218, %217 : vector<2x32xf32>
    %220 = arith.divf %218, %219 : vector<2x32xf32>
    %221 = vector.extract_strided_slice %174 {offsets = [0, 64], sizes = [2, 32], strides = [1, 1]} : vector<2x96xf32> to vector<2x32xf32>
    %222 = vector.extract_strided_slice %176 {offsets = [0, 160], sizes = [2, 32], strides = [1, 1]} : vector<2x192xf32> to vector<2x32xf32>
    %223 = vector.broadcast %22 : vector<1x32xf32> to vector<2x32xf32>
    %224 = arith.addf %222, %223 : vector<2x32xf32>
    %225 = arith.mulf %212, %224 : vector<2x32xf32>
    %226 = arith.addf %221, %225 : vector<2x32xf32>
    %227 = math.tanh %226 : vector<2x32xf32>
    %cst_65 = arith.constant 1.000000e+00 : f32
    %228 = vector.broadcast %cst_65 : f32 to vector<2x32xf32>
    %229 = arith.subf %228, %220 : vector<2x32xf32>
    %230 = arith.mulf %229, %227 : vector<2x32xf32>
    %231 = arith.mulf %220, %161 : vector<2x32xf32>
    %232 = arith.addf %230, %231 : vector<2x32xf32>
    %233 = arith.index_cast %167 : i32 to index
    %c0_66 = arith.constant 0 : index
    %234 = vector.load %arg27[%233, %c0_66] : memref<16x32xf32, #tpu.memory_space<vmem>>, vector<2x32xf32>
    tpu.vector_store %arg27[%233, %c0_66], %204 {strides = array<i32>} : memref<16x32xf32, #tpu.memory_space<vmem>>, vector<2x32xf32>,
    %235 = arith.index_cast %170 : i32 to index
    %c0_67 = arith.constant 0 : index
    %236 = vector.load %arg28[%235, %c0_67] : memref<16x32xf32, #tpu.memory_space<vmem>>, vector<2x32xf32>
    tpu.vector_store %arg28[%235, %c0_67], %232 {strides = array<i32>} : memref<16x32xf32, #tpu.memory_space<vmem>>, vector<2x32xf32>,
    %c3_i32 = arith.constant 3 : i32
    %c2_i32_68 = arith.constant 2 : i32
    %237 = arith.muli %c3_i32, %c2_i32_68 : i32
    %238 = tpu.assume_multiple %237, 2 : i32
    %c7_i32_69 = arith.constant 7 : i32
    %239 = arith.subi %c7_i32_69, %c3_i32 : i32
    %c2_i32_70 = arith.constant 2 : i32
    %240 = arith.muli %239, %c2_i32_70 : i32
    %241 = tpu.assume_multiple %240, 2 : i32
    %242 = arith.index_cast %238 : i32 to index
    %c0_71 = arith.constant 0 : index
    %243 = vector.load %arg25[%242, %c0_71] : memref<16x96xf32, #tpu.memory_space<vmem>>, vector<2x96xf32>
    %244 = arith.index_cast %241 : i32 to index
    %c0_72 = arith.constant 0 : index
    %245 = vector.load %arg26[%244, %c0_72] : memref<16x96xf32, #tpu.memory_space<vmem>>, vector<2x96xf32>
    %246 = tpu.concatenate %204, %232 in 1 : vector<2x32xf32>, vector<2x32xf32> -> vector<2x64xf32>
    %cst_73 = arith.constant dense<0.000000e+00> : vector<2x192xf32>
    %247 = tpu.matmul %246, %20, %cst_73 {dimension_numbers = #tpu.dot_dimension_numbers<[1], [0], [0], [1], [0, 0, 1, 1], [], []>} : vector<2x64xf32>, vector<64x192xf32>, vector<2x192xf32> -> vector<2x192xf32>
    %248 = vector.extract_strided_slice %243 {offsets = [0, 0], sizes = [2, 32], strides = [1, 1]} : vector<2x96xf32> to vector<2x32xf32>
    %249 = vector.extract_strided_slice %247 {offsets = [0, 0], sizes = [2, 32], strides = [1, 1]} : vector<2x192xf32> to vector<2x32xf32>
    %250 = arith.addf %248, %249 : vector<2x32xf32>
    %251 = arith.negf %250 : vector<2x32xf32>
    %252 = math.exp %251 : vector<2x32xf32>
    %cst_74 = arith.constant 1.000000e+00 : f32
    %253 = vector.broadcast %cst_74 : f32 to vector<2x32xf32>
    %254 = arith.addf %253, %252 : vector<2x32xf32>
    %255 = arith.divf %253, %254 : vector<2x32xf32>
    %256 = vector.extract_strided_slice %243 {offsets = [0, 32], sizes = [2, 32], strides = [1, 1]} : vector<2x96xf32> to vector<2x32xf32>
    %257 = vector.extract_strided_slice %247 {offsets = [0, 32], sizes = [2, 32], strides = [1, 1]} : vector<2x192xf32> to vector<2x32xf32>
    %258 = arith.addf %256, %257 : vector<2x32xf32>
    %259 = arith.negf %258 : vector<2x32xf32>
    %260 = math.exp %259 : vector<2x32xf32>
    %cst_75 = arith.constant 1.000000e+00 : f32
    %261 = vector.broadcast %cst_75 : f32 to vector<2x32xf32>
    %262 = arith.addf %261, %260 : vector<2x32xf32>
    %263 = arith.divf %261, %262 : vector<2x32xf32>
    %264 = vector.extract_strided_slice %243 {offsets = [0, 64], sizes = [2, 32], strides = [1, 1]} : vector<2x96xf32> to vector<2x32xf32>
    %265 = vector.extract_strided_slice %247 {offsets = [0, 64], sizes = [2, 32], strides = [1, 1]} : vector<2x192xf32> to vector<2x32xf32>
    %266 = vector.broadcast %21 : vector<1x32xf32> to vector<2x32xf32>
    %267 = arith.addf %265, %266 : vector<2x32xf32>
    %268 = arith.mulf %255, %267 : vector<2x32xf32>
    %269 = arith.addf %264, %268 : vector<2x32xf32>
    %270 = math.tanh %269 : vector<2x32xf32>
    %cst_76 = arith.constant 1.000000e+00 : f32
    %271 = vector.broadcast %cst_76 : f32 to vector<2x32xf32>
    %272 = arith.subf %271, %263 : vector<2x32xf32>
    %273 = arith.mulf %272, %270 : vector<2x32xf32>
    %274 = arith.mulf %263, %204 : vector<2x32xf32>
    %275 = arith.addf %273, %274 : vector<2x32xf32>
    %276 = vector.extract_strided_slice %245 {offsets = [0, 0], sizes = [2, 32], strides = [1, 1]} : vector<2x96xf32> to vector<2x32xf32>
    %277 = vector.extract_strided_slice %247 {offsets = [0, 96], sizes = [2, 32], strides = [1, 1]} : vector<2x192xf32> to vector<2x32xf32>
    %278 = arith.addf %276, %277 : vector<2x32xf32>
    %279 = arith.negf %278 : vector<2x32xf32>
    %280 = math.exp %279 : vector<2x32xf32>
    %cst_77 = arith.constant 1.000000e+00 : f32
    %281 = vector.broadcast %cst_77 : f32 to vector<2x32xf32>
    %282 = arith.addf %281, %280 : vector<2x32xf32>
    %283 = arith.divf %281, %282 : vector<2x32xf32>
    %284 = vector.extract_strided_slice %245 {offsets = [0, 32], sizes = [2, 32], strides = [1, 1]} : vector<2x96xf32> to vector<2x32xf32>
    %285 = vector.extract_strided_slice %247 {offsets = [0, 128], sizes = [2, 32], strides = [1, 1]} : vector<2x192xf32> to vector<2x32xf32>
    %286 = arith.addf %284, %285 : vector<2x32xf32>
    %287 = arith.negf %286 : vector<2x32xf32>
    %288 = math.exp %287 : vector<2x32xf32>
    %cst_78 = arith.constant 1.000000e+00 : f32
    %289 = vector.broadcast %cst_78 : f32 to vector<2x32xf32>
    %290 = arith.addf %289, %288 : vector<2x32xf32>
    %291 = arith.divf %289, %290 : vector<2x32xf32>
    %292 = vector.extract_strided_slice %245 {offsets = [0, 64], sizes = [2, 32], strides = [1, 1]} : vector<2x96xf32> to vector<2x32xf32>
    %293 = vector.extract_strided_slice %247 {offsets = [0, 160], sizes = [2, 32], strides = [1, 1]} : vector<2x192xf32> to vector<2x32xf32>
    %294 = vector.broadcast %22 : vector<1x32xf32> to vector<2x32xf32>
    %295 = arith.addf %293, %294 : vector<2x32xf32>
    %296 = arith.mulf %283, %295 : vector<2x32xf32>
    %297 = arith.addf %292, %296 : vector<2x32xf32>
    %298 = math.tanh %297 : vector<2x32xf32>
    %cst_79 = arith.constant 1.000000e+00 : f32
    %299 = vector.broadcast %cst_79 : f32 to vector<2x32xf32>
    %300 = arith.subf %299, %291 : vector<2x32xf32>
    %301 = arith.mulf %300, %298 : vector<2x32xf32>
    %302 = arith.mulf %291, %232 : vector<2x32xf32>
    %303 = arith.addf %301, %302 : vector<2x32xf32>
    %304 = arith.index_cast %238 : i32 to index
    %c0_80 = arith.constant 0 : index
    %305 = vector.load %arg27[%304, %c0_80] : memref<16x32xf32, #tpu.memory_space<vmem>>, vector<2x32xf32>
    tpu.vector_store %arg27[%304, %c0_80], %275 {strides = array<i32>} : memref<16x32xf32, #tpu.memory_space<vmem>>, vector<2x32xf32>,
    %306 = arith.index_cast %241 : i32 to index
    %c0_81 = arith.constant 0 : index
    %307 = vector.load %arg28[%306, %c0_81] : memref<16x32xf32, #tpu.memory_space<vmem>>, vector<2x32xf32>
    tpu.vector_store %arg28[%306, %c0_81], %303 {strides = array<i32>} : memref<16x32xf32, #tpu.memory_space<vmem>>, vector<2x32xf32>,
    %c4_i32 = arith.constant 4 : i32
    %c2_i32_82 = arith.constant 2 : i32
    %308 = arith.muli %c4_i32, %c2_i32_82 : i32
    %309 = tpu.assume_multiple %308, 2 : i32
    %c7_i32_83 = arith.constant 7 : i32
    %310 = arith.subi %c7_i32_83, %c4_i32 : i32
    %c2_i32_84 = arith.constant 2 : i32
    %311 = arith.muli %310, %c2_i32_84 : i32
    %312 = tpu.assume_multiple %311, 2 : i32
    %313 = arith.index_cast %309 : i32 to index
    %c0_85 = arith.constant 0 : index
    %314 = vector.load %arg25[%313, %c0_85] : memref<16x96xf32, #tpu.memory_space<vmem>>, vector<2x96xf32>
    %315 = arith.index_cast %312 : i32 to index
    %c0_86 = arith.constant 0 : index
    %316 = vector.load %arg26[%315, %c0_86] : memref<16x96xf32, #tpu.memory_space<vmem>>, vector<2x96xf32>
    %317 = tpu.concatenate %275, %303 in 1 : vector<2x32xf32>, vector<2x32xf32> -> vector<2x64xf32>
    %cst_87 = arith.constant dense<0.000000e+00> : vector<2x192xf32>
    %318 = tpu.matmul %317, %20, %cst_87 {dimension_numbers = #tpu.dot_dimension_numbers<[1], [0], [0], [1], [0, 0, 1, 1], [], []>} : vector<2x64xf32>, vector<64x192xf32>, vector<2x192xf32> -> vector<2x192xf32>
    %319 = vector.extract_strided_slice %314 {offsets = [0, 0], sizes = [2, 32], strides = [1, 1]} : vector<2x96xf32> to vector<2x32xf32>
    %320 = vector.extract_strided_slice %318 {offsets = [0, 0], sizes = [2, 32], strides = [1, 1]} : vector<2x192xf32> to vector<2x32xf32>
    %321 = arith.addf %319, %320 : vector<2x32xf32>
    %322 = arith.negf %321 : vector<2x32xf32>
    %323 = math.exp %322 : vector<2x32xf32>
    %cst_88 = arith.constant 1.000000e+00 : f32
    %324 = vector.broadcast %cst_88 : f32 to vector<2x32xf32>
    %325 = arith.addf %324, %323 : vector<2x32xf32>
    %326 = arith.divf %324, %325 : vector<2x32xf32>
    %327 = vector.extract_strided_slice %314 {offsets = [0, 32], sizes = [2, 32], strides = [1, 1]} : vector<2x96xf32> to vector<2x32xf32>
    %328 = vector.extract_strided_slice %318 {offsets = [0, 32], sizes = [2, 32], strides = [1, 1]} : vector<2x192xf32> to vector<2x32xf32>
    %329 = arith.addf %327, %328 : vector<2x32xf32>
    %330 = arith.negf %329 : vector<2x32xf32>
    %331 = math.exp %330 : vector<2x32xf32>
    %cst_89 = arith.constant 1.000000e+00 : f32
    %332 = vector.broadcast %cst_89 : f32 to vector<2x32xf32>
    %333 = arith.addf %332, %331 : vector<2x32xf32>
    %334 = arith.divf %332, %333 : vector<2x32xf32>
    %335 = vector.extract_strided_slice %314 {offsets = [0, 64], sizes = [2, 32], strides = [1, 1]} : vector<2x96xf32> to vector<2x32xf32>
    %336 = vector.extract_strided_slice %318 {offsets = [0, 64], sizes = [2, 32], strides = [1, 1]} : vector<2x192xf32> to vector<2x32xf32>
    %337 = vector.broadcast %21 : vector<1x32xf32> to vector<2x32xf32>
    %338 = arith.addf %336, %337 : vector<2x32xf32>
    %339 = arith.mulf %326, %338 : vector<2x32xf32>
    %340 = arith.addf %335, %339 : vector<2x32xf32>
    %341 = math.tanh %340 : vector<2x32xf32>
    %cst_90 = arith.constant 1.000000e+00 : f32
    %342 = vector.broadcast %cst_90 : f32 to vector<2x32xf32>
    %343 = arith.subf %342, %334 : vector<2x32xf32>
    %344 = arith.mulf %343, %341 : vector<2x32xf32>
    %345 = arith.mulf %334, %275 : vector<2x32xf32>
    %346 = arith.addf %344, %345 : vector<2x32xf32>
    %347 = vector.extract_strided_slice %316 {offsets = [0, 0], sizes = [2, 32], strides = [1, 1]} : vector<2x96xf32> to vector<2x32xf32>
    %348 = vector.extract_strided_slice %318 {offsets = [0, 96], sizes = [2, 32], strides = [1, 1]} : vector<2x192xf32> to vector<2x32xf32>
    %349 = arith.addf %347, %348 : vector<2x32xf32>
    %350 = arith.negf %349 : vector<2x32xf32>
    %351 = math.exp %350 : vector<2x32xf32>
    %cst_91 = arith.constant 1.000000e+00 : f32
    %352 = vector.broadcast %cst_91 : f32 to vector<2x32xf32>
    %353 = arith.addf %352, %351 : vector<2x32xf32>
    %354 = arith.divf %352, %353 : vector<2x32xf32>
    %355 = vector.extract_strided_slice %316 {offsets = [0, 32], sizes = [2, 32], strides = [1, 1]} : vector<2x96xf32> to vector<2x32xf32>
    %356 = vector.extract_strided_slice %318 {offsets = [0, 128], sizes = [2, 32], strides = [1, 1]} : vector<2x192xf32> to vector<2x32xf32>
    %357 = arith.addf %355, %356 : vector<2x32xf32>
    %358 = arith.negf %357 : vector<2x32xf32>
    %359 = math.exp %358 : vector<2x32xf32>
    %cst_92 = arith.constant 1.000000e+00 : f32
    %360 = vector.broadcast %cst_92 : f32 to vector<2x32xf32>
    %361 = arith.addf %360, %359 : vector<2x32xf32>
    %362 = arith.divf %360, %361 : vector<2x32xf32>
    %363 = vector.extract_strided_slice %316 {offsets = [0, 64], sizes = [2, 32], strides = [1, 1]} : vector<2x96xf32> to vector<2x32xf32>
    %364 = vector.extract_strided_slice %318 {offsets = [0, 160], sizes = [2, 32], strides = [1, 1]} : vector<2x192xf32> to vector<2x32xf32>
    %365 = vector.broadcast %22 : vector<1x32xf32> to vector<2x32xf32>
    %366 = arith.addf %364, %365 : vector<2x32xf32>
    %367 = arith.mulf %354, %366 : vector<2x32xf32>
    %368 = arith.addf %363, %367 : vector<2x32xf32>
    %369 = math.tanh %368 : vector<2x32xf32>
    %cst_93 = arith.constant 1.000000e+00 : f32
    %370 = vector.broadcast %cst_93 : f32 to vector<2x32xf32>
    %371 = arith.subf %370, %362 : vector<2x32xf32>
    %372 = arith.mulf %371, %369 : vector<2x32xf32>
    %373 = arith.mulf %362, %303 : vector<2x32xf32>
    %374 = arith.addf %372, %373 : vector<2x32xf32>
    %375 = arith.index_cast %309 : i32 to index
    %c0_94 = arith.constant 0 : index
    %376 = vector.load %arg27[%375, %c0_94] : memref<16x32xf32, #tpu.memory_space<vmem>>, vector<2x32xf32>
    tpu.vector_store %arg27[%375, %c0_94], %346 {strides = array<i32>} : memref<16x32xf32, #tpu.memory_space<vmem>>, vector<2x32xf32>,
    %377 = arith.index_cast %312 : i32 to index
    %c0_95 = arith.constant 0 : index
    %378 = vector.load %arg28[%377, %c0_95] : memref<16x32xf32, #tpu.memory_space<vmem>>, vector<2x32xf32>
    tpu.vector_store %arg28[%377, %c0_95], %374 {strides = array<i32>} : memref<16x32xf32, #tpu.memory_space<vmem>>, vector<2x32xf32>,
    %c5_i32 = arith.constant 5 : i32
    %c2_i32_96 = arith.constant 2 : i32
    %379 = arith.muli %c5_i32, %c2_i32_96 : i32
    %380 = tpu.assume_multiple %379, 2 : i32
    %c7_i32_97 = arith.constant 7 : i32
    %381 = arith.subi %c7_i32_97, %c5_i32 : i32
    %c2_i32_98 = arith.constant 2 : i32
    %382 = arith.muli %381, %c2_i32_98 : i32
    %383 = tpu.assume_multiple %382, 2 : i32
    %384 = arith.index_cast %380 : i32 to index
    %c0_99 = arith.constant 0 : index
    %385 = vector.load %arg25[%384, %c0_99] : memref<16x96xf32, #tpu.memory_space<vmem>>, vector<2x96xf32>
    %386 = arith.index_cast %383 : i32 to index
    %c0_100 = arith.constant 0 : index
    %387 = vector.load %arg26[%386, %c0_100] : memref<16x96xf32, #tpu.memory_space<vmem>>, vector<2x96xf32>
    %388 = tpu.concatenate %346, %374 in 1 : vector<2x32xf32>, vector<2x32xf32> -> vector<2x64xf32>
    %cst_101 = arith.constant dense<0.000000e+00> : vector<2x192xf32>
    %389 = tpu.matmul %388, %20, %cst_101 {dimension_numbers = #tpu.dot_dimension_numbers<[1], [0], [0], [1], [0, 0, 1, 1], [], []>} : vector<2x64xf32>, vector<64x192xf32>, vector<2x192xf32> -> vector<2x192xf32>
    %390 = vector.extract_strided_slice %385 {offsets = [0, 0], sizes = [2, 32], strides = [1, 1]} : vector<2x96xf32> to vector<2x32xf32>
    %391 = vector.extract_strided_slice %389 {offsets = [0, 0], sizes = [2, 32], strides = [1, 1]} : vector<2x192xf32> to vector<2x32xf32>
    %392 = arith.addf %390, %391 : vector<2x32xf32>
    %393 = arith.negf %392 : vector<2x32xf32>
    %394 = math.exp %393 : vector<2x32xf32>
    %cst_102 = arith.constant 1.000000e+00 : f32
    %395 = vector.broadcast %cst_102 : f32 to vector<2x32xf32>
    %396 = arith.addf %395, %394 : vector<2x32xf32>
    %397 = arith.divf %395, %396 : vector<2x32xf32>
    %398 = vector.extract_strided_slice %385 {offsets = [0, 32], sizes = [2, 32], strides = [1, 1]} : vector<2x96xf32> to vector<2x32xf32>
    %399 = vector.extract_strided_slice %389 {offsets = [0, 32], sizes = [2, 32], strides = [1, 1]} : vector<2x192xf32> to vector<2x32xf32>
    %400 = arith.addf %398, %399 : vector<2x32xf32>
    %401 = arith.negf %400 : vector<2x32xf32>
    %402 = math.exp %401 : vector<2x32xf32>
    %cst_103 = arith.constant 1.000000e+00 : f32
    %403 = vector.broadcast %cst_103 : f32 to vector<2x32xf32>
    %404 = arith.addf %403, %402 : vector<2x32xf32>
    %405 = arith.divf %403, %404 : vector<2x32xf32>
    %406 = vector.extract_strided_slice %385 {offsets = [0, 64], sizes = [2, 32], strides = [1, 1]} : vector<2x96xf32> to vector<2x32xf32>
    %407 = vector.extract_strided_slice %389 {offsets = [0, 64], sizes = [2, 32], strides = [1, 1]} : vector<2x192xf32> to vector<2x32xf32>
    %408 = vector.broadcast %21 : vector<1x32xf32> to vector<2x32xf32>
    %409 = arith.addf %407, %408 : vector<2x32xf32>
    %410 = arith.mulf %397, %409 : vector<2x32xf32>
    %411 = arith.addf %406, %410 : vector<2x32xf32>
    %412 = math.tanh %411 : vector<2x32xf32>
    %cst_104 = arith.constant 1.000000e+00 : f32
    %413 = vector.broadcast %cst_104 : f32 to vector<2x32xf32>
    %414 = arith.subf %413, %405 : vector<2x32xf32>
    %415 = arith.mulf %414, %412 : vector<2x32xf32>
    %416 = arith.mulf %405, %346 : vector<2x32xf32>
    %417 = arith.addf %415, %416 : vector<2x32xf32>
    %418 = vector.extract_strided_slice %387 {offsets = [0, 0], sizes = [2, 32], strides = [1, 1]} : vector<2x96xf32> to vector<2x32xf32>
    %419 = vector.extract_strided_slice %389 {offsets = [0, 96], sizes = [2, 32], strides = [1, 1]} : vector<2x192xf32> to vector<2x32xf32>
    %420 = arith.addf %418, %419 : vector<2x32xf32>
    %421 = arith.negf %420 : vector<2x32xf32>
    %422 = math.exp %421 : vector<2x32xf32>
    %cst_105 = arith.constant 1.000000e+00 : f32
    %423 = vector.broadcast %cst_105 : f32 to vector<2x32xf32>
    %424 = arith.addf %423, %422 : vector<2x32xf32>
    %425 = arith.divf %423, %424 : vector<2x32xf32>
    %426 = vector.extract_strided_slice %387 {offsets = [0, 32], sizes = [2, 32], strides = [1, 1]} : vector<2x96xf32> to vector<2x32xf32>
    %427 = vector.extract_strided_slice %389 {offsets = [0, 128], sizes = [2, 32], strides = [1, 1]} : vector<2x192xf32> to vector<2x32xf32>
    %428 = arith.addf %426, %427 : vector<2x32xf32>
    %429 = arith.negf %428 : vector<2x32xf32>
    %430 = math.exp %429 : vector<2x32xf32>
    %cst_106 = arith.constant 1.000000e+00 : f32
    %431 = vector.broadcast %cst_106 : f32 to vector<2x32xf32>
    %432 = arith.addf %431, %430 : vector<2x32xf32>
    %433 = arith.divf %431, %432 : vector<2x32xf32>
    %434 = vector.extract_strided_slice %387 {offsets = [0, 64], sizes = [2, 32], strides = [1, 1]} : vector<2x96xf32> to vector<2x32xf32>
    %435 = vector.extract_strided_slice %389 {offsets = [0, 160], sizes = [2, 32], strides = [1, 1]} : vector<2x192xf32> to vector<2x32xf32>
    %436 = vector.broadcast %22 : vector<1x32xf32> to vector<2x32xf32>
    %437 = arith.addf %435, %436 : vector<2x32xf32>
    %438 = arith.mulf %425, %437 : vector<2x32xf32>
    %439 = arith.addf %434, %438 : vector<2x32xf32>
    %440 = math.tanh %439 : vector<2x32xf32>
    %cst_107 = arith.constant 1.000000e+00 : f32
    %441 = vector.broadcast %cst_107 : f32 to vector<2x32xf32>
    %442 = arith.subf %441, %433 : vector<2x32xf32>
    %443 = arith.mulf %442, %440 : vector<2x32xf32>
    %444 = arith.mulf %433, %374 : vector<2x32xf32>
    %445 = arith.addf %443, %444 : vector<2x32xf32>
    %446 = arith.index_cast %380 : i32 to index
    %c0_108 = arith.constant 0 : index
    %447 = vector.load %arg27[%446, %c0_108] : memref<16x32xf32, #tpu.memory_space<vmem>>, vector<2x32xf32>
    tpu.vector_store %arg27[%446, %c0_108], %417 {strides = array<i32>} : memref<16x32xf32, #tpu.memory_space<vmem>>, vector<2x32xf32>,
    %448 = arith.index_cast %383 : i32 to index
    %c0_109 = arith.constant 0 : index
    %449 = vector.load %arg28[%448, %c0_109] : memref<16x32xf32, #tpu.memory_space<vmem>>, vector<2x32xf32>
    tpu.vector_store %arg28[%448, %c0_109], %445 {strides = array<i32>} : memref<16x32xf32, #tpu.memory_space<vmem>>, vector<2x32xf32>,
    %c6_i32 = arith.constant 6 : i32
    %c2_i32_110 = arith.constant 2 : i32
    %450 = arith.muli %c6_i32, %c2_i32_110 : i32
    %451 = tpu.assume_multiple %450, 2 : i32
    %c7_i32_111 = arith.constant 7 : i32
    %452 = arith.subi %c7_i32_111, %c6_i32 : i32
    %c2_i32_112 = arith.constant 2 : i32
    %453 = arith.muli %452, %c2_i32_112 : i32
    %454 = tpu.assume_multiple %453, 2 : i32
    %455 = arith.index_cast %451 : i32 to index
    %c0_113 = arith.constant 0 : index
    %456 = vector.load %arg25[%455, %c0_113] : memref<16x96xf32, #tpu.memory_space<vmem>>, vector<2x96xf32>
    %457 = arith.index_cast %454 : i32 to index
    %c0_114 = arith.constant 0 : index
    %458 = vector.load %arg26[%457, %c0_114] : memref<16x96xf32, #tpu.memory_space<vmem>>, vector<2x96xf32>
    %459 = tpu.concatenate %417, %445 in 1 : vector<2x32xf32>, vector<2x32xf32> -> vector<2x64xf32>
    %cst_115 = arith.constant dense<0.000000e+00> : vector<2x192xf32>
    %460 = tpu.matmul %459, %20, %cst_115 {dimension_numbers = #tpu.dot_dimension_numbers<[1], [0], [0], [1], [0, 0, 1, 1], [], []>} : vector<2x64xf32>, vector<64x192xf32>, vector<2x192xf32> -> vector<2x192xf32>
    %461 = vector.extract_strided_slice %456 {offsets = [0, 0], sizes = [2, 32], strides = [1, 1]} : vector<2x96xf32> to vector<2x32xf32>
    %462 = vector.extract_strided_slice %460 {offsets = [0, 0], sizes = [2, 32], strides = [1, 1]} : vector<2x192xf32> to vector<2x32xf32>
    %463 = arith.addf %461, %462 : vector<2x32xf32>
    %464 = arith.negf %463 : vector<2x32xf32>
    %465 = math.exp %464 : vector<2x32xf32>
    %cst_116 = arith.constant 1.000000e+00 : f32
    %466 = vector.broadcast %cst_116 : f32 to vector<2x32xf32>
    %467 = arith.addf %466, %465 : vector<2x32xf32>
    %468 = arith.divf %466, %467 : vector<2x32xf32>
    %469 = vector.extract_strided_slice %456 {offsets = [0, 32], sizes = [2, 32], strides = [1, 1]} : vector<2x96xf32> to vector<2x32xf32>
    %470 = vector.extract_strided_slice %460 {offsets = [0, 32], sizes = [2, 32], strides = [1, 1]} : vector<2x192xf32> to vector<2x32xf32>
    %471 = arith.addf %469, %470 : vector<2x32xf32>
    %472 = arith.negf %471 : vector<2x32xf32>
    %473 = math.exp %472 : vector<2x32xf32>
    %cst_117 = arith.constant 1.000000e+00 : f32
    %474 = vector.broadcast %cst_117 : f32 to vector<2x32xf32>
    %475 = arith.addf %474, %473 : vector<2x32xf32>
    %476 = arith.divf %474, %475 : vector<2x32xf32>
    %477 = vector.extract_strided_slice %456 {offsets = [0, 64], sizes = [2, 32], strides = [1, 1]} : vector<2x96xf32> to vector<2x32xf32>
    %478 = vector.extract_strided_slice %460 {offsets = [0, 64], sizes = [2, 32], strides = [1, 1]} : vector<2x192xf32> to vector<2x32xf32>
    %479 = vector.broadcast %21 : vector<1x32xf32> to vector<2x32xf32>
    %480 = arith.addf %478, %479 : vector<2x32xf32>
    %481 = arith.mulf %468, %480 : vector<2x32xf32>
    %482 = arith.addf %477, %481 : vector<2x32xf32>
    %483 = math.tanh %482 : vector<2x32xf32>
    %cst_118 = arith.constant 1.000000e+00 : f32
    %484 = vector.broadcast %cst_118 : f32 to vector<2x32xf32>
    %485 = arith.subf %484, %476 : vector<2x32xf32>
    %486 = arith.mulf %485, %483 : vector<2x32xf32>
    %487 = arith.mulf %476, %417 : vector<2x32xf32>
    %488 = arith.addf %486, %487 : vector<2x32xf32>
    %489 = vector.extract_strided_slice %458 {offsets = [0, 0], sizes = [2, 32], strides = [1, 1]} : vector<2x96xf32> to vector<2x32xf32>
    %490 = vector.extract_strided_slice %460 {offsets = [0, 96], sizes = [2, 32], strides = [1, 1]} : vector<2x192xf32> to vector<2x32xf32>
    %491 = arith.addf %489, %490 : vector<2x32xf32>
    %492 = arith.negf %491 : vector<2x32xf32>
    %493 = math.exp %492 : vector<2x32xf32>
    %cst_119 = arith.constant 1.000000e+00 : f32
    %494 = vector.broadcast %cst_119 : f32 to vector<2x32xf32>
    %495 = arith.addf %494, %493 : vector<2x32xf32>
    %496 = arith.divf %494, %495 : vector<2x32xf32>
    %497 = vector.extract_strided_slice %458 {offsets = [0, 32], sizes = [2, 32], strides = [1, 1]} : vector<2x96xf32> to vector<2x32xf32>
    %498 = vector.extract_strided_slice %460 {offsets = [0, 128], sizes = [2, 32], strides = [1, 1]} : vector<2x192xf32> to vector<2x32xf32>
    %499 = arith.addf %497, %498 : vector<2x32xf32>
    %500 = arith.negf %499 : vector<2x32xf32>
    %501 = math.exp %500 : vector<2x32xf32>
    %cst_120 = arith.constant 1.000000e+00 : f32
    %502 = vector.broadcast %cst_120 : f32 to vector<2x32xf32>
    %503 = arith.addf %502, %501 : vector<2x32xf32>
    %504 = arith.divf %502, %503 : vector<2x32xf32>
    %505 = vector.extract_strided_slice %458 {offsets = [0, 64], sizes = [2, 32], strides = [1, 1]} : vector<2x96xf32> to vector<2x32xf32>
    %506 = vector.extract_strided_slice %460 {offsets = [0, 160], sizes = [2, 32], strides = [1, 1]} : vector<2x192xf32> to vector<2x32xf32>
    %507 = vector.broadcast %22 : vector<1x32xf32> to vector<2x32xf32>
    %508 = arith.addf %506, %507 : vector<2x32xf32>
    %509 = arith.mulf %496, %508 : vector<2x32xf32>
    %510 = arith.addf %505, %509 : vector<2x32xf32>
    %511 = math.tanh %510 : vector<2x32xf32>
    %cst_121 = arith.constant 1.000000e+00 : f32
    %512 = vector.broadcast %cst_121 : f32 to vector<2x32xf32>
    %513 = arith.subf %512, %504 : vector<2x32xf32>
    %514 = arith.mulf %513, %511 : vector<2x32xf32>
    %515 = arith.mulf %504, %445 : vector<2x32xf32>
    %516 = arith.addf %514, %515 : vector<2x32xf32>
    %517 = arith.index_cast %451 : i32 to index
    %c0_122 = arith.constant 0 : index
    %518 = vector.load %arg27[%517, %c0_122] : memref<16x32xf32, #tpu.memory_space<vmem>>, vector<2x32xf32>
    tpu.vector_store %arg27[%517, %c0_122], %488 {strides = array<i32>} : memref<16x32xf32, #tpu.memory_space<vmem>>, vector<2x32xf32>,
    %519 = arith.index_cast %454 : i32 to index
    %c0_123 = arith.constant 0 : index
    %520 = vector.load %arg28[%519, %c0_123] : memref<16x32xf32, #tpu.memory_space<vmem>>, vector<2x32xf32>
    tpu.vector_store %arg28[%519, %c0_123], %516 {strides = array<i32>} : memref<16x32xf32, #tpu.memory_space<vmem>>, vector<2x32xf32>,
    %c7_i32_124 = arith.constant 7 : i32
    %c2_i32_125 = arith.constant 2 : i32
    %521 = arith.muli %c7_i32_124, %c2_i32_125 : i32
    %522 = tpu.assume_multiple %521, 2 : i32
    %c7_i32_126 = arith.constant 7 : i32
    %523 = arith.subi %c7_i32_126, %c7_i32_124 : i32
    %c2_i32_127 = arith.constant 2 : i32
    %524 = arith.muli %523, %c2_i32_127 : i32
    %525 = tpu.assume_multiple %524, 2 : i32
    %526 = arith.index_cast %522 : i32 to index
    %c0_128 = arith.constant 0 : index
    %527 = vector.load %arg25[%526, %c0_128] : memref<16x96xf32, #tpu.memory_space<vmem>>, vector<2x96xf32>
    %528 = arith.index_cast %525 : i32 to index
    %c0_129 = arith.constant 0 : index
    %529 = vector.load %arg26[%528, %c0_129] : memref<16x96xf32, #tpu.memory_space<vmem>>, vector<2x96xf32>
    %530 = tpu.concatenate %488, %516 in 1 : vector<2x32xf32>, vector<2x32xf32> -> vector<2x64xf32>
    %cst_130 = arith.constant dense<0.000000e+00> : vector<2x192xf32>
    %531 = tpu.matmul %530, %20, %cst_130 {dimension_numbers = #tpu.dot_dimension_numbers<[1], [0], [0], [1], [0, 0, 1, 1], [], []>} : vector<2x64xf32>, vector<64x192xf32>, vector<2x192xf32> -> vector<2x192xf32>
    %532 = vector.extract_strided_slice %527 {offsets = [0, 0], sizes = [2, 32], strides = [1, 1]} : vector<2x96xf32> to vector<2x32xf32>
    %533 = vector.extract_strided_slice %531 {offsets = [0, 0], sizes = [2, 32], strides = [1, 1]} : vector<2x192xf32> to vector<2x32xf32>
    %534 = arith.addf %532, %533 : vector<2x32xf32>
    %535 = arith.negf %534 : vector<2x32xf32>
    %536 = math.exp %535 : vector<2x32xf32>
    %cst_131 = arith.constant 1.000000e+00 : f32
    %537 = vector.broadcast %cst_131 : f32 to vector<2x32xf32>
    %538 = arith.addf %537, %536 : vector<2x32xf32>
    %539 = arith.divf %537, %538 : vector<2x32xf32>
    %540 = vector.extract_strided_slice %527 {offsets = [0, 32], sizes = [2, 32], strides = [1, 1]} : vector<2x96xf32> to vector<2x32xf32>
    %541 = vector.extract_strided_slice %531 {offsets = [0, 32], sizes = [2, 32], strides = [1, 1]} : vector<2x192xf32> to vector<2x32xf32>
    %542 = arith.addf %540, %541 : vector<2x32xf32>
    %543 = arith.negf %542 : vector<2x32xf32>
    %544 = math.exp %543 : vector<2x32xf32>
    %cst_132 = arith.constant 1.000000e+00 : f32
    %545 = vector.broadcast %cst_132 : f32 to vector<2x32xf32>
    %546 = arith.addf %545, %544 : vector<2x32xf32>
    %547 = arith.divf %545, %546 : vector<2x32xf32>
    %548 = vector.extract_strided_slice %527 {offsets = [0, 64], sizes = [2, 32], strides = [1, 1]} : vector<2x96xf32> to vector<2x32xf32>
    %549 = vector.extract_strided_slice %531 {offsets = [0, 64], sizes = [2, 32], strides = [1, 1]} : vector<2x192xf32> to vector<2x32xf32>
    %550 = vector.broadcast %21 : vector<1x32xf32> to vector<2x32xf32>
    %551 = arith.addf %549, %550 : vector<2x32xf32>
    %552 = arith.mulf %539, %551 : vector<2x32xf32>
    %553 = arith.addf %548, %552 : vector<2x32xf32>
    %554 = math.tanh %553 : vector<2x32xf32>
    %cst_133 = arith.constant 1.000000e+00 : f32
    %555 = vector.broadcast %cst_133 : f32 to vector<2x32xf32>
    %556 = arith.subf %555, %547 : vector<2x32xf32>
    %557 = arith.mulf %556, %554 : vector<2x32xf32>
    %558 = arith.mulf %547, %488 : vector<2x32xf32>
    %559 = arith.addf %557, %558 : vector<2x32xf32>
    %560 = vector.extract_strided_slice %529 {offsets = [0, 0], sizes = [2, 32], strides = [1, 1]} : vector<2x96xf32> to vector<2x32xf32>
    %561 = vector.extract_strided_slice %531 {offsets = [0, 96], sizes = [2, 32], strides = [1, 1]} : vector<2x192xf32> to vector<2x32xf32>
    %562 = arith.addf %560, %561 : vector<2x32xf32>
    %563 = arith.negf %562 : vector<2x32xf32>
    %564 = math.exp %563 : vector<2x32xf32>
    %cst_134 = arith.constant 1.000000e+00 : f32
    %565 = vector.broadcast %cst_134 : f32 to vector<2x32xf32>
    %566 = arith.addf %565, %564 : vector<2x32xf32>
    %567 = arith.divf %565, %566 : vector<2x32xf32>
    %568 = vector.extract_strided_slice %529 {offsets = [0, 32], sizes = [2, 32], strides = [1, 1]} : vector<2x96xf32> to vector<2x32xf32>
    %569 = vector.extract_strided_slice %531 {offsets = [0, 128], sizes = [2, 32], strides = [1, 1]} : vector<2x192xf32> to vector<2x32xf32>
    %570 = arith.addf %568, %569 : vector<2x32xf32>
    %571 = arith.negf %570 : vector<2x32xf32>
    %572 = math.exp %571 : vector<2x32xf32>
    %cst_135 = arith.constant 1.000000e+00 : f32
    %573 = vector.broadcast %cst_135 : f32 to vector<2x32xf32>
    %574 = arith.addf %573, %572 : vector<2x32xf32>
    %575 = arith.divf %573, %574 : vector<2x32xf32>
    %576 = vector.extract_strided_slice %529 {offsets = [0, 64], sizes = [2, 32], strides = [1, 1]} : vector<2x96xf32> to vector<2x32xf32>
    %577 = vector.extract_strided_slice %531 {offsets = [0, 160], sizes = [2, 32], strides = [1, 1]} : vector<2x192xf32> to vector<2x32xf32>
    %578 = vector.broadcast %22 : vector<1x32xf32> to vector<2x32xf32>
    %579 = arith.addf %577, %578 : vector<2x32xf32>
    %580 = arith.mulf %567, %579 : vector<2x32xf32>
    %581 = arith.addf %576, %580 : vector<2x32xf32>
    %582 = math.tanh %581 : vector<2x32xf32>
    %cst_136 = arith.constant 1.000000e+00 : f32
    %583 = vector.broadcast %cst_136 : f32 to vector<2x32xf32>
    %584 = arith.subf %583, %575 : vector<2x32xf32>
    %585 = arith.mulf %584, %582 : vector<2x32xf32>
    %586 = arith.mulf %575, %516 : vector<2x32xf32>
    %587 = arith.addf %585, %586 : vector<2x32xf32>
    %588 = arith.index_cast %522 : i32 to index
    %c0_137 = arith.constant 0 : index
    %589 = vector.load %arg27[%588, %c0_137] : memref<16x32xf32, #tpu.memory_space<vmem>>, vector<2x32xf32>
    tpu.vector_store %arg27[%588, %c0_137], %559 {strides = array<i32>} : memref<16x32xf32, #tpu.memory_space<vmem>>, vector<2x32xf32>,
    %590 = arith.index_cast %525 : i32 to index
    %c0_138 = arith.constant 0 : index
    %591 = vector.load %arg28[%590, %c0_138] : memref<16x32xf32, #tpu.memory_space<vmem>>, vector<2x32xf32>
    tpu.vector_store %arg28[%590, %c0_138], %587 {strides = array<i32>} : memref<16x32xf32, #tpu.memory_space<vmem>>, vector<2x32xf32>,
    %c8_i32 = arith.constant 8 : i32
    %c0_139 = arith.constant 0 : index
    %c0_140 = arith.constant 0 : index
    %592 = vector.load %arg27[%c0_139, %c0_140] : memref<16x32xf32, #tpu.memory_space<vmem>>, vector<16x32xf32>
    %c0_141 = arith.constant 0 : index
    %c0_142 = arith.constant 0 : index
    %593 = vector.load %arg28[%c0_141, %c0_142] : memref<16x32xf32, #tpu.memory_space<vmem>>, vector<16x32xf32>
    %c0_143 = arith.constant 0 : index
    %c0_144 = arith.constant 0 : index
    %594 = vector.load %arg10[%c0_143, %c0_144] : memref<32x96xf32, #tpu.memory_space<vmem>>, vector<32x96xf32>
    %cst_145 = arith.constant dense<0.000000e+00> : vector<16x96xf32>
    %595 = tpu.matmul %592, %594, %cst_145 {dimension_numbers = #tpu.dot_dimension_numbers<[1], [0], [0], [1], [0, 0, 1, 1], [], []>} : vector<16x32xf32>, vector<32x96xf32>, vector<16x96xf32> -> vector<16x96xf32>
    %c0_146 = arith.constant 0 : index
    %c0_147 = arith.constant 0 : index
    %596 = vector.load %arg11[%c0_146, %c0_147] : memref<32x96xf32, #tpu.memory_space<vmem>>, vector<32x96xf32>
    %cst_148 = arith.constant dense<0.000000e+00> : vector<16x96xf32>
    %597 = tpu.matmul %593, %596, %cst_148 {dimension_numbers = #tpu.dot_dimension_numbers<[1], [0], [0], [1], [0, 0, 1, 1], [], []>} : vector<16x32xf32>, vector<32x96xf32>, vector<16x96xf32> -> vector<16x96xf32>
    %598 = arith.addf %595, %597 : vector<16x96xf32>
    %c0_149 = arith.constant 0 : index
    %c0_150 = arith.constant 0 : index
    %599 = vector.load %arg12[%c0_149, %c0_150] : memref<1x96xf32, #tpu.memory_space<vmem>>, vector<1x96xf32>
    %600 = vector.broadcast %599 : vector<1x96xf32> to vector<16x96xf32>
    %601 = arith.addf %598, %600 : vector<16x96xf32>
    %c0_151 = arith.constant 0 : index
    %c0_152 = arith.constant 0 : index
    %602 = vector.load %arg25[%c0_151, %c0_152] : memref<16x96xf32, #tpu.memory_space<vmem>>, vector<16x96xf32>
    tpu.vector_store %arg25[%c0_151, %c0_152], %601 {strides = array<i32>} : memref<16x96xf32, #tpu.memory_space<vmem>>, vector<16x96xf32>,
    %c0_153 = arith.constant 0 : index
    %c0_154 = arith.constant 0 : index
    %603 = vector.load %arg13[%c0_153, %c0_154] : memref<32x96xf32, #tpu.memory_space<vmem>>, vector<32x96xf32>
    %cst_155 = arith.constant dense<0.000000e+00> : vector<16x96xf32>
    %604 = tpu.matmul %592, %603, %cst_155 {dimension_numbers = #tpu.dot_dimension_numbers<[1], [0], [0], [1], [0, 0, 1, 1], [], []>} : vector<16x32xf32>, vector<32x96xf32>, vector<16x96xf32> -> vector<16x96xf32>
    %c0_156 = arith.constant 0 : index
    %c0_157 = arith.constant 0 : index
    %605 = vector.load %arg14[%c0_156, %c0_157] : memref<32x96xf32, #tpu.memory_space<vmem>>, vector<32x96xf32>
    %cst_158 = arith.constant dense<0.000000e+00> : vector<16x96xf32>
    %606 = tpu.matmul %593, %605, %cst_158 {dimension_numbers = #tpu.dot_dimension_numbers<[1], [0], [0], [1], [0, 0, 1, 1], [], []>} : vector<16x32xf32>, vector<32x96xf32>, vector<16x96xf32> -> vector<16x96xf32>
    %607 = arith.addf %604, %606 : vector<16x96xf32>
    %c0_159 = arith.constant 0 : index
    %c0_160 = arith.constant 0 : index
    %608 = vector.load %arg15[%c0_159, %c0_160] : memref<1x96xf32, #tpu.memory_space<vmem>>, vector<1x96xf32>
    %609 = vector.broadcast %608 : vector<1x96xf32> to vector<16x96xf32>
    %610 = arith.addf %607, %609 : vector<16x96xf32>
    %c0_161 = arith.constant 0 : index
    %c0_162 = arith.constant 0 : index
    %611 = vector.load %arg26[%c0_161, %c0_162] : memref<16x96xf32, #tpu.memory_space<vmem>>, vector<16x96xf32>
    tpu.vector_store %arg26[%c0_161, %c0_162], %610 {strides = array<i32>} : memref<16x96xf32, #tpu.memory_space<vmem>>, vector<16x96xf32>,
    %c0_163 = arith.constant 0 : index
    %c0_164 = arith.constant 0 : index
    %612 = vector.load %arg16[%c0_163, %c0_164] : memref<64x192xf32, #tpu.memory_space<vmem>>, vector<64x192xf32>
    %c0_165 = arith.constant 0 : index
    %c0_166 = arith.constant 0 : index
    %613 = vector.load %arg17[%c0_165, %c0_166] : memref<1x32xf32, #tpu.memory_space<vmem>>, vector<1x32xf32>
    %c0_167 = arith.constant 0 : index
    %c0_168 = arith.constant 0 : index
    %614 = vector.load %arg18[%c0_167, %c0_168] : memref<1x32xf32, #tpu.memory_space<vmem>>, vector<1x32xf32>
    %cst_169 = arith.constant 0.000000e+00 : f32
    %615 = vector.broadcast %cst_169 : f32 to vector<2x32xf32>
    %c0_i32_170 = arith.constant 0 : i32
    %c2_i32_171 = arith.constant 2 : i32
    %616 = arith.muli %c0_i32_170, %c2_i32_171 : i32
    %617 = tpu.assume_multiple %616, 2 : i32
    %c7_i32_172 = arith.constant 7 : i32
    %618 = arith.subi %c7_i32_172, %c0_i32_170 : i32
    %c2_i32_173 = arith.constant 2 : i32
    %619 = arith.muli %618, %c2_i32_173 : i32
    %620 = tpu.assume_multiple %619, 2 : i32
    %621 = arith.index_cast %617 : i32 to index
    %c0_174 = arith.constant 0 : index
    %622 = vector.load %arg25[%621, %c0_174] : memref<16x96xf32, #tpu.memory_space<vmem>>, vector<2x96xf32>
    %623 = arith.index_cast %620 : i32 to index
    %c0_175 = arith.constant 0 : index
    %624 = vector.load %arg26[%623, %c0_175] : memref<16x96xf32, #tpu.memory_space<vmem>>, vector<2x96xf32>
    %625 = tpu.concatenate %615, %615 in 1 : vector<2x32xf32>, vector<2x32xf32> -> vector<2x64xf32>
    %cst_176 = arith.constant dense<0.000000e+00> : vector<2x192xf32>
    %626 = tpu.matmul %625, %612, %cst_176 {dimension_numbers = #tpu.dot_dimension_numbers<[1], [0], [0], [1], [0, 0, 1, 1], [], []>} : vector<2x64xf32>, vector<64x192xf32>, vector<2x192xf32> -> vector<2x192xf32>
    %627 = vector.extract_strided_slice %622 {offsets = [0, 0], sizes = [2, 32], strides = [1, 1]} : vector<2x96xf32> to vector<2x32xf32>
    %628 = vector.extract_strided_slice %626 {offsets = [0, 0], sizes = [2, 32], strides = [1, 1]} : vector<2x192xf32> to vector<2x32xf32>
    %629 = arith.addf %627, %628 : vector<2x32xf32>
    %630 = arith.negf %629 : vector<2x32xf32>
    %631 = math.exp %630 : vector<2x32xf32>
    %cst_177 = arith.constant 1.000000e+00 : f32
    %632 = vector.broadcast %cst_177 : f32 to vector<2x32xf32>
    %633 = arith.addf %632, %631 : vector<2x32xf32>
    %634 = arith.divf %632, %633 : vector<2x32xf32>
    %635 = vector.extract_strided_slice %622 {offsets = [0, 32], sizes = [2, 32], strides = [1, 1]} : vector<2x96xf32> to vector<2x32xf32>
    %636 = vector.extract_strided_slice %626 {offsets = [0, 32], sizes = [2, 32], strides = [1, 1]} : vector<2x192xf32> to vector<2x32xf32>
    %637 = arith.addf %635, %636 : vector<2x32xf32>
    %638 = arith.negf %637 : vector<2x32xf32>
    %639 = math.exp %638 : vector<2x32xf32>
    %cst_178 = arith.constant 1.000000e+00 : f32
    %640 = vector.broadcast %cst_178 : f32 to vector<2x32xf32>
    %641 = arith.addf %640, %639 : vector<2x32xf32>
    %642 = arith.divf %640, %641 : vector<2x32xf32>
    %643 = vector.extract_strided_slice %622 {offsets = [0, 64], sizes = [2, 32], strides = [1, 1]} : vector<2x96xf32> to vector<2x32xf32>
    %644 = vector.extract_strided_slice %626 {offsets = [0, 64], sizes = [2, 32], strides = [1, 1]} : vector<2x192xf32> to vector<2x32xf32>
    %645 = vector.broadcast %613 : vector<1x32xf32> to vector<2x32xf32>
    %646 = arith.addf %644, %645 : vector<2x32xf32>
    %647 = arith.mulf %634, %646 : vector<2x32xf32>
    %648 = arith.addf %643, %647 : vector<2x32xf32>
    %649 = math.tanh %648 : vector<2x32xf32>
    %cst_179 = arith.constant 1.000000e+00 : f32
    %650 = vector.broadcast %cst_179 : f32 to vector<2x32xf32>
    %651 = arith.subf %650, %642 : vector<2x32xf32>
    %652 = arith.mulf %651, %649 : vector<2x32xf32>
    %653 = arith.mulf %642, %615 : vector<2x32xf32>
    %654 = arith.addf %652, %653 : vector<2x32xf32>
    %655 = vector.extract_strided_slice %624 {offsets = [0, 0], sizes = [2, 32], strides = [1, 1]} : vector<2x96xf32> to vector<2x32xf32>
    %656 = vector.extract_strided_slice %626 {offsets = [0, 96], sizes = [2, 32], strides = [1, 1]} : vector<2x192xf32> to vector<2x32xf32>
    %657 = arith.addf %655, %656 : vector<2x32xf32>
    %658 = arith.negf %657 : vector<2x32xf32>
    %659 = math.exp %658 : vector<2x32xf32>
    %cst_180 = arith.constant 1.000000e+00 : f32
    %660 = vector.broadcast %cst_180 : f32 to vector<2x32xf32>
    %661 = arith.addf %660, %659 : vector<2x32xf32>
    %662 = arith.divf %660, %661 : vector<2x32xf32>
    %663 = vector.extract_strided_slice %624 {offsets = [0, 32], sizes = [2, 32], strides = [1, 1]} : vector<2x96xf32> to vector<2x32xf32>
    %664 = vector.extract_strided_slice %626 {offsets = [0, 128], sizes = [2, 32], strides = [1, 1]} : vector<2x192xf32> to vector<2x32xf32>
    %665 = arith.addf %663, %664 : vector<2x32xf32>
    %666 = arith.negf %665 : vector<2x32xf32>
    %667 = math.exp %666 : vector<2x32xf32>
    %cst_181 = arith.constant 1.000000e+00 : f32
    %668 = vector.broadcast %cst_181 : f32 to vector<2x32xf32>
    %669 = arith.addf %668, %667 : vector<2x32xf32>
    %670 = arith.divf %668, %669 : vector<2x32xf32>
    %671 = vector.extract_strided_slice %624 {offsets = [0, 64], sizes = [2, 32], strides = [1, 1]} : vector<2x96xf32> to vector<2x32xf32>
    %672 = vector.extract_strided_slice %626 {offsets = [0, 160], sizes = [2, 32], strides = [1, 1]} : vector<2x192xf32> to vector<2x32xf32>
    %673 = vector.broadcast %614 : vector<1x32xf32> to vector<2x32xf32>
    %674 = arith.addf %672, %673 : vector<2x32xf32>
    %675 = arith.mulf %662, %674 : vector<2x32xf32>
    %676 = arith.addf %671, %675 : vector<2x32xf32>
    %677 = math.tanh %676 : vector<2x32xf32>
    %cst_182 = arith.constant 1.000000e+00 : f32
    %678 = vector.broadcast %cst_182 : f32 to vector<2x32xf32>
    %679 = arith.subf %678, %670 : vector<2x32xf32>
    %680 = arith.mulf %679, %677 : vector<2x32xf32>
    %681 = arith.mulf %670, %615 : vector<2x32xf32>
    %682 = arith.addf %680, %681 : vector<2x32xf32>
    %683 = arith.index_cast %617 : i32 to index
    %c0_183 = arith.constant 0 : index
    %684 = vector.load %arg27[%683, %c0_183] : memref<16x32xf32, #tpu.memory_space<vmem>>, vector<2x32xf32>
    tpu.vector_store %arg27[%683, %c0_183], %654 {strides = array<i32>} : memref<16x32xf32, #tpu.memory_space<vmem>>, vector<2x32xf32>,
    %685 = arith.index_cast %620 : i32 to index
    %c0_184 = arith.constant 0 : index
    %686 = vector.load %arg28[%685, %c0_184] : memref<16x32xf32, #tpu.memory_space<vmem>>, vector<2x32xf32>
    tpu.vector_store %arg28[%685, %c0_184], %682 {strides = array<i32>} : memref<16x32xf32, #tpu.memory_space<vmem>>, vector<2x32xf32>,
    %c1_i32_185 = arith.constant 1 : i32
    %c2_i32_186 = arith.constant 2 : i32
    %687 = arith.muli %c1_i32_185, %c2_i32_186 : i32
    %688 = tpu.assume_multiple %687, 2 : i32
    %c7_i32_187 = arith.constant 7 : i32
    %689 = arith.subi %c7_i32_187, %c1_i32_185 : i32
    %c2_i32_188 = arith.constant 2 : i32
    %690 = arith.muli %689, %c2_i32_188 : i32
    %691 = tpu.assume_multiple %690, 2 : i32
    %692 = arith.index_cast %688 : i32 to index
    %c0_189 = arith.constant 0 : index
    %693 = vector.load %arg25[%692, %c0_189] : memref<16x96xf32, #tpu.memory_space<vmem>>, vector<2x96xf32>
    %694 = arith.index_cast %691 : i32 to index
    %c0_190 = arith.constant 0 : index
    %695 = vector.load %arg26[%694, %c0_190] : memref<16x96xf32, #tpu.memory_space<vmem>>, vector<2x96xf32>
    %696 = tpu.concatenate %654, %682 in 1 : vector<2x32xf32>, vector<2x32xf32> -> vector<2x64xf32>
    %cst_191 = arith.constant dense<0.000000e+00> : vector<2x192xf32>
    %697 = tpu.matmul %696, %612, %cst_191 {dimension_numbers = #tpu.dot_dimension_numbers<[1], [0], [0], [1], [0, 0, 1, 1], [], []>} : vector<2x64xf32>, vector<64x192xf32>, vector<2x192xf32> -> vector<2x192xf32>
    %698 = vector.extract_strided_slice %693 {offsets = [0, 0], sizes = [2, 32], strides = [1, 1]} : vector<2x96xf32> to vector<2x32xf32>
    %699 = vector.extract_strided_slice %697 {offsets = [0, 0], sizes = [2, 32], strides = [1, 1]} : vector<2x192xf32> to vector<2x32xf32>
    %700 = arith.addf %698, %699 : vector<2x32xf32>
    %701 = arith.negf %700 : vector<2x32xf32>
    %702 = math.exp %701 : vector<2x32xf32>
    %cst_192 = arith.constant 1.000000e+00 : f32
    %703 = vector.broadcast %cst_192 : f32 to vector<2x32xf32>
    %704 = arith.addf %703, %702 : vector<2x32xf32>
    %705 = arith.divf %703, %704 : vector<2x32xf32>
    %706 = vector.extract_strided_slice %693 {offsets = [0, 32], sizes = [2, 32], strides = [1, 1]} : vector<2x96xf32> to vector<2x32xf32>
    %707 = vector.extract_strided_slice %697 {offsets = [0, 32], sizes = [2, 32], strides = [1, 1]} : vector<2x192xf32> to vector<2x32xf32>
    %708 = arith.addf %706, %707 : vector<2x32xf32>
    %709 = arith.negf %708 : vector<2x32xf32>
    %710 = math.exp %709 : vector<2x32xf32>
    %cst_193 = arith.constant 1.000000e+00 : f32
    %711 = vector.broadcast %cst_193 : f32 to vector<2x32xf32>
    %712 = arith.addf %711, %710 : vector<2x32xf32>
    %713 = arith.divf %711, %712 : vector<2x32xf32>
    %714 = vector.extract_strided_slice %693 {offsets = [0, 64], sizes = [2, 32], strides = [1, 1]} : vector<2x96xf32> to vector<2x32xf32>
    %715 = vector.extract_strided_slice %697 {offsets = [0, 64], sizes = [2, 32], strides = [1, 1]} : vector<2x192xf32> to vector<2x32xf32>
    %716 = vector.broadcast %613 : vector<1x32xf32> to vector<2x32xf32>
    %717 = arith.addf %715, %716 : vector<2x32xf32>
    %718 = arith.mulf %705, %717 : vector<2x32xf32>
    %719 = arith.addf %714, %718 : vector<2x32xf32>
    %720 = math.tanh %719 : vector<2x32xf32>
    %cst_194 = arith.constant 1.000000e+00 : f32
    %721 = vector.broadcast %cst_194 : f32 to vector<2x32xf32>
    %722 = arith.subf %721, %713 : vector<2x32xf32>
    %723 = arith.mulf %722, %720 : vector<2x32xf32>
    %724 = arith.mulf %713, %654 : vector<2x32xf32>
    %725 = arith.addf %723, %724 : vector<2x32xf32>
    %726 = vector.extract_strided_slice %695 {offsets = [0, 0], sizes = [2, 32], strides = [1, 1]} : vector<2x96xf32> to vector<2x32xf32>
    %727 = vector.extract_strided_slice %697 {offsets = [0, 96], sizes = [2, 32], strides = [1, 1]} : vector<2x192xf32> to vector<2x32xf32>
    %728 = arith.addf %726, %727 : vector<2x32xf32>
    %729 = arith.negf %728 : vector<2x32xf32>
    %730 = math.exp %729 : vector<2x32xf32>
    %cst_195 = arith.constant 1.000000e+00 : f32
    %731 = vector.broadcast %cst_195 : f32 to vector<2x32xf32>
    %732 = arith.addf %731, %730 : vector<2x32xf32>
    %733 = arith.divf %731, %732 : vector<2x32xf32>
    %734 = vector.extract_strided_slice %695 {offsets = [0, 32], sizes = [2, 32], strides = [1, 1]} : vector<2x96xf32> to vector<2x32xf32>
    %735 = vector.extract_strided_slice %697 {offsets = [0, 128], sizes = [2, 32], strides = [1, 1]} : vector<2x192xf32> to vector<2x32xf32>
    %736 = arith.addf %734, %735 : vector<2x32xf32>
    %737 = arith.negf %736 : vector<2x32xf32>
    %738 = math.exp %737 : vector<2x32xf32>
    %cst_196 = arith.constant 1.000000e+00 : f32
    %739 = vector.broadcast %cst_196 : f32 to vector<2x32xf32>
    %740 = arith.addf %739, %738 : vector<2x32xf32>
    %741 = arith.divf %739, %740 : vector<2x32xf32>
    %742 = vector.extract_strided_slice %695 {offsets = [0, 64], sizes = [2, 32], strides = [1, 1]} : vector<2x96xf32> to vector<2x32xf32>
    %743 = vector.extract_strided_slice %697 {offsets = [0, 160], sizes = [2, 32], strides = [1, 1]} : vector<2x192xf32> to vector<2x32xf32>
    %744 = vector.broadcast %614 : vector<1x32xf32> to vector<2x32xf32>
    %745 = arith.addf %743, %744 : vector<2x32xf32>
    %746 = arith.mulf %733, %745 : vector<2x32xf32>
    %747 = arith.addf %742, %746 : vector<2x32xf32>
    %748 = math.tanh %747 : vector<2x32xf32>
    %cst_197 = arith.constant 1.000000e+00 : f32
    %749 = vector.broadcast %cst_197 : f32 to vector<2x32xf32>
    %750 = arith.subf %749, %741 : vector<2x32xf32>
    %751 = arith.mulf %750, %748 : vector<2x32xf32>
    %752 = arith.mulf %741, %682 : vector<2x32xf32>
    %753 = arith.addf %751, %752 : vector<2x32xf32>
    %754 = arith.index_cast %688 : i32 to index
    %c0_198 = arith.constant 0 : index
    %755 = vector.load %arg27[%754, %c0_198] : memref<16x32xf32, #tpu.memory_space<vmem>>, vector<2x32xf32>
    tpu.vector_store %arg27[%754, %c0_198], %725 {strides = array<i32>} : memref<16x32xf32, #tpu.memory_space<vmem>>, vector<2x32xf32>,
    %756 = arith.index_cast %691 : i32 to index
    %c0_199 = arith.constant 0 : index
    %757 = vector.load %arg28[%756, %c0_199] : memref<16x32xf32, #tpu.memory_space<vmem>>, vector<2x32xf32>
    tpu.vector_store %arg28[%756, %c0_199], %753 {strides = array<i32>} : memref<16x32xf32, #tpu.memory_space<vmem>>, vector<2x32xf32>,
    %c2_i32_200 = arith.constant 2 : i32
    %c2_i32_201 = arith.constant 2 : i32
    %758 = arith.muli %c2_i32_200, %c2_i32_201 : i32
    %759 = tpu.assume_multiple %758, 2 : i32
    %c7_i32_202 = arith.constant 7 : i32
    %760 = arith.subi %c7_i32_202, %c2_i32_200 : i32
    %c2_i32_203 = arith.constant 2 : i32
    %761 = arith.muli %760, %c2_i32_203 : i32
    %762 = tpu.assume_multiple %761, 2 : i32
    %763 = arith.index_cast %759 : i32 to index
    %c0_204 = arith.constant 0 : index
    %764 = vector.load %arg25[%763, %c0_204] : memref<16x96xf32, #tpu.memory_space<vmem>>, vector<2x96xf32>
    %765 = arith.index_cast %762 : i32 to index
    %c0_205 = arith.constant 0 : index
    %766 = vector.load %arg26[%765, %c0_205] : memref<16x96xf32, #tpu.memory_space<vmem>>, vector<2x96xf32>
    %767 = tpu.concatenate %725, %753 in 1 : vector<2x32xf32>, vector<2x32xf32> -> vector<2x64xf32>
    %cst_206 = arith.constant dense<0.000000e+00> : vector<2x192xf32>
    %768 = tpu.matmul %767, %612, %cst_206 {dimension_numbers = #tpu.dot_dimension_numbers<[1], [0], [0], [1], [0, 0, 1, 1], [], []>} : vector<2x64xf32>, vector<64x192xf32>, vector<2x192xf32> -> vector<2x192xf32>
    %769 = vector.extract_strided_slice %764 {offsets = [0, 0], sizes = [2, 32], strides = [1, 1]} : vector<2x96xf32> to vector<2x32xf32>
    %770 = vector.extract_strided_slice %768 {offsets = [0, 0], sizes = [2, 32], strides = [1, 1]} : vector<2x192xf32> to vector<2x32xf32>
    %771 = arith.addf %769, %770 : vector<2x32xf32>
    %772 = arith.negf %771 : vector<2x32xf32>
    %773 = math.exp %772 : vector<2x32xf32>
    %cst_207 = arith.constant 1.000000e+00 : f32
    %774 = vector.broadcast %cst_207 : f32 to vector<2x32xf32>
    %775 = arith.addf %774, %773 : vector<2x32xf32>
    %776 = arith.divf %774, %775 : vector<2x32xf32>
    %777 = vector.extract_strided_slice %764 {offsets = [0, 32], sizes = [2, 32], strides = [1, 1]} : vector<2x96xf32> to vector<2x32xf32>
    %778 = vector.extract_strided_slice %768 {offsets = [0, 32], sizes = [2, 32], strides = [1, 1]} : vector<2x192xf32> to vector<2x32xf32>
    %779 = arith.addf %777, %778 : vector<2x32xf32>
    %780 = arith.negf %779 : vector<2x32xf32>
    %781 = math.exp %780 : vector<2x32xf32>
    %cst_208 = arith.constant 1.000000e+00 : f32
    %782 = vector.broadcast %cst_208 : f32 to vector<2x32xf32>
    %783 = arith.addf %782, %781 : vector<2x32xf32>
    %784 = arith.divf %782, %783 : vector<2x32xf32>
    %785 = vector.extract_strided_slice %764 {offsets = [0, 64], sizes = [2, 32], strides = [1, 1]} : vector<2x96xf32> to vector<2x32xf32>
    %786 = vector.extract_strided_slice %768 {offsets = [0, 64], sizes = [2, 32], strides = [1, 1]} : vector<2x192xf32> to vector<2x32xf32>
    %787 = vector.broadcast %613 : vector<1x32xf32> to vector<2x32xf32>
    %788 = arith.addf %786, %787 : vector<2x32xf32>
    %789 = arith.mulf %776, %788 : vector<2x32xf32>
    %790 = arith.addf %785, %789 : vector<2x32xf32>
    %791 = math.tanh %790 : vector<2x32xf32>
    %cst_209 = arith.constant 1.000000e+00 : f32
    %792 = vector.broadcast %cst_209 : f32 to vector<2x32xf32>
    %793 = arith.subf %792, %784 : vector<2x32xf32>
    %794 = arith.mulf %793, %791 : vector<2x32xf32>
    %795 = arith.mulf %784, %725 : vector<2x32xf32>
    %796 = arith.addf %794, %795 : vector<2x32xf32>
    %797 = vector.extract_strided_slice %766 {offsets = [0, 0], sizes = [2, 32], strides = [1, 1]} : vector<2x96xf32> to vector<2x32xf32>
    %798 = vector.extract_strided_slice %768 {offsets = [0, 96], sizes = [2, 32], strides = [1, 1]} : vector<2x192xf32> to vector<2x32xf32>
    %799 = arith.addf %797, %798 : vector<2x32xf32>
    %800 = arith.negf %799 : vector<2x32xf32>
    %801 = math.exp %800 : vector<2x32xf32>
    %cst_210 = arith.constant 1.000000e+00 : f32
    %802 = vector.broadcast %cst_210 : f32 to vector<2x32xf32>
    %803 = arith.addf %802, %801 : vector<2x32xf32>
    %804 = arith.divf %802, %803 : vector<2x32xf32>
    %805 = vector.extract_strided_slice %766 {offsets = [0, 32], sizes = [2, 32], strides = [1, 1]} : vector<2x96xf32> to vector<2x32xf32>
    %806 = vector.extract_strided_slice %768 {offsets = [0, 128], sizes = [2, 32], strides = [1, 1]} : vector<2x192xf32> to vector<2x32xf32>
    %807 = arith.addf %805, %806 : vector<2x32xf32>
    %808 = arith.negf %807 : vector<2x32xf32>
    %809 = math.exp %808 : vector<2x32xf32>
    %cst_211 = arith.constant 1.000000e+00 : f32
    %810 = vector.broadcast %cst_211 : f32 to vector<2x32xf32>
    %811 = arith.addf %810, %809 : vector<2x32xf32>
    %812 = arith.divf %810, %811 : vector<2x32xf32>
    %813 = vector.extract_strided_slice %766 {offsets = [0, 64], sizes = [2, 32], strides = [1, 1]} : vector<2x96xf32> to vector<2x32xf32>
    %814 = vector.extract_strided_slice %768 {offsets = [0, 160], sizes = [2, 32], strides = [1, 1]} : vector<2x192xf32> to vector<2x32xf32>
    %815 = vector.broadcast %614 : vector<1x32xf32> to vector<2x32xf32>
    %816 = arith.addf %814, %815 : vector<2x32xf32>
    %817 = arith.mulf %804, %816 : vector<2x32xf32>
    %818 = arith.addf %813, %817 : vector<2x32xf32>
    %819 = math.tanh %818 : vector<2x32xf32>
    %cst_212 = arith.constant 1.000000e+00 : f32
    %820 = vector.broadcast %cst_212 : f32 to vector<2x32xf32>
    %821 = arith.subf %820, %812 : vector<2x32xf32>
    %822 = arith.mulf %821, %819 : vector<2x32xf32>
    %823 = arith.mulf %812, %753 : vector<2x32xf32>
    %824 = arith.addf %822, %823 : vector<2x32xf32>
    %825 = arith.index_cast %759 : i32 to index
    %c0_213 = arith.constant 0 : index
    %826 = vector.load %arg27[%825, %c0_213] : memref<16x32xf32, #tpu.memory_space<vmem>>, vector<2x32xf32>
    tpu.vector_store %arg27[%825, %c0_213], %796 {strides = array<i32>} : memref<16x32xf32, #tpu.memory_space<vmem>>, vector<2x32xf32>,
    %827 = arith.index_cast %762 : i32 to index
    %c0_214 = arith.constant 0 : index
    %828 = vector.load %arg28[%827, %c0_214] : memref<16x32xf32, #tpu.memory_space<vmem>>, vector<2x32xf32>
    tpu.vector_store %arg28[%827, %c0_214], %824 {strides = array<i32>} : memref<16x32xf32, #tpu.memory_space<vmem>>, vector<2x32xf32>,
    %c3_i32_215 = arith.constant 3 : i32
    %c2_i32_216 = arith.constant 2 : i32
    %829 = arith.muli %c3_i32_215, %c2_i32_216 : i32
    %830 = tpu.assume_multiple %829, 2 : i32
    %c7_i32_217 = arith.constant 7 : i32
    %831 = arith.subi %c7_i32_217, %c3_i32_215 : i32
    %c2_i32_218 = arith.constant 2 : i32
    %832 = arith.muli %831, %c2_i32_218 : i32
    %833 = tpu.assume_multiple %832, 2 : i32
    %834 = arith.index_cast %830 : i32 to index
    %c0_219 = arith.constant 0 : index
    %835 = vector.load %arg25[%834, %c0_219] : memref<16x96xf32, #tpu.memory_space<vmem>>, vector<2x96xf32>
    %836 = arith.index_cast %833 : i32 to index
    %c0_220 = arith.constant 0 : index
    %837 = vector.load %arg26[%836, %c0_220] : memref<16x96xf32, #tpu.memory_space<vmem>>, vector<2x96xf32>
    %838 = tpu.concatenate %796, %824 in 1 : vector<2x32xf32>, vector<2x32xf32> -> vector<2x64xf32>
    %cst_221 = arith.constant dense<0.000000e+00> : vector<2x192xf32>
    %839 = tpu.matmul %838, %612, %cst_221 {dimension_numbers = #tpu.dot_dimension_numbers<[1], [0], [0], [1], [0, 0, 1, 1], [], []>} : vector<2x64xf32>, vector<64x192xf32>, vector<2x192xf32> -> vector<2x192xf32>
    %840 = vector.extract_strided_slice %835 {offsets = [0, 0], sizes = [2, 32], strides = [1, 1]} : vector<2x96xf32> to vector<2x32xf32>
    %841 = vector.extract_strided_slice %839 {offsets = [0, 0], sizes = [2, 32], strides = [1, 1]} : vector<2x192xf32> to vector<2x32xf32>
    %842 = arith.addf %840, %841 : vector<2x32xf32>
    %843 = arith.negf %842 : vector<2x32xf32>
    %844 = math.exp %843 : vector<2x32xf32>
    %cst_222 = arith.constant 1.000000e+00 : f32
    %845 = vector.broadcast %cst_222 : f32 to vector<2x32xf32>
    %846 = arith.addf %845, %844 : vector<2x32xf32>
    %847 = arith.divf %845, %846 : vector<2x32xf32>
    %848 = vector.extract_strided_slice %835 {offsets = [0, 32], sizes = [2, 32], strides = [1, 1]} : vector<2x96xf32> to vector<2x32xf32>
    %849 = vector.extract_strided_slice %839 {offsets = [0, 32], sizes = [2, 32], strides = [1, 1]} : vector<2x192xf32> to vector<2x32xf32>
    %850 = arith.addf %848, %849 : vector<2x32xf32>
    %851 = arith.negf %850 : vector<2x32xf32>
    %852 = math.exp %851 : vector<2x32xf32>
    %cst_223 = arith.constant 1.000000e+00 : f32
    %853 = vector.broadcast %cst_223 : f32 to vector<2x32xf32>
    %854 = arith.addf %853, %852 : vector<2x32xf32>
    %855 = arith.divf %853, %854 : vector<2x32xf32>
    %856 = vector.extract_strided_slice %835 {offsets = [0, 64], sizes = [2, 32], strides = [1, 1]} : vector<2x96xf32> to vector<2x32xf32>
    %857 = vector.extract_strided_slice %839 {offsets = [0, 64], sizes = [2, 32], strides = [1, 1]} : vector<2x192xf32> to vector<2x32xf32>
    %858 = vector.broadcast %613 : vector<1x32xf32> to vector<2x32xf32>
    %859 = arith.addf %857, %858 : vector<2x32xf32>
    %860 = arith.mulf %847, %859 : vector<2x32xf32>
    %861 = arith.addf %856, %860 : vector<2x32xf32>
    %862 = math.tanh %861 : vector<2x32xf32>
    %cst_224 = arith.constant 1.000000e+00 : f32
    %863 = vector.broadcast %cst_224 : f32 to vector<2x32xf32>
    %864 = arith.subf %863, %855 : vector<2x32xf32>
    %865 = arith.mulf %864, %862 : vector<2x32xf32>
    %866 = arith.mulf %855, %796 : vector<2x32xf32>
    %867 = arith.addf %865, %866 : vector<2x32xf32>
    %868 = vector.extract_strided_slice %837 {offsets = [0, 0], sizes = [2, 32], strides = [1, 1]} : vector<2x96xf32> to vector<2x32xf32>
    %869 = vector.extract_strided_slice %839 {offsets = [0, 96], sizes = [2, 32], strides = [1, 1]} : vector<2x192xf32> to vector<2x32xf32>
    %870 = arith.addf %868, %869 : vector<2x32xf32>
    %871 = arith.negf %870 : vector<2x32xf32>
    %872 = math.exp %871 : vector<2x32xf32>
    %cst_225 = arith.constant 1.000000e+00 : f32
    %873 = vector.broadcast %cst_225 : f32 to vector<2x32xf32>
    %874 = arith.addf %873, %872 : vector<2x32xf32>
    %875 = arith.divf %873, %874 : vector<2x32xf32>
    %876 = vector.extract_strided_slice %837 {offsets = [0, 32], sizes = [2, 32], strides = [1, 1]} : vector<2x96xf32> to vector<2x32xf32>
    %877 = vector.extract_strided_slice %839 {offsets = [0, 128], sizes = [2, 32], strides = [1, 1]} : vector<2x192xf32> to vector<2x32xf32>
    %878 = arith.addf %876, %877 : vector<2x32xf32>
    %879 = arith.negf %878 : vector<2x32xf32>
    %880 = math.exp %879 : vector<2x32xf32>
    %cst_226 = arith.constant 1.000000e+00 : f32
    %881 = vector.broadcast %cst_226 : f32 to vector<2x32xf32>
    %882 = arith.addf %881, %880 : vector<2x32xf32>
    %883 = arith.divf %881, %882 : vector<2x32xf32>
    %884 = vector.extract_strided_slice %837 {offsets = [0, 64], sizes = [2, 32], strides = [1, 1]} : vector<2x96xf32> to vector<2x32xf32>
    %885 = vector.extract_strided_slice %839 {offsets = [0, 160], sizes = [2, 32], strides = [1, 1]} : vector<2x192xf32> to vector<2x32xf32>
    %886 = vector.broadcast %614 : vector<1x32xf32> to vector<2x32xf32>
    %887 = arith.addf %885, %886 : vector<2x32xf32>
    %888 = arith.mulf %875, %887 : vector<2x32xf32>
    %889 = arith.addf %884, %888 : vector<2x32xf32>
    %890 = math.tanh %889 : vector<2x32xf32>
    %cst_227 = arith.constant 1.000000e+00 : f32
    %891 = vector.broadcast %cst_227 : f32 to vector<2x32xf32>
    %892 = arith.subf %891, %883 : vector<2x32xf32>
    %893 = arith.mulf %892, %890 : vector<2x32xf32>
    %894 = arith.mulf %883, %824 : vector<2x32xf32>
    %895 = arith.addf %893, %894 : vector<2x32xf32>
    %896 = arith.index_cast %830 : i32 to index
    %c0_228 = arith.constant 0 : index
    %897 = vector.load %arg27[%896, %c0_228] : memref<16x32xf32, #tpu.memory_space<vmem>>, vector<2x32xf32>
    tpu.vector_store %arg27[%896, %c0_228], %867 {strides = array<i32>} : memref<16x32xf32, #tpu.memory_space<vmem>>, vector<2x32xf32>,
    %898 = arith.index_cast %833 : i32 to index
    %c0_229 = arith.constant 0 : index
    %899 = vector.load %arg28[%898, %c0_229] : memref<16x32xf32, #tpu.memory_space<vmem>>, vector<2x32xf32>
    tpu.vector_store %arg28[%898, %c0_229], %895 {strides = array<i32>} : memref<16x32xf32, #tpu.memory_space<vmem>>, vector<2x32xf32>,
    %c4_i32_230 = arith.constant 4 : i32
    %c2_i32_231 = arith.constant 2 : i32
    %900 = arith.muli %c4_i32_230, %c2_i32_231 : i32
    %901 = tpu.assume_multiple %900, 2 : i32
    %c7_i32_232 = arith.constant 7 : i32
    %902 = arith.subi %c7_i32_232, %c4_i32_230 : i32
    %c2_i32_233 = arith.constant 2 : i32
    %903 = arith.muli %902, %c2_i32_233 : i32
    %904 = tpu.assume_multiple %903, 2 : i32
    %905 = arith.index_cast %901 : i32 to index
    %c0_234 = arith.constant 0 : index
    %906 = vector.load %arg25[%905, %c0_234] : memref<16x96xf32, #tpu.memory_space<vmem>>, vector<2x96xf32>
    %907 = arith.index_cast %904 : i32 to index
    %c0_235 = arith.constant 0 : index
    %908 = vector.load %arg26[%907, %c0_235] : memref<16x96xf32, #tpu.memory_space<vmem>>, vector<2x96xf32>
    %909 = tpu.concatenate %867, %895 in 1 : vector<2x32xf32>, vector<2x32xf32> -> vector<2x64xf32>
    %cst_236 = arith.constant dense<0.000000e+00> : vector<2x192xf32>
    %910 = tpu.matmul %909, %612, %cst_236 {dimension_numbers = #tpu.dot_dimension_numbers<[1], [0], [0], [1], [0, 0, 1, 1], [], []>} : vector<2x64xf32>, vector<64x192xf32>, vector<2x192xf32> -> vector<2x192xf32>
    %911 = vector.extract_strided_slice %906 {offsets = [0, 0], sizes = [2, 32], strides = [1, 1]} : vector<2x96xf32> to vector<2x32xf32>
    %912 = vector.extract_strided_slice %910 {offsets = [0, 0], sizes = [2, 32], strides = [1, 1]} : vector<2x192xf32> to vector<2x32xf32>
    %913 = arith.addf %911, %912 : vector<2x32xf32>
    %914 = arith.negf %913 : vector<2x32xf32>
    %915 = math.exp %914 : vector<2x32xf32>
    %cst_237 = arith.constant 1.000000e+00 : f32
    %916 = vector.broadcast %cst_237 : f32 to vector<2x32xf32>
    %917 = arith.addf %916, %915 : vector<2x32xf32>
    %918 = arith.divf %916, %917 : vector<2x32xf32>
    %919 = vector.extract_strided_slice %906 {offsets = [0, 32], sizes = [2, 32], strides = [1, 1]} : vector<2x96xf32> to vector<2x32xf32>
    %920 = vector.extract_strided_slice %910 {offsets = [0, 32], sizes = [2, 32], strides = [1, 1]} : vector<2x192xf32> to vector<2x32xf32>
    %921 = arith.addf %919, %920 : vector<2x32xf32>
    %922 = arith.negf %921 : vector<2x32xf32>
    %923 = math.exp %922 : vector<2x32xf32>
    %cst_238 = arith.constant 1.000000e+00 : f32
    %924 = vector.broadcast %cst_238 : f32 to vector<2x32xf32>
    %925 = arith.addf %924, %923 : vector<2x32xf32>
    %926 = arith.divf %924, %925 : vector<2x32xf32>
    %927 = vector.extract_strided_slice %906 {offsets = [0, 64], sizes = [2, 32], strides = [1, 1]} : vector<2x96xf32> to vector<2x32xf32>
    %928 = vector.extract_strided_slice %910 {offsets = [0, 64], sizes = [2, 32], strides = [1, 1]} : vector<2x192xf32> to vector<2x32xf32>
    %929 = vector.broadcast %613 : vector<1x32xf32> to vector<2x32xf32>
    %930 = arith.addf %928, %929 : vector<2x32xf32>
    %931 = arith.mulf %918, %930 : vector<2x32xf32>
    %932 = arith.addf %927, %931 : vector<2x32xf32>
    %933 = math.tanh %932 : vector<2x32xf32>
    %cst_239 = arith.constant 1.000000e+00 : f32
    %934 = vector.broadcast %cst_239 : f32 to vector<2x32xf32>
    %935 = arith.subf %934, %926 : vector<2x32xf32>
    %936 = arith.mulf %935, %933 : vector<2x32xf32>
    %937 = arith.mulf %926, %867 : vector<2x32xf32>
    %938 = arith.addf %936, %937 : vector<2x32xf32>
    %939 = vector.extract_strided_slice %908 {offsets = [0, 0], sizes = [2, 32], strides = [1, 1]} : vector<2x96xf32> to vector<2x32xf32>
    %940 = vector.extract_strided_slice %910 {offsets = [0, 96], sizes = [2, 32], strides = [1, 1]} : vector<2x192xf32> to vector<2x32xf32>
    %941 = arith.addf %939, %940 : vector<2x32xf32>
    %942 = arith.negf %941 : vector<2x32xf32>
    %943 = math.exp %942 : vector<2x32xf32>
    %cst_240 = arith.constant 1.000000e+00 : f32
    %944 = vector.broadcast %cst_240 : f32 to vector<2x32xf32>
    %945 = arith.addf %944, %943 : vector<2x32xf32>
    %946 = arith.divf %944, %945 : vector<2x32xf32>
    %947 = vector.extract_strided_slice %908 {offsets = [0, 32], sizes = [2, 32], strides = [1, 1]} : vector<2x96xf32> to vector<2x32xf32>
    %948 = vector.extract_strided_slice %910 {offsets = [0, 128], sizes = [2, 32], strides = [1, 1]} : vector<2x192xf32> to vector<2x32xf32>
    %949 = arith.addf %947, %948 : vector<2x32xf32>
    %950 = arith.negf %949 : vector<2x32xf32>
    %951 = math.exp %950 : vector<2x32xf32>
    %cst_241 = arith.constant 1.000000e+00 : f32
    %952 = vector.broadcast %cst_241 : f32 to vector<2x32xf32>
    %953 = arith.addf %952, %951 : vector<2x32xf32>
    %954 = arith.divf %952, %953 : vector<2x32xf32>
    %955 = vector.extract_strided_slice %908 {offsets = [0, 64], sizes = [2, 32], strides = [1, 1]} : vector<2x96xf32> to vector<2x32xf32>
    %956 = vector.extract_strided_slice %910 {offsets = [0, 160], sizes = [2, 32], strides = [1, 1]} : vector<2x192xf32> to vector<2x32xf32>
    %957 = vector.broadcast %614 : vector<1x32xf32> to vector<2x32xf32>
    %958 = arith.addf %956, %957 : vector<2x32xf32>
    %959 = arith.mulf %946, %958 : vector<2x32xf32>
    %960 = arith.addf %955, %959 : vector<2x32xf32>
    %961 = math.tanh %960 : vector<2x32xf32>
    %cst_242 = arith.constant 1.000000e+00 : f32
    %962 = vector.broadcast %cst_242 : f32 to vector<2x32xf32>
    %963 = arith.subf %962, %954 : vector<2x32xf32>
    %964 = arith.mulf %963, %961 : vector<2x32xf32>
    %965 = arith.mulf %954, %895 : vector<2x32xf32>
    %966 = arith.addf %964, %965 : vector<2x32xf32>
    %967 = arith.index_cast %901 : i32 to index
    %c0_243 = arith.constant 0 : index
    %968 = vector.load %arg27[%967, %c0_243] : memref<16x32xf32, #tpu.memory_space<vmem>>, vector<2x32xf32>
    tpu.vector_store %arg27[%967, %c0_243], %938 {strides = array<i32>} : memref<16x32xf32, #tpu.memory_space<vmem>>, vector<2x32xf32>,
    %969 = arith.index_cast %904 : i32 to index
    %c0_244 = arith.constant 0 : index
    %970 = vector.load %arg28[%969, %c0_244] : memref<16x32xf32, #tpu.memory_space<vmem>>, vector<2x32xf32>
    tpu.vector_store %arg28[%969, %c0_244], %966 {strides = array<i32>} : memref<16x32xf32, #tpu.memory_space<vmem>>, vector<2x32xf32>,
    %c5_i32_245 = arith.constant 5 : i32
    %c2_i32_246 = arith.constant 2 : i32
    %971 = arith.muli %c5_i32_245, %c2_i32_246 : i32
    %972 = tpu.assume_multiple %971, 2 : i32
    %c7_i32_247 = arith.constant 7 : i32
    %973 = arith.subi %c7_i32_247, %c5_i32_245 : i32
    %c2_i32_248 = arith.constant 2 : i32
    %974 = arith.muli %973, %c2_i32_248 : i32
    %975 = tpu.assume_multiple %974, 2 : i32
    %976 = arith.index_cast %972 : i32 to index
    %c0_249 = arith.constant 0 : index
    %977 = vector.load %arg25[%976, %c0_249] : memref<16x96xf32, #tpu.memory_space<vmem>>, vector<2x96xf32>
    %978 = arith.index_cast %975 : i32 to index
    %c0_250 = arith.constant 0 : index
    %979 = vector.load %arg26[%978, %c0_250] : memref<16x96xf32, #tpu.memory_space<vmem>>, vector<2x96xf32>
    %980 = tpu.concatenate %938, %966 in 1 : vector<2x32xf32>, vector<2x32xf32> -> vector<2x64xf32>
    %cst_251 = arith.constant dense<0.000000e+00> : vector<2x192xf32>
    %981 = tpu.matmul %980, %612, %cst_251 {dimension_numbers = #tpu.dot_dimension_numbers<[1], [0], [0], [1], [0, 0, 1, 1], [], []>} : vector<2x64xf32>, vector<64x192xf32>, vector<2x192xf32> -> vector<2x192xf32>
    %982 = vector.extract_strided_slice %977 {offsets = [0, 0], sizes = [2, 32], strides = [1, 1]} : vector<2x96xf32> to vector<2x32xf32>
    %983 = vector.extract_strided_slice %981 {offsets = [0, 0], sizes = [2, 32], strides = [1, 1]} : vector<2x192xf32> to vector<2x32xf32>
    %984 = arith.addf %982, %983 : vector<2x32xf32>
    %985 = arith.negf %984 : vector<2x32xf32>
    %986 = math.exp %985 : vector<2x32xf32>
    %cst_252 = arith.constant 1.000000e+00 : f32
    %987 = vector.broadcast %cst_252 : f32 to vector<2x32xf32>
    %988 = arith.addf %987, %986 : vector<2x32xf32>
    %989 = arith.divf %987, %988 : vector<2x32xf32>
    %990 = vector.extract_strided_slice %977 {offsets = [0, 32], sizes = [2, 32], strides = [1, 1]} : vector<2x96xf32> to vector<2x32xf32>
    %991 = vector.extract_strided_slice %981 {offsets = [0, 32], sizes = [2, 32], strides = [1, 1]} : vector<2x192xf32> to vector<2x32xf32>
    %992 = arith.addf %990, %991 : vector<2x32xf32>
    %993 = arith.negf %992 : vector<2x32xf32>
    %994 = math.exp %993 : vector<2x32xf32>
    %cst_253 = arith.constant 1.000000e+00 : f32
    %995 = vector.broadcast %cst_253 : f32 to vector<2x32xf32>
    %996 = arith.addf %995, %994 : vector<2x32xf32>
    %997 = arith.divf %995, %996 : vector<2x32xf32>
    %998 = vector.extract_strided_slice %977 {offsets = [0, 64], sizes = [2, 32], strides = [1, 1]} : vector<2x96xf32> to vector<2x32xf32>
    %999 = vector.extract_strided_slice %981 {offsets = [0, 64], sizes = [2, 32], strides = [1, 1]} : vector<2x192xf32> to vector<2x32xf32>
    %1000 = vector.broadcast %613 : vector<1x32xf32> to vector<2x32xf32>
    %1001 = arith.addf %999, %1000 : vector<2x32xf32>
    %1002 = arith.mulf %989, %1001 : vector<2x32xf32>
    %1003 = arith.addf %998, %1002 : vector<2x32xf32>
    %1004 = math.tanh %1003 : vector<2x32xf32>
    %cst_254 = arith.constant 1.000000e+00 : f32
    %1005 = vector.broadcast %cst_254 : f32 to vector<2x32xf32>
    %1006 = arith.subf %1005, %997 : vector<2x32xf32>
    %1007 = arith.mulf %1006, %1004 : vector<2x32xf32>
    %1008 = arith.mulf %997, %938 : vector<2x32xf32>
    %1009 = arith.addf %1007, %1008 : vector<2x32xf32>
    %1010 = vector.extract_strided_slice %979 {offsets = [0, 0], sizes = [2, 32], strides = [1, 1]} : vector<2x96xf32> to vector<2x32xf32>
    %1011 = vector.extract_strided_slice %981 {offsets = [0, 96], sizes = [2, 32], strides = [1, 1]} : vector<2x192xf32> to vector<2x32xf32>
    %1012 = arith.addf %1010, %1011 : vector<2x32xf32>
    %1013 = arith.negf %1012 : vector<2x32xf32>
    %1014 = math.exp %1013 : vector<2x32xf32>
    %cst_255 = arith.constant 1.000000e+00 : f32
    %1015 = vector.broadcast %cst_255 : f32 to vector<2x32xf32>
    %1016 = arith.addf %1015, %1014 : vector<2x32xf32>
    %1017 = arith.divf %1015, %1016 : vector<2x32xf32>
    %1018 = vector.extract_strided_slice %979 {offsets = [0, 32], sizes = [2, 32], strides = [1, 1]} : vector<2x96xf32> to vector<2x32xf32>
    %1019 = vector.extract_strided_slice %981 {offsets = [0, 128], sizes = [2, 32], strides = [1, 1]} : vector<2x192xf32> to vector<2x32xf32>
    %1020 = arith.addf %1018, %1019 : vector<2x32xf32>
    %1021 = arith.negf %1020 : vector<2x32xf32>
    %1022 = math.exp %1021 : vector<2x32xf32>
    %cst_256 = arith.constant 1.000000e+00 : f32
    %1023 = vector.broadcast %cst_256 : f32 to vector<2x32xf32>
    %1024 = arith.addf %1023, %1022 : vector<2x32xf32>
    %1025 = arith.divf %1023, %1024 : vector<2x32xf32>
    %1026 = vector.extract_strided_slice %979 {offsets = [0, 64], sizes = [2, 32], strides = [1, 1]} : vector<2x96xf32> to vector<2x32xf32>
    %1027 = vector.extract_strided_slice %981 {offsets = [0, 160], sizes = [2, 32], strides = [1, 1]} : vector<2x192xf32> to vector<2x32xf32>
    %1028 = vector.broadcast %614 : vector<1x32xf32> to vector<2x32xf32>
    %1029 = arith.addf %1027, %1028 : vector<2x32xf32>
    %1030 = arith.mulf %1017, %1029 : vector<2x32xf32>
    %1031 = arith.addf %1026, %1030 : vector<2x32xf32>
    %1032 = math.tanh %1031 : vector<2x32xf32>
    %cst_257 = arith.constant 1.000000e+00 : f32
    %1033 = vector.broadcast %cst_257 : f32 to vector<2x32xf32>
    %1034 = arith.subf %1033, %1025 : vector<2x32xf32>
    %1035 = arith.mulf %1034, %1032 : vector<2x32xf32>
    %1036 = arith.mulf %1025, %966 : vector<2x32xf32>
    %1037 = arith.addf %1035, %1036 : vector<2x32xf32>
    %1038 = arith.index_cast %972 : i32 to index
    %c0_258 = arith.constant 0 : index
    %1039 = vector.load %arg27[%1038, %c0_258] : memref<16x32xf32, #tpu.memory_space<vmem>>, vector<2x32xf32>
    tpu.vector_store %arg27[%1038, %c0_258], %1009 {strides = array<i32>} : memref<16x32xf32, #tpu.memory_space<vmem>>, vector<2x32xf32>,
    %1040 = arith.index_cast %975 : i32 to index
    %c0_259 = arith.constant 0 : index
    %1041 = vector.load %arg28[%1040, %c0_259] : memref<16x32xf32, #tpu.memory_space<vmem>>, vector<2x32xf32>
    tpu.vector_store %arg28[%1040, %c0_259], %1037 {strides = array<i32>} : memref<16x32xf32, #tpu.memory_space<vmem>>, vector<2x32xf32>,
    %c6_i32_260 = arith.constant 6 : i32
    %c2_i32_261 = arith.constant 2 : i32
    %1042 = arith.muli %c6_i32_260, %c2_i32_261 : i32
    %1043 = tpu.assume_multiple %1042, 2 : i32
    %c7_i32_262 = arith.constant 7 : i32
    %1044 = arith.subi %c7_i32_262, %c6_i32_260 : i32
    %c2_i32_263 = arith.constant 2 : i32
    %1045 = arith.muli %1044, %c2_i32_263 : i32
    %1046 = tpu.assume_multiple %1045, 2 : i32
    %1047 = arith.index_cast %1043 : i32 to index
    %c0_264 = arith.constant 0 : index
    %1048 = vector.load %arg25[%1047, %c0_264] : memref<16x96xf32, #tpu.memory_space<vmem>>, vector<2x96xf32>
    %1049 = arith.index_cast %1046 : i32 to index
    %c0_265 = arith.constant 0 : index
    %1050 = vector.load %arg26[%1049, %c0_265] : memref<16x96xf32, #tpu.memory_space<vmem>>, vector<2x96xf32>
    %1051 = tpu.concatenate %1009, %1037 in 1 : vector<2x32xf32>, vector<2x32xf32> -> vector<2x64xf32>
    %cst_266 = arith.constant dense<0.000000e+00> : vector<2x192xf32>
    %1052 = tpu.matmul %1051, %612, %cst_266 {dimension_numbers = #tpu.dot_dimension_numbers<[1], [0], [0], [1], [0, 0, 1, 1], [], []>} : vector<2x64xf32>, vector<64x192xf32>, vector<2x192xf32> -> vector<2x192xf32>
    %1053 = vector.extract_strided_slice %1048 {offsets = [0, 0], sizes = [2, 32], strides = [1, 1]} : vector<2x96xf32> to vector<2x32xf32>
    %1054 = vector.extract_strided_slice %1052 {offsets = [0, 0], sizes = [2, 32], strides = [1, 1]} : vector<2x192xf32> to vector<2x32xf32>
    %1055 = arith.addf %1053, %1054 : vector<2x32xf32>
    %1056 = arith.negf %1055 : vector<2x32xf32>
    %1057 = math.exp %1056 : vector<2x32xf32>
    %cst_267 = arith.constant 1.000000e+00 : f32
    %1058 = vector.broadcast %cst_267 : f32 to vector<2x32xf32>
    %1059 = arith.addf %1058, %1057 : vector<2x32xf32>
    %1060 = arith.divf %1058, %1059 : vector<2x32xf32>
    %1061 = vector.extract_strided_slice %1048 {offsets = [0, 32], sizes = [2, 32], strides = [1, 1]} : vector<2x96xf32> to vector<2x32xf32>
    %1062 = vector.extract_strided_slice %1052 {offsets = [0, 32], sizes = [2, 32], strides = [1, 1]} : vector<2x192xf32> to vector<2x32xf32>
    %1063 = arith.addf %1061, %1062 : vector<2x32xf32>
    %1064 = arith.negf %1063 : vector<2x32xf32>
    %1065 = math.exp %1064 : vector<2x32xf32>
    %cst_268 = arith.constant 1.000000e+00 : f32
    %1066 = vector.broadcast %cst_268 : f32 to vector<2x32xf32>
    %1067 = arith.addf %1066, %1065 : vector<2x32xf32>
    %1068 = arith.divf %1066, %1067 : vector<2x32xf32>
    %1069 = vector.extract_strided_slice %1048 {offsets = [0, 64], sizes = [2, 32], strides = [1, 1]} : vector<2x96xf32> to vector<2x32xf32>
    %1070 = vector.extract_strided_slice %1052 {offsets = [0, 64], sizes = [2, 32], strides = [1, 1]} : vector<2x192xf32> to vector<2x32xf32>
    %1071 = vector.broadcast %613 : vector<1x32xf32> to vector<2x32xf32>
    %1072 = arith.addf %1070, %1071 : vector<2x32xf32>
    %1073 = arith.mulf %1060, %1072 : vector<2x32xf32>
    %1074 = arith.addf %1069, %1073 : vector<2x32xf32>
    %1075 = math.tanh %1074 : vector<2x32xf32>
    %cst_269 = arith.constant 1.000000e+00 : f32
    %1076 = vector.broadcast %cst_269 : f32 to vector<2x32xf32>
    %1077 = arith.subf %1076, %1068 : vector<2x32xf32>
    %1078 = arith.mulf %1077, %1075 : vector<2x32xf32>
    %1079 = arith.mulf %1068, %1009 : vector<2x32xf32>
    %1080 = arith.addf %1078, %1079 : vector<2x32xf32>
    %1081 = vector.extract_strided_slice %1050 {offsets = [0, 0], sizes = [2, 32], strides = [1, 1]} : vector<2x96xf32> to vector<2x32xf32>
    %1082 = vector.extract_strided_slice %1052 {offsets = [0, 96], sizes = [2, 32], strides = [1, 1]} : vector<2x192xf32> to vector<2x32xf32>
    %1083 = arith.addf %1081, %1082 : vector<2x32xf32>
    %1084 = arith.negf %1083 : vector<2x32xf32>
    %1085 = math.exp %1084 : vector<2x32xf32>
    %cst_270 = arith.constant 1.000000e+00 : f32
    %1086 = vector.broadcast %cst_270 : f32 to vector<2x32xf32>
    %1087 = arith.addf %1086, %1085 : vector<2x32xf32>
    %1088 = arith.divf %1086, %1087 : vector<2x32xf32>
    %1089 = vector.extract_strided_slice %1050 {offsets = [0, 32], sizes = [2, 32], strides = [1, 1]} : vector<2x96xf32> to vector<2x32xf32>
    %1090 = vector.extract_strided_slice %1052 {offsets = [0, 128], sizes = [2, 32], strides = [1, 1]} : vector<2x192xf32> to vector<2x32xf32>
    %1091 = arith.addf %1089, %1090 : vector<2x32xf32>
    %1092 = arith.negf %1091 : vector<2x32xf32>
    %1093 = math.exp %1092 : vector<2x32xf32>
    %cst_271 = arith.constant 1.000000e+00 : f32
    %1094 = vector.broadcast %cst_271 : f32 to vector<2x32xf32>
    %1095 = arith.addf %1094, %1093 : vector<2x32xf32>
    %1096 = arith.divf %1094, %1095 : vector<2x32xf32>
    %1097 = vector.extract_strided_slice %1050 {offsets = [0, 64], sizes = [2, 32], strides = [1, 1]} : vector<2x96xf32> to vector<2x32xf32>
    %1098 = vector.extract_strided_slice %1052 {offsets = [0, 160], sizes = [2, 32], strides = [1, 1]} : vector<2x192xf32> to vector<2x32xf32>
    %1099 = vector.broadcast %614 : vector<1x32xf32> to vector<2x32xf32>
    %1100 = arith.addf %1098, %1099 : vector<2x32xf32>
    %1101 = arith.mulf %1088, %1100 : vector<2x32xf32>
    %1102 = arith.addf %1097, %1101 : vector<2x32xf32>
    %1103 = math.tanh %1102 : vector<2x32xf32>
    %cst_272 = arith.constant 1.000000e+00 : f32
    %1104 = vector.broadcast %cst_272 : f32 to vector<2x32xf32>
    %1105 = arith.subf %1104, %1096 : vector<2x32xf32>
    %1106 = arith.mulf %1105, %1103 : vector<2x32xf32>
    %1107 = arith.mulf %1096, %1037 : vector<2x32xf32>
    %1108 = arith.addf %1106, %1107 : vector<2x32xf32>
    %1109 = arith.index_cast %1043 : i32 to index
    %c0_273 = arith.constant 0 : index
    %1110 = vector.load %arg27[%1109, %c0_273] : memref<16x32xf32, #tpu.memory_space<vmem>>, vector<2x32xf32>
    tpu.vector_store %arg27[%1109, %c0_273], %1080 {strides = array<i32>} : memref<16x32xf32, #tpu.memory_space<vmem>>, vector<2x32xf32>,
    %1111 = arith.index_cast %1046 : i32 to index
    %c0_274 = arith.constant 0 : index
    %1112 = vector.load %arg28[%1111, %c0_274] : memref<16x32xf32, #tpu.memory_space<vmem>>, vector<2x32xf32>
    tpu.vector_store %arg28[%1111, %c0_274], %1108 {strides = array<i32>} : memref<16x32xf32, #tpu.memory_space<vmem>>, vector<2x32xf32>,
    %c7_i32_275 = arith.constant 7 : i32
    %c2_i32_276 = arith.constant 2 : i32
    %1113 = arith.muli %c7_i32_275, %c2_i32_276 : i32
    %1114 = tpu.assume_multiple %1113, 2 : i32
    %c7_i32_277 = arith.constant 7 : i32
    %1115 = arith.subi %c7_i32_277, %c7_i32_275 : i32
    %c2_i32_278 = arith.constant 2 : i32
    %1116 = arith.muli %1115, %c2_i32_278 : i32
    %1117 = tpu.assume_multiple %1116, 2 : i32
    %1118 = arith.index_cast %1114 : i32 to index
    %c0_279 = arith.constant 0 : index
    %1119 = vector.load %arg25[%1118, %c0_279] : memref<16x96xf32, #tpu.memory_space<vmem>>, vector<2x96xf32>
    %1120 = arith.index_cast %1117 : i32 to index
    %c0_280 = arith.constant 0 : index
    %1121 = vector.load %arg26[%1120, %c0_280] : memref<16x96xf32, #tpu.memory_space<vmem>>, vector<2x96xf32>
    %1122 = tpu.concatenate %1080, %1108 in 1 : vector<2x32xf32>, vector<2x32xf32> -> vector<2x64xf32>
    %cst_281 = arith.constant dense<0.000000e+00> : vector<2x192xf32>
    %1123 = tpu.matmul %1122, %612, %cst_281 {dimension_numbers = #tpu.dot_dimension_numbers<[1], [0], [0], [1], [0, 0, 1, 1], [], []>} : vector<2x64xf32>, vector<64x192xf32>, vector<2x192xf32> -> vector<2x192xf32>
    %1124 = vector.extract_strided_slice %1119 {offsets = [0, 0], sizes = [2, 32], strides = [1, 1]} : vector<2x96xf32> to vector<2x32xf32>
    %1125 = vector.extract_strided_slice %1123 {offsets = [0, 0], sizes = [2, 32], strides = [1, 1]} : vector<2x192xf32> to vector<2x32xf32>
    %1126 = arith.addf %1124, %1125 : vector<2x32xf32>
    %1127 = arith.negf %1126 : vector<2x32xf32>
    %1128 = math.exp %1127 : vector<2x32xf32>
    %cst_282 = arith.constant 1.000000e+00 : f32
    %1129 = vector.broadcast %cst_282 : f32 to vector<2x32xf32>
    %1130 = arith.addf %1129, %1128 : vector<2x32xf32>
    %1131 = arith.divf %1129, %1130 : vector<2x32xf32>
    %1132 = vector.extract_strided_slice %1119 {offsets = [0, 32], sizes = [2, 32], strides = [1, 1]} : vector<2x96xf32> to vector<2x32xf32>
    %1133 = vector.extract_strided_slice %1123 {offsets = [0, 32], sizes = [2, 32], strides = [1, 1]} : vector<2x192xf32> to vector<2x32xf32>
    %1134 = arith.addf %1132, %1133 : vector<2x32xf32>
    %1135 = arith.negf %1134 : vector<2x32xf32>
    %1136 = math.exp %1135 : vector<2x32xf32>
    %cst_283 = arith.constant 1.000000e+00 : f32
    %1137 = vector.broadcast %cst_283 : f32 to vector<2x32xf32>
    %1138 = arith.addf %1137, %1136 : vector<2x32xf32>
    %1139 = arith.divf %1137, %1138 : vector<2x32xf32>
    %1140 = vector.extract_strided_slice %1119 {offsets = [0, 64], sizes = [2, 32], strides = [1, 1]} : vector<2x96xf32> to vector<2x32xf32>
    %1141 = vector.extract_strided_slice %1123 {offsets = [0, 64], sizes = [2, 32], strides = [1, 1]} : vector<2x192xf32> to vector<2x32xf32>
    %1142 = vector.broadcast %613 : vector<1x32xf32> to vector<2x32xf32>
    %1143 = arith.addf %1141, %1142 : vector<2x32xf32>
    %1144 = arith.mulf %1131, %1143 : vector<2x32xf32>
    %1145 = arith.addf %1140, %1144 : vector<2x32xf32>
    %1146 = math.tanh %1145 : vector<2x32xf32>
    %cst_284 = arith.constant 1.000000e+00 : f32
    %1147 = vector.broadcast %cst_284 : f32 to vector<2x32xf32>
    %1148 = arith.subf %1147, %1139 : vector<2x32xf32>
    %1149 = arith.mulf %1148, %1146 : vector<2x32xf32>
    %1150 = arith.mulf %1139, %1080 : vector<2x32xf32>
    %1151 = arith.addf %1149, %1150 : vector<2x32xf32>
    %1152 = vector.extract_strided_slice %1121 {offsets = [0, 0], sizes = [2, 32], strides = [1, 1]} : vector<2x96xf32> to vector<2x32xf32>
    %1153 = vector.extract_strided_slice %1123 {offsets = [0, 96], sizes = [2, 32], strides = [1, 1]} : vector<2x192xf32> to vector<2x32xf32>
    %1154 = arith.addf %1152, %1153 : vector<2x32xf32>
    %1155 = arith.negf %1154 : vector<2x32xf32>
    %1156 = math.exp %1155 : vector<2x32xf32>
    %cst_285 = arith.constant 1.000000e+00 : f32
    %1157 = vector.broadcast %cst_285 : f32 to vector<2x32xf32>
    %1158 = arith.addf %1157, %1156 : vector<2x32xf32>
    %1159 = arith.divf %1157, %1158 : vector<2x32xf32>
    %1160 = vector.extract_strided_slice %1121 {offsets = [0, 32], sizes = [2, 32], strides = [1, 1]} : vector<2x96xf32> to vector<2x32xf32>
    %1161 = vector.extract_strided_slice %1123 {offsets = [0, 128], sizes = [2, 32], strides = [1, 1]} : vector<2x192xf32> to vector<2x32xf32>
    %1162 = arith.addf %1160, %1161 : vector<2x32xf32>
    %1163 = arith.negf %1162 : vector<2x32xf32>
    %1164 = math.exp %1163 : vector<2x32xf32>
    %cst_286 = arith.constant 1.000000e+00 : f32
    %1165 = vector.broadcast %cst_286 : f32 to vector<2x32xf32>
    %1166 = arith.addf %1165, %1164 : vector<2x32xf32>
    %1167 = arith.divf %1165, %1166 : vector<2x32xf32>
    %1168 = vector.extract_strided_slice %1121 {offsets = [0, 64], sizes = [2, 32], strides = [1, 1]} : vector<2x96xf32> to vector<2x32xf32>
    %1169 = vector.extract_strided_slice %1123 {offsets = [0, 160], sizes = [2, 32], strides = [1, 1]} : vector<2x192xf32> to vector<2x32xf32>
    %1170 = vector.broadcast %614 : vector<1x32xf32> to vector<2x32xf32>
    %1171 = arith.addf %1169, %1170 : vector<2x32xf32>
    %1172 = arith.mulf %1159, %1171 : vector<2x32xf32>
    %1173 = arith.addf %1168, %1172 : vector<2x32xf32>
    %1174 = math.tanh %1173 : vector<2x32xf32>
    %cst_287 = arith.constant 1.000000e+00 : f32
    %1175 = vector.broadcast %cst_287 : f32 to vector<2x32xf32>
    %1176 = arith.subf %1175, %1167 : vector<2x32xf32>
    %1177 = arith.mulf %1176, %1174 : vector<2x32xf32>
    %1178 = arith.mulf %1167, %1108 : vector<2x32xf32>
    %1179 = arith.addf %1177, %1178 : vector<2x32xf32>
    %1180 = arith.index_cast %1114 : i32 to index
    %c0_288 = arith.constant 0 : index
    %1181 = vector.load %arg27[%1180, %c0_288] : memref<16x32xf32, #tpu.memory_space<vmem>>, vector<2x32xf32>
    tpu.vector_store %arg27[%1180, %c0_288], %1151 {strides = array<i32>} : memref<16x32xf32, #tpu.memory_space<vmem>>, vector<2x32xf32>,
    %1182 = arith.index_cast %1117 : i32 to index
    %c0_289 = arith.constant 0 : index
    %1183 = vector.load %arg28[%1182, %c0_289] : memref<16x32xf32, #tpu.memory_space<vmem>>, vector<2x32xf32>
    tpu.vector_store %arg28[%1182, %c0_289], %1179 {strides = array<i32>} : memref<16x32xf32, #tpu.memory_space<vmem>>, vector<2x32xf32>,
    %c8_i32_290 = arith.constant 8 : i32
    %c0_291 = arith.constant 0 : index
    %c0_292 = arith.constant 0 : index
    %1184 = vector.load %arg27[%c0_291, %c0_292] : memref<16x32xf32, #tpu.memory_space<vmem>>, vector<16x32xf32>
    %c0_293 = arith.constant 0 : index
    %c0_294 = arith.constant 0 : index
    %1185 = vector.load %arg19[%c0_293, %c0_294] : memref<32x32xf32, #tpu.memory_space<vmem>>, vector<32x32xf32>
    %cst_295 = arith.constant dense<0.000000e+00> : vector<16x32xf32>
    %1186 = tpu.matmul %1184, %1185, %cst_295 {dimension_numbers = #tpu.dot_dimension_numbers<[1], [0], [0], [1], [0, 0, 1, 1], [], []>} : vector<16x32xf32>, vector<32x32xf32>, vector<16x32xf32> -> vector<16x32xf32>
    %c0_296 = arith.constant 0 : index
    %c0_297 = arith.constant 0 : index
    %1187 = vector.load %arg28[%c0_296, %c0_297] : memref<16x32xf32, #tpu.memory_space<vmem>>, vector<16x32xf32>
    %c0_298 = arith.constant 0 : index
    %c0_299 = arith.constant 0 : index
    %1188 = vector.load %arg20[%c0_298, %c0_299] : memref<32x32xf32, #tpu.memory_space<vmem>>, vector<32x32xf32>
    %cst_300 = arith.constant dense<0.000000e+00> : vector<16x32xf32>
    %1189 = tpu.matmul %1187, %1188, %cst_300 {dimension_numbers = #tpu.dot_dimension_numbers<[1], [0], [0], [1], [0, 0, 1, 1], [], []>} : vector<16x32xf32>, vector<32x32xf32>, vector<16x32xf32> -> vector<16x32xf32>
    %1190 = arith.addf %1186, %1189 : vector<16x32xf32>
    %c0_301 = arith.constant 0 : index
    %c0_302 = arith.constant 0 : index
    %1191 = vector.load %arg21[%c0_301, %c0_302] : memref<1x32xf32, #tpu.memory_space<vmem>>, vector<1x32xf32>
    %1192 = vector.broadcast %1191 : vector<1x32xf32> to vector<16x32xf32>
    %1193 = arith.addf %1190, %1192 : vector<16x32xf32>
    %cst_303 = arith.constant 0.000000e+00 : f32
    %1194 = vector.broadcast %cst_303 : f32 to vector<16x32xf32>
    %1195 = arith.maximumf %1193, %1194 : vector<16x32xf32>
    %c0_304 = arith.constant 0 : index
    %c0_305 = arith.constant 0 : index
    %1196 = vector.load %arg22[%c0_304, %c0_305] : memref<32x4xf32, #tpu.memory_space<vmem>>, vector<32x4xf32>
    %cst_306 = arith.constant dense<0.000000e+00> : vector<16x4xf32>
    %1197 = tpu.matmul %1195, %1196, %cst_306 {dimension_numbers = #tpu.dot_dimension_numbers<[1], [0], [0], [1], [0, 0, 1, 1], [], []>} : vector<16x32xf32>, vector<32x4xf32>, vector<16x4xf32> -> vector<16x4xf32>
    %c0_307 = arith.constant 0 : index
    %c0_308 = arith.constant 0 : index
    %1198 = vector.load %arg23[%c0_307, %c0_308] : memref<1x4xf32, #tpu.memory_space<vmem>>, vector<1x4xf32>
    %1199 = vector.broadcast %1198 : vector<1x4xf32> to vector<16x4xf32>
    %1200 = arith.addf %1197, %1199 : vector<16x4xf32>
    %1201 = math.tanh %1200 : vector<16x4xf32>
    %c0_309 = arith.constant 0 : index
    %c0_310 = arith.constant 0 : index
    %1202 = vector.load %arg24[%c0_309, %c0_310] : memref<16x4xf32, #tpu.memory_space<vmem>>, vector<16x4xf32>
    tpu.vector_store %arg24[%c0_309, %c0_310], %1201 {strides = array<i32>} : memref<16x4xf32, #tpu.memory_space<vmem>>, vector<16x4xf32>,
    return
  }
}

</mosaic_0001>

<llo_original>
// kernel: _lambda_.1
$region0: #{_lambda_.1}
  #allocation0 [shape = 'u32[]', space=smem, size = 0x4, offset = 0x4, fixed_abs, tag = 'smem constant byte address 0x4 - core index']
  #allocation1 [shape = 'u32[144,128]{1,0:T(1,128)}', space=vmem, size = 0x12000, scoped, tag = 'internal scratch']
  #allocation2 [shape = 'f32[16,96]{1,0:T(8,128)}', space=vmem, size = 0x2000, scoped, tag = 'scratch operand']
  #allocation3 [shape = 'f32[16,96]{1,0:T(8,128)}', space=vmem, size = 0x2000, scoped, tag = 'scratch operand']
  #allocation4 [shape = 'f32[16,32]{1,0:T(8,128)}', space=vmem, size = 0x2000, scoped, tag = 'scratch operand']
  #allocation5 [shape = 'f32[16,32]{1,0:T(8,128)}', space=vmem, size = 0x2000, scoped, tag = 'scratch operand']
  %s0 = inlined_call_operand.vmem [shape: f32[16,4], index: 0, kind: input, shape index: {}]
  %s1 = inlined_call_operand.hbm [shape: f32[4,32], index: 1, kind: input, shape index: {}]
  %s2 = inlined_call_operand.hbm [shape: f32[1,32], index: 2, kind: input, shape index: {}]
  %s3 = inlined_call_operand.hbm [shape: f32[32,96], index: 3, kind: input, shape index: {}]
  %s4 = inlined_call_operand.hbm [shape: f32[1,96], index: 4, kind: input, shape index: {}]
  %s5 = inlined_call_operand.hbm [shape: f32[32,96], index: 5, kind: input, shape index: {}]
  %s6 = inlined_call_operand.hbm [shape: f32[1,96], index: 6, kind: input, shape index: {}]
  %s7 = inlined_call_operand.hbm [shape: f32[64,192], index: 7, kind: input, shape index: {}]
  %s8 = inlined_call_operand.hbm [shape: f32[1,32], index: 8, kind: input, shape index: {}]
  %s9 = inlined_call_operand.hbm [shape: f32[1,32], index: 9, kind: input, shape index: {}]
  %s10 = inlined_call_operand.hbm [shape: f32[32,96], index: 10, kind: input, shape index: {}]
  %s11 = inlined_call_operand.hbm [shape: f32[32,96], index: 11, kind: input, shape index: {}]
  %s12 = inlined_call_operand.hbm [shape: f32[1,96], index: 12, kind: input, shape index: {}]
  %s13 = inlined_call_operand.hbm [shape: f32[32,96], index: 13, kind: input, shape index: {}]
  %s14 = inlined_call_operand.hbm [shape: f32[32,96], index: 14, kind: input, shape index: {}]
  %s15 = inlined_call_operand.hbm [shape: f32[1,96], index: 15, kind: input, shape index: {}]
  %s16 = inlined_call_operand.hbm [shape: f32[64,192], index: 16, kind: input, shape index: {}]
  %s17 = inlined_call_operand.hbm [shape: f32[1,32], index: 17, kind: input, shape index: {}]
  %s18 = inlined_call_operand.vmem [shape: f32[1,32], index: 18, kind: input, shape index: {}]
  %s19 = inlined_call_operand.vmem [shape: f32[32,32], index: 19, kind: input, shape index: {}]
  %s20 = inlined_call_operand.vmem [shape: f32[32,32], index: 20, kind: input, shape index: {}]
  %s21 = inlined_call_operand.vmem [shape: f32[1,32], index: 21, kind: input, shape index: {}]
  %s22 = inlined_call_operand.vmem [shape: f32[32,4], index: 22, kind: input, shape index: {}]
  %s23 = inlined_call_operand.vmem [shape: f32[1,4], index: 23, kind: input, shape index: {}]
  %s24 = inlined_call_operand.vmem [shape: f32[16,4], index: 24, kind: output, shape index: {}]
  %s25 = sld [smem:[#allocation0]]
  $region174: #{_lambda_.1} parent=0
    _
  %s27 = ssub.s32 1, %s25
  %s28 = scalar_select 0, %s27, %s25
  $region1: #{_lambda_.1} parent=0
    #allocation6 [shape = 'u8[2048]{0}', space=vmem, size = 0x800, scoped, tag = 'input window, operand 1, single buffered']
    #allocation7 [shape = 's32[1]{0}', space=sflag, size = 0x4, scoped, tag = 'scoped memory for _lambda_.1']
    #allocation8 [shape = 'u8[512]{0}', space=vmem, size = 0x400, scoped, tag = 'input window, operand 2, single buffered']
    #allocation9 [shape = 's32[1]{0}', space=sflag, size = 0x4, scoped, tag = 'scoped memory for _lambda_.1']
    #allocation10 [shape = 'u8[16384]{0}', space=vmem, size = 0x4000, scoped, tag = 'input window, operand 3, single buffered']
    #allocation11 [shape = 'u8[512]{0}', space=vmem, size = 0x400, scoped, tag = 'input window, operand 4, single buffered']
    #allocation12 [shape = 's32[1]{0}', space=sflag, size = 0x4, scoped, tag = 'scoped memory for _lambda_.1']
    #allocation13 [shape = 'u8[16384]{0}', space=vmem, size = 0x4000, scoped, tag = 'input window, operand 5, single buffered']
    #allocation14 [shape = 'u8[512]{0}', space=vmem, size = 0x400, scoped, tag = 'input window, operand 6, single buffered']
    #allocation15 [shape = 's32[1]{0}', space=sflag, size = 0x4, scoped, tag = 'scoped memory for _lambda_.1']
    #allocation16 [shape = 'u8[65536]{0}', space=vmem, size = 0x10000, scoped, tag = 'input window, operand 7, single buffered']
    #allocation17 [shape = 'u8[512]{0}', space=vmem, size = 0x400, scoped, tag = 'input window, operand 8, single buffered']
    #allocation18 [shape = 's32[1]{0}', space=sflag, size = 0x4, scoped, tag = 'scoped memory for _lambda_.1']
    #allocation19 [shape = 'u8[512]{0}', space=vmem, size = 0x400, scoped, tag = 'input window, operand 9, single buffered']
    #allocation20 [shape = 'u8[16384]{0}', space=vmem, size = 0x4000, scoped, tag = 'input window, operand 10, single buffered']
    #allocation21 [shape = 's32[1]{0}', space=sflag, size = 0x4, scoped, tag = 'scoped memory for _lambda_.1']
    #allocation22 [shape = 'u8[16384]{0}', space=vmem, size = 0x4000, scoped, tag = 'input window, operand 11, single buffered']
    #allocation23 [shape = 'u8[512]{0}', space=vmem, size = 0x400, scoped, tag = 'input window, operand 12, single buffered']
    #allocation24 [shape = 's32[1]{0}', space=sflag, size = 0x4, scoped, tag = 'scoped memory for _lambda_.1']
    #allocation25 [shape = 'u8[16384]{0}', space=vmem, size = 0x4000, scoped, tag = 'input window, operand 13, single buffered']
    #allocation26 [shape = 'u8[16384]{0}', space=vmem, size = 0x4000, scoped, tag = 'input window, operand 14, single buffered']
    #allocation27 [shape = 's32[1]{0}', space=sflag, size = 0x4, scoped, tag = 'scoped memory for _lambda_.1']
    #allocation28 [shape = 'u8[512]{0}', space=vmem, size = 0x400, scoped, tag = 'input window, operand 15, single buffered']
    #allocation29 [shape = 'u8[65536]{0}', space=vmem, size = 0x10000, scoped, tag = 'input window, operand 16, single buffered']
    #allocation30 [shape = 's32[1]{0}', space=sflag, size = 0x4, scoped, tag = 'scoped memory for _lambda_.1']
    #allocation31 [shape = 'u8[512]{0}', space=vmem, size = 0x400, scoped, tag = 'input window, operand 17, single buffered']
    %29 = vsyncpa [#allocation7], 0
    %30 = vsyncpa [#allocation9], 0
    %31 = vsyncpa [#allocation12], 0
    %32 = vsyncpa [#allocation15], 0
    %33 = vsyncpa [#allocation18], 0
    %34 = vsyncpa [#allocation21], 0
    %35 = vsyncpa [#allocation24], 0
    %36 = vsyncpa [#allocation27], 0
    %37 = vsyncpa [#allocation30], 0
    // Predicated region
    $region2: #{_lambda_.1} parent=1 // pred_check
      _
    $region3: #{_lambda_.1} parent=1 // pred_check_branch
      %39 = sbr.rel (0) target = $region5
    $region4: #{_lambda_.1} parent=1 // pred_region
      _
    $region5: #{_lambda_.1} parent=1 // pred_fallthru
      _
    // Predicated region
    $region6: #{_lambda_.1} parent=1 // pred_check
      _
    $region7: #{_lambda_.1} parent=1 // pred_check_branch
      %41 = sbr.rel (0) target = $region9
    $region8: #{_lambda_.1} parent=1 // pred_region
      %s43 = ssub.s32 64, 64
      %44 = vsyncadd [#allocation7], %s43
      %s46 = sshll.u32 [#allocation6], 4
      %s47 = int_to_ptr.vmem [resolvable:$true] %s46
      %49 = dma.hbm_to_vmem [thread:$0]  %s1, 64, %s47, [#allocation7]
    $region9: #{_lambda_.1} parent=1 // pred_fallthru
      _
    // Predicated region
    $region10: #{_lambda_.1} parent=1 // pred_check
      _
    $region11: #{_lambda_.1} parent=1 // pred_check_branch
      %51 = sbr.rel (0) target = $region13
    $region12: #{_lambda_.1} parent=1 // pred_region
      %s53 = ssub.s32 16, 16
      %54 = vsyncadd [#allocation9], %s53
      %s56 = sshll.u32 [#allocation8], 4
      %s57 = int_to_ptr.vmem [resolvable:$true] %s56
      %59 = dma.hbm_to_vmem [thread:$0]  %s2, 16, %s57, [#allocation9]
    $region13: #{_lambda_.1} parent=1 // pred_fallthru
      _
    // Predicated region
    $region14: #{_lambda_.1} parent=1 // pred_check
      _
    $region15: #{_lambda_.1} parent=1 // pred_check_branch
      %61 = sbr.rel (0) target = $region17
    $region16: #{_lambda_.1} parent=1 // pred_region
      %s63 = ssub.s32 512, 512
      %64 = vsyncadd [#allocation9], %s63
      %s65 = sshll.u32 [#allocation10], 4
      %s66 = int_to_ptr.vmem [resolvable:$true] %s65
      %71 = dma.hbm_to_vmem [thread:$0]  %s3, 512, %s66, [#allocation9], 128, 128, 8
    $region17: #{_lambda_.1} parent=1 // pred_fallthru
      _
    // Predicated region
    $region18: #{_lambda_.1} parent=1 // pred_check
      _
    $region19: #{_lambda_.1} parent=1 // pred_check_branch
      %73 = sbr.rel (0) target = $region21
    $region20: #{_lambda_.1} parent=1 // pred_region
      %s75 = ssub.s32 16, 16
      %76 = vsyncadd [#allocation12], %s75
      %s78 = sshll.u32 [#allocation11], 4
      %s79 = int_to_ptr.vmem [resolvable:$true] %s78
      %81 = dma.hbm_to_vmem [thread:$0]  %s4, 16, %s79, [#allocation12]
    $region21: #{_lambda_.1} parent=1 // pred_fallthru
      _
    // Predicated region
    $region22: #{_lambda_.1} parent=1 // pred_check
      _
    $region23: #{_lambda_.1} parent=1 // pred_check_branch
      %83 = sbr.rel (0) target = $region25
    $region24: #{_lambda_.1} parent=1 // pred_region
      %s85 = ssub.s32 512, 512
      %86 = vsyncadd [#allocation12], %s85
      %s87 = sshll.u32 [#allocation13], 4
      %s88 = int_to_ptr.vmem [resolvable:$true] %s87
      %93 = dma.hbm_to_vmem [thread:$0]  %s5, 512, %s88, [#allocation12], 128, 128, 8
    $region25: #{_lambda_.1} parent=1 // pred_fallthru
      _
    // Predicated region
    $region26: #{_lambda_.1} parent=1 // pred_check
      _
    $region27: #{_lambda_.1} parent=1 // pred_check_branch
      %95 = sbr.rel (0) target = $region29
    $region28: #{_lambda_.1} parent=1 // pred_region
      %s97 = ssub.s32 16, 16
      %98 = vsyncadd [#allocation15], %s97
      %s100 = sshll.u32 [#allocation14], 4
      %s101 = int_to_ptr.vmem [resolvable:$true] %s100
      %103 = dma.hbm_to_vmem [thread:$0]  %s6, 16, %s101, [#allocation15]
    $region29: #{_lambda_.1} parent=1 // pred_fallthru
      _
    // Predicated region
    $region30: #{_lambda_.1} parent=1 // pred_check
      _
    $region31: #{_lambda_.1} parent=1 // pred_check_branch
      %105 = sbr.rel (0) target = $region33
    $region32: #{_lambda_.1} parent=1 // pred_region
      %s107 = ssub.s32 2048, 2048
      %108 = vsyncadd [#allocation15], %s107
      %s109 = sshll.u32 [#allocation16], 4
      %s110 = int_to_ptr.vmem [resolvable:$true] %s109
      %115 = dma.hbm_to_vmem [thread:$0]  %s7, 2048, %s110, [#allocation15], 256, 256, 16
    $region33: #{_lambda_.1} parent=1 // pred_fallthru
      _
    // Predicated region
    $region34: #{_lambda_.1} parent=1 // pred_check
      _
    $region35: #{_lambda_.1} parent=1 // pred_check_branch
      %117 = sbr.rel (0) target = $region37
    $region36: #{_lambda_.1} parent=1 // pred_region
      %s119 = ssub.s32 16, 16
      %120 = vsyncadd [#allocation18], %s119
      %s122 = sshll.u32 [#allocation17], 4
      %s123 = int_to_ptr.vmem [resolvable:$true] %s122
      %125 = dma.hbm_to_vmem [thread:$0]  %s8, 16, %s123, [#allocation18]
    $region37: #{_lambda_.1} parent=1 // pred_fallthru
      _
    // Predicated region
    $region38: #{_lambda_.1} parent=1 // pred_check
      _
    $region39: #{_lambda_.1} parent=1 // pred_check_branch
      %127 = sbr.rel (0) target = $region41
    $region40: #{_lambda_.1} parent=1 // pred_region
      %s129 = ssub.s32 16, 16
      %130 = vsyncadd [#allocation18], %s129
      %s132 = sshll.u32 [#allocation19], 4
      %s133 = int_to_ptr.vmem [resolvable:$true] %s132
      %135 = dma.hbm_to_vmem [thread:$0]  %s9, 16, %s133, [#allocation18]
    $region41: #{_lambda_.1} parent=1 // pred_fallthru
      _
    // Predicated region
    $region42: #{_lambda_.1} parent=1 // pred_check
      _
    $region43: #{_lambda_.1} parent=1 // pred_check_branch
      %137 = sbr.rel (0) target = $region45
    $region44: #{_lambda_.1} parent=1 // pred_region
      %s139 = ssub.s32 512, 512
      %140 = vsyncadd [#allocation21], %s139
      %s141 = sshll.u32 [#allocation20], 4
      %s142 = int_to_ptr.vmem [resolvable:$true] %s141
      %147 = dma.hbm_to_vmem [thread:$0]  %s10, 512, %s142, [#allocation21], 128, 128, 8
    $region45: #{_lambda_.1} parent=1 // pred_fallthru
      _
    // Predicated region
    $region46: #{_lambda_.1} parent=1 // pred_check
      _
    $region47: #{_lambda_.1} parent=1 // pred_check_branch
      %149 = sbr.rel (0) target = $region49
    $region48: #{_lambda_.1} parent=1 // pred_region
      %s151 = ssub.s32 512, 512
      %152 = vsyncadd [#allocation21], %s151
      %s153 = sshll.u32 [#allocation22], 4
      %s154 = int_to_ptr.vmem [resolvable:$true] %s153
      %159 = dma.hbm_to_vmem [thread:$0]  %s11, 512, %s154, [#allocation21], 128, 128, 8
    $region49: #{_lambda_.1} parent=1 // pred_fallthru
      _
    // Predicated region
    $region50: #{_lambda_.1} parent=1 // pred_check
      _
    $region51: #{_lambda_.1} parent=1 // pred_check_branch
      %161 = sbr.rel (0) target = $region53
    $region52: #{_lambda_.1} parent=1 // pred_region
      %s163 = ssub.s32 16, 16
      %164 = vsyncadd [#allocation24], %s163
      %s166 = sshll.u32 [#allocation23], 4
      %s167 = int_to_ptr.vmem [resolvable:$true] %s166
      %169 = dma.hbm_to_vmem [thread:$0]  %s12, 16, %s167, [#allocation24]
    $region53: #{_lambda_.1} parent=1 // pred_fallthru
      _
    // Predicated region
    $region54: #{_lambda_.1} parent=1 // pred_check
      _
    $region55: #{_lambda_.1} parent=1 // pred_check_branch
      %171 = sbr.rel (0) target = $region57
    $region56: #{_lambda_.1} parent=1 // pred_region
      %s173 = ssub.s32 512, 512
      %174 = vsyncadd [#allocation24], %s173
      %s175 = sshll.u32 [#allocation25], 4
      %s176 = int_to_ptr.vmem [resolvable:$true] %s175
      %181 = dma.hbm_to_vmem [thread:$0]  %s13, 512, %s176, [#allocation24], 128, 128, 8
    $region57: #{_lambda_.1} parent=1 // pred_fallthru
      _
    // Predicated region
    $region58: #{_lambda_.1} parent=1 // pred_check
      _
    $region59: #{_lambda_.1} parent=1 // pred_check_branch
      %183 = sbr.rel (0) target = $region61
    $region60: #{_lambda_.1} parent=1 // pred_region
      %s185 = ssub.s32 512, 512
      %186 = vsyncadd [#allocation27], %s185
      %s187 = sshll.u32 [#allocation26], 4
      %s188 = int_to_ptr.vmem [resolvable:$true] %s187
      %193 = dma.hbm_to_vmem [thread:$0]  %s14, 512, %s188, [#allocation27], 128, 128, 8
    $region61: #{_lambda_.1} parent=1 // pred_fallthru
      _
    // Predicated region
    $region62: #{_lambda_.1} parent=1 // pred_check
      _
    $region63: #{_lambda_.1} parent=1 // pred_check_branch
      %195 = sbr.rel (0) target = $region65
    $region64: #{_lambda_.1} parent=1 // pred_region
      %s197 = ssub.s32 16, 16
      %198 = vsyncadd [#allocation27], %s197
      %s200 = sshll.u32 [#allocation28], 4
      %s201 = int_to_ptr.vmem [resolvable:$true] %s200
      %203 = dma.hbm_to_vmem [thread:$0]  %s15, 16, %s201, [#allocation27]
    $region65: #{_lambda_.1} parent=1 // pred_fallthru
      _
    // Predicated region
    $region66: #{_lambda_.1} parent=1 // pred_check
      _
    $region67: #{_lambda_.1} parent=1 // pred_check_branch
      %205 = sbr.rel (0) target = $region69
    $region68: #{_lambda_.1} parent=1 // pred_region
      %s207 = ssub.s32 2048, 2048
      %208 = vsyncadd [#allocation30], %s207
      %s209 = sshll.u32 [#allocation29], 4
      %s210 = int_to_ptr.vmem [resolvable:$true] %s209
      %215 = dma.hbm_to_vmem [thread:$0]  %s16, 2048, %s210, [#allocation30], 256, 256, 16
    $region69: #{_lambda_.1} parent=1 // pred_fallthru
      _
    // Predicated region
    $region70: #{_lambda_.1} parent=1 // pred_check
      _
    $region71: #{_lambda_.1} parent=1 // pred_check_branch
      %217 = sbr.rel (0) target = $region73
    $region72: #{_lambda_.1} parent=1 // pred_region
      %s219 = ssub.s32 16, 16
      %220 = vsyncadd [#allocation30], %s219
      %s222 = sshll.u32 [#allocation31], 4
      %s223 = int_to_ptr.vmem [resolvable:$true] %s222
      %225 = dma.hbm_to_vmem [thread:$0]  %s17, 16, %s223, [#allocation30]
    $region73: #{_lambda_.1} parent=1 // pred_fallthru
      _
    // Predicated region
    $region74: #{_lambda_.1} parent=1 // pred_check
      _
    $region75: #{_lambda_.1} parent=1 // pred_check_branch
      %227 = sbr.rel (0) target = $region77
    $region76: #{_lambda_.1} parent=1 // pred_region
      _
    $region77: #{_lambda_.1} parent=1 // pred_fallthru
      _
    // Predicated region
    $region78: #{_lambda_.1} parent=1 // pred_check
      _
    $region79: #{_lambda_.1} parent=1 // pred_check_branch
      %229 = sbr.rel (0) target = $region81
    $region80: #{_lambda_.1} parent=1 // pred_region
      _
    $region81: #{_lambda_.1} parent=1 // pred_fallthru
      _
    // Predicated region
    $region82: #{_lambda_.1} parent=1 // pred_check
      _
    $region83: #{_lambda_.1} parent=1 // pred_check_branch
      %231 = sbr.rel (0) target = $region85
    $region84: #{_lambda_.1} parent=1 // pred_region
      _
    $region85: #{_lambda_.1} parent=1 // pred_fallthru
      _
    // Predicated region
    $region86: #{_lambda_.1} parent=1 // pred_check
      _
    $region87: #{_lambda_.1} parent=1 // pred_check_branch
      %233 = sbr.rel (0) target = $region89
    $region88: #{_lambda_.1} parent=1 // pred_region
      _
    $region89: #{_lambda_.1} parent=1 // pred_fallthru
      _
    // Predicated region
    $region90: #{_lambda_.1} parent=1 // pred_check
      _
    $region91: #{_lambda_.1} parent=1 // pred_check_branch
      %235 = sbr.rel (0) target = $region93
    $region92: #{_lambda_.1} parent=1 // pred_region
      _
    $region93: #{_lambda_.1} parent=1 // pred_fallthru
      _
    // Predicated region
    $region94: #{_lambda_.1} parent=1 // pred_check
      _
    $region95: #{_lambda_.1} parent=1 // pred_check_branch
      %237 = sbr.rel (0) target = $region97
    $region96: #{_lambda_.1} parent=1 // pred_region
      _
    $region97: #{_lambda_.1} parent=1 // pred_fallthru
      _
    // Predicated region
    $region98: #{_lambda_.1} parent=1 // pred_check
      _
    $region99: #{_lambda_.1} parent=1 // pred_check_branch
      %239 = sbr.rel (0) target = $region101
    $region100: #{_lambda_.1} parent=1 // pred_region
      %240 = dma.done [#allocation7], 64
    $region101: #{_lambda_.1} parent=1 // pred_fallthru
      _
    // Predicated region
    $region102: #{_lambda_.1} parent=1 // pred_check
      _
    $region103: #{_lambda_.1} parent=1 // pred_check_branch
      %242 = sbr.rel (0) target = $region105
    $region104: #{_lambda_.1} parent=1 // pred_region
      %243 = dma.done [#allocation9], 16
    $region105: #{_lambda_.1} parent=1 // pred_fallthru
      _
    // Predicated region
    $region106: #{_lambda_.1} parent=1 // pred_check
      _
    $region107: #{_lambda_.1} parent=1 // pred_check_branch
      %245 = sbr.rel (0) target = $region109
    $region108: #{_lambda_.1} parent=1 // pred_region
      %246 = dma.done [#allocation9], 512
    $region109: #{_lambda_.1} parent=1 // pred_fallthru
      _
    // Predicated region
    $region110: #{_lambda_.1} parent=1 // pred_check
      _
    $region111: #{_lambda_.1} parent=1 // pred_check_branch
      %248 = sbr.rel (0) target = $region113
    $region112: #{_lambda_.1} parent=1 // pred_region
      %249 = dma.done [#allocation12], 16
    $region113: #{_lambda_.1} parent=1 // pred_fallthru
      _
    // Predicated region
    $region114: #{_lambda_.1} parent=1 // pred_check
      _
    $region115: #{_lambda_.1} parent=1 // pred_check_branch
      %251 = sbr.rel (0) target = $region117
    $region116: #{_lambda_.1} parent=1 // pred_region
      %252 = dma.done [#allocation12], 512
    $region117: #{_lambda_.1} parent=1 // pred_fallthru
      _
    // Predicated region
    $region118: #{_lambda_.1} parent=1 // pred_check
      _
    $region119: #{_lambda_.1} parent=1 // pred_check_branch
      %254 = sbr.rel (0) target = $region121
    $region120: #{_lambda_.1} parent=1 // pred_region
      %255 = dma.done [#allocation15], 16
    $region121: #{_lambda_.1} parent=1 // pred_fallthru
      _
    // Predicated region
    $region122: #{_lambda_.1} parent=1 // pred_check
      _
    $region123: #{_lambda_.1} parent=1 // pred_check_branch
      %257 = sbr.rel (0) target = $region125
    $region124: #{_lambda_.1} parent=1 // pred_region
      %258 = dma.done [#allocation15], 2048
    $region125: #{_lambda_.1} parent=1 // pred_fallthru
      _
    // Predicated region
    $region126: #{_lambda_.1} parent=1 // pred_check
      _
    $region127: #{_lambda_.1} parent=1 // pred_check_branch
      %260 = sbr.rel (0) target = $region129
    $region128: #{_lambda_.1} parent=1 // pred_region
      %261 = dma.done [#allocation18], 16
    $region129: #{_lambda_.1} parent=1 // pred_fallthru
      _
    // Predicated region
    $region130: #{_lambda_.1} parent=1 // pred_check
      _
    $region131: #{_lambda_.1} parent=1 // pred_check_branch
      %263 = sbr.rel (0) target = $region133
    $region132: #{_lambda_.1} parent=1 // pred_region
      %264 = dma.done [#allocation18], 16
    $region133: #{_lambda_.1} parent=1 // pred_fallthru
      _
    // Predicated region
    $region134: #{_lambda_.1} parent=1 // pred_check
      _
    $region135: #{_lambda_.1} parent=1 // pred_check_branch
      %266 = sbr.rel (0) target = $region137
    $region136: #{_lambda_.1} parent=1 // pred_region
      %267 = dma.done [#allocation21], 512
    $region137: #{_lambda_.1} parent=1 // pred_fallthru
      _
    // Predicated region
    $region138: #{_lambda_.1} parent=1 // pred_check
      _
    $region139: #{_lambda_.1} parent=1 // pred_check_branch
      %269 = sbr.rel (0) target = $region141
    $region140: #{_lambda_.1} parent=1 // pred_region
      %270 = dma.done [#allocation21], 512
    $region141: #{_lambda_.1} parent=1 // pred_fallthru
      _
    // Predicated region
    $region142: #{_lambda_.1} parent=1 // pred_check
      _
    $region143: #{_lambda_.1} parent=1 // pred_check_branch
      %272 = sbr.rel (0) target = $region145
    $region144: #{_lambda_.1} parent=1 // pred_region
      %273 = dma.done [#allocation24], 16
    $region145: #{_lambda_.1} parent=1 // pred_fallthru
      _
    // Predicated region
    $region146: #{_lambda_.1} parent=1 // pred_check
      _
    $region147: #{_lambda_.1} parent=1 // pred_check_branch
      %275 = sbr.rel (0) target = $region149
    $region148: #{_lambda_.1} parent=1 // pred_region
      %276 = dma.done [#allocation24], 512
    $region149: #{_lambda_.1} parent=1 // pred_fallthru
      _
    // Predicated region
    $region150: #{_lambda_.1} parent=1 // pred_check
      _
    $region151: #{_lambda_.1} parent=1 // pred_check_branch
      %278 = sbr.rel (0) target = $region153
    $region152: #{_lambda_.1} parent=1 // pred_region
      %279 = dma.done [#allocation27], 512
    $region153: #{_lambda_.1} parent=1 // pred_fallthru
      _
    // Predicated region
    $region154: #{_lambda_.1} parent=1 // pred_check
      _
    $region155: #{_lambda_.1} parent=1 // pred_check_branch
      %281 = sbr.rel (0) target = $region157
    $region156: #{_lambda_.1} parent=1 // pred_region
      %282 = dma.done [#allocation27], 16
    $region157: #{_lambda_.1} parent=1 // pred_fallthru
      _
    // Predicated region
    $region158: #{_lambda_.1} parent=1 // pred_check
      _
    $region159: #{_lambda_.1} parent=1 // pred_check_branch
      %284 = sbr.rel (0) target = $region161
    $region160: #{_lambda_.1} parent=1 // pred_region
      %285 = dma.done [#allocation30], 2048
    $region161: #{_lambda_.1} parent=1 // pred_fallthru
      _
    // Predicated region
    $region162: #{_lambda_.1} parent=1 // pred_check
      _
    $region163: #{_lambda_.1} parent=1 // pred_check_branch
      %287 = sbr.rel (0) target = $region165
    $region164: #{_lambda_.1} parent=1 // pred_region
      %288 = dma.done [#allocation30], 16
    $region165: #{_lambda_.1} parent=1 // pred_fallthru
      _
    %v289 = vld [vmem:[%s0] sm:$0xff]
    %v290 = vld [vmem:[%s0 + $0x8] sm:$0xff]
    %v291 = vld [vmem:[#allocation6] sm:$0xf]
    %v292 = vld [vmem:[#allocation8] sm:$0x1]
    %v294 = vlaneseq
    %v295 = vshrl.u32 %v294, 7
    %v296 = vsub.s32 0, %v295
    %v297 = vrot.slane %v292, %v296
    %vm299 = vcmask 31744
    %v301 = vsel %vm299, %v289, 0
    %v304 = vsel %vm299, %v290, 0
    %vm306 = vcmask 1043456
    %v308 = vsel %vm306, %v291, 0
    %310 = vmatprep.subr.mxu0 0.0
    %311 = vmatpush1.msra.mxu0 %v308
    %312 = vmatprep.subr.mxu0 0.0
    %313 = vmatpush1.msra.mxu0 0.0
    %314 = vmatprep.subr.mxu0 0.0
    %315 = vmatpush1.msra.mxu0 0.0
    %316 = vmatprep.subr.mxu0 0.0
    %317 = vmatpush1.msra.mxu0 0.0
    %318 = vmatprep.subr.mxu0 0.0
    %319 = vmatpush1.msra.mxu0 0.0
    %320 = vmatprep.subr.mxu0 0.0
    %321 = vmatpush1.msra.mxu0 0.0
    %322 = vmatprep.subr.mxu0 0.0
    %323 = vmatpush1.msra.mxu0 0.0
    %324 = vmatprep.subr.mxu0 0.0
    %325 = vmatpush1.msra.mxu0 0.0
    %326 = vmatprep.subr.mxu0 0.0
    %327 = vmatpush1.msra.mxu0 0.0
    %328 = vmatprep.subr.mxu0 0.0
    %329 = vmatpush1.msra.mxu0 0.0
    %330 = vmatprep.subr.mxu0 0.0
    %331 = vmatpush1.msra.mxu0 0.0
    %332 = vmatprep.subr.mxu0 0.0
    %333 = vmatpush1.msra.mxu0 0.0
    %334 = vmatprep.subr.mxu0 0.0
    %335 = vmatpush1.msra.mxu0 0.0
    %336 = vmatprep.subr.mxu0 0.0
    %337 = vmatpush1.msra.mxu0 0.0
    %338 = vmatprep.subr.mxu0 0.0
    %339 = vmatpush1.msra.mxu0 0.0
    %340 = vmatprep.subr.mxu0 0.0
    %341 = vmatpush1.msra.mxu0 0.0
    %342 = vmatprep.subr.mxu0 0.0
    %343 = vmatpush1.msra.mxu0 0.0
    %344 = vmatprep.subr.mxu0 0.0
    %345 = vmatpush1.msra.mxu0 0.0
    %346 = vmatprep.subr.mxu0 0.0
    %347 = vmatpush1.msra.mxu0 0.0
    %348 = vmatprep.subr.mxu0 0.0
    %349 = vmatpush1.msra.mxu0 0.0
    %350 = vmatprep.subr.mxu0 0.0
    %351 = vmatpush1.msra.mxu0 0.0
    %352 = vmatprep.subr.mxu0 0.0
    %353 = vmatpush1.msra.mxu0 0.0
    %354 = vmatprep.subr.mxu0 0.0
    %355 = vmatpush1.msra.mxu0 0.0
    %356 = vmatprep.subr.mxu0 0.0
    %357 = vmatpush1.msra.mxu0 0.0
    %358 = vmatprep.subr.mxu0 0.0
    %359 = vmatpush1.msra.mxu0 0.0
    %360 = vmatprep.subr.mxu0 0.0
    %361 = vmatpush1.msra.mxu0 0.0
    %362 = vmatprep.subr.mxu0 0.0
    %363 = vmatpush1.msra.mxu0 0.0
    %364 = vmatprep.subr.mxu0 0.0
    %365 = vmatpush1.msra.mxu0 0.0
    %366 = vmatprep.subr.mxu0 0.0
    %367 = vmatpush1.msra.mxu0 0.0
    %368 = vmatprep.subr.mxu0 0.0
    %369 = vmatpush1.msra.mxu0 0.0
    %370 = vmatprep.subr.mxu0 0.0
    %371 = vmatpush1.msra.mxu0 0.0
    %372 = vmatprep.subr.mxu0 0.0
    %373 = vmatpush1.msra.mxu0 0.0
    %374 = vmatprep.mubr.f32.mxu0 0.0
    %375 = vmatmul.mubr.f32.gmra.mrb[0].mxu0 %v301
    %v376 = vpop.f32.mrb[0].mxu0
    %v377 = vadd.f32 %v297, %v376
    %v378 = vpop.f32.mrb[0].mxu0
    %379 = vmatprep.mubr.f32.mxu0 0.0
    %380 = vmatmul.mubr.f32.gmra.mrb[0].mxu0 %v304
    %v381 = vpop.f32.mrb[0].mxu0
    %v382 = vadd.f32 %v297, %v381
    %v383 = vpop.f32.mrb[0].mxu0
    %384 = vdwg.mxu0
    %v385 = vmax.f32 %v377, 0.0
    %v386 = vmax.f32 %v382, 0.0
    %v387 = vld [vmem:[#allocation10] sm:$0xff]
    %v388 = vld [vmem:[#allocation10 + $0x8] sm:$0xff]
    %v389 = vld [vmem:[#allocation10 + $0x10] sm:$0xff]
    %v390 = vld [vmem:[#allocation10 + $0x18] sm:$0xff]
    %v391 = vld [vmem:[#allocation11] sm:$0x1]
    %v393 = vlaneseq
    %v394 = vshrl.u32 %v393, 7
    %v395 = vsub.s32 0, %v394
    %v396 = vrot.slane %v391, %v395
    %vm398 = vcmask 261120
    %v400 = vsel %vm398, %v385, 0
    %v403 = vsel %vm398, %v386, 0
    %405 = vmatprep.subr.mxu0 0.0
    %406 = vmatpush1.msra.mxu0 %v387
    %407 = vmatprep.subr.mxu0 0.0
    %408 = vmatpush1.msra.mxu0 %v388
    %409 = vmatprep.subr.mxu0 0.0
    %410 = vmatpush1.msra.mxu0 %v389
    %411 = vmatprep.subr.mxu0 0.0
    %412 = vmatpush1.msra.mxu0 %v390
    %413 = vmatprep.subr.mxu0 0.0
    %414 = vmatpush1.msra.mxu0 0.0
    %415 = vmatprep.subr.mxu0 0.0
    %416 = vmatpush1.msra.mxu0 0.0
    %417 = vmatprep.subr.mxu0 0.0
    %418 = vmatpush1.msra.mxu0 0.0
    %419 = vmatprep.subr.mxu0 0.0
    %420 = vmatpush1.msra.mxu0 0.0
    %421 = vmatprep.subr.mxu0 0.0
    %422 = vmatpush1.msra.mxu0 0.0
    %423 = vmatprep.subr.mxu0 0.0
    %424 = vmatpush1.msra.mxu0 0.0
    %425 = vmatprep.subr.mxu0 0.0
    %426 = vmatpush1.msra.mxu0 0.0
    %427 = vmatprep.subr.mxu0 0.0
    %428 = vmatpush1.msra.mxu0 0.0
    %429 = vmatprep.subr.mxu0 0.0
    %430 = vmatpush1.msra.mxu0 0.0
    %431 = vmatprep.subr.mxu0 0.0
    %432 = vmatpush1.msra.mxu0 0.0
    %433 = vmatprep.subr.mxu0 0.0
    %434 = vmatpush1.msra.mxu0 0.0
    %435 = vmatprep.subr.mxu0 0.0
    %436 = vmatpush1.msra.mxu0 0.0
    %437 = vmatprep.subr.mxu0 0.0
    %438 = vmatpush1.msra.mxu0 0.0
    %439 = vmatprep.subr.mxu0 0.0
    %440 = vmatpush1.msra.mxu0 0.0
    %441 = vmatprep.subr.mxu0 0.0
    %442 = vmatpush1.msra.mxu0 0.0
    %443 = vmatprep.subr.mxu0 0.0
    %444 = vmatpush1.msra.mxu0 0.0
    %445 = vmatprep.subr.mxu0 0.0
    %446 = vmatpush1.msra.mxu0 0.0
    %447 = vmatprep.subr.mxu0 0.0
    %448 = vmatpush1.msra.mxu0 0.0
    %449 = vmatprep.subr.mxu0 0.0
    %450 = vmatpush1.msra.mxu0 0.0
    %451 = vmatprep.subr.mxu0 0.0
    %452 = vmatpush1.msra.mxu0 0.0
    %453 = vmatprep.subr.mxu0 0.0
    %454 = vmatpush1.msra.mxu0 0.0
    %455 = vmatprep.subr.mxu0 0.0
    %456 = vmatpush1.msra.mxu0 0.0
    %457 = vmatprep.subr.mxu0 0.0
    %458 = vmatpush1.msra.mxu0 0.0
    %459 = vmatprep.subr.mxu0 0.0
    %460 = vmatpush1.msra.mxu0 0.0
    %461 = vmatprep.subr.mxu0 0.0
    %462 = vmatpush1.msra.mxu0 0.0
    %463 = vmatprep.subr.mxu0 0.0
    %464 = vmatpush1.msra.mxu0 0.0
    %465 = vmatprep.subr.mxu0 0.0
    %466 = vmatpush1.msra.mxu0 0.0
    %467 = vmatprep.subr.mxu0 0.0
    %468 = vmatpush1.msra.mxu0 0.0
    %469 = vmatprep.mubr.f32.mxu0 0.0
    %470 = vmatmul.mubr.f32.gmra.mrb[0].mxu0 %v400
    %v471 = vpop.f32.mrb[0].mxu0
    %v472 = vadd.f32 %v396, %v471
    %v473 = vpop.f32.mrb[0].mxu0
    %474 = vmatprep.mubr.f32.mxu0 0.0
    %475 = vmatmul.mubr.f32.gmra.mrb[0].mxu0 %v403
    %v476 = vpop.f32.mrb[0].mxu0
    %v477 = vadd.f32 %v396, %v476
    %v478 = vpop.f32.mrb[0].mxu0
    %479 = vdwg.mxu0
    %vm480 = vcmask 785408
    %481 = vst.msk [vmem:[#allocation2] sm:$0xff] %vm480, %v472
    %482 = vst.msk [vmem:[#allocation2 + $0x8] sm:$0xff] %vm480, %v477
    %v483 = vld [vmem:[#allocation13] sm:$0xff]
    %v484 = vld [vmem:[#allocation13 + $0x8] sm:$0xff]
    %v485 = vld [vmem:[#allocation13 + $0x10] sm:$0xff]
    %v486 = vld [vmem:[#allocation13 + $0x18] sm:$0xff]
    %v487 = vld [vmem:[#allocation14] sm:$0x1]
    %v489 = vlaneseq
    %v490 = vshrl.u32 %v489, 7
    %v491 = vsub.s32 0, %v490
    %v492 = vrot.slane %v487, %v491
    %494 = vmatprep.subr.mxu0 0.0
    %495 = vmatpush1.msra.mxu0 %v483
    %496 = vmatprep.subr.mxu0 0.0
    %497 = vmatpush1.msra.mxu0 %v484
    %498 = vmatprep.subr.mxu0 0.0
    %499 = vmatpush1.msra.mxu0 %v485
    %500 = vmatprep.subr.mxu0 0.0
    %501 = vmatpush1.msra.mxu0 %v486
    %502 = vmatprep.subr.mxu0 0.0
    %503 = vmatpush1.msra.mxu0 0.0
    %504 = vmatprep.subr.mxu0 0.0
    %505 = vmatpush1.msra.mxu0 0.0
    %506 = vmatprep.subr.mxu0 0.0
    %507 = vmatpush1.msra.mxu0 0.0
    %508 = vmatprep.subr.mxu0 0.0
    %509 = vmatpush1.msra.mxu0 0.0
    %510 = vmatprep.subr.mxu0 0.0
    %511 = vmatpush1.msra.mxu0 0.0
    %512 = vmatprep.subr.mxu0 0.0
    %513 = vmatpush1.msra.mxu0 0.0
    %514 = vmatprep.subr.mxu0 0.0
    %515 = vmatpush1.msra.mxu0 0.0
    %516 = vmatprep.subr.mxu0 0.0
    %517 = vmatpush1.msra.mxu0 0.0
    %518 = vmatprep.subr.mxu0 0.0
    %519 = vmatpush1.msra.mxu0 0.0
    %520 = vmatprep.subr.mxu0 0.0
    %521 = vmatpush1.msra.mxu0 0.0
    %522 = vmatprep.subr.mxu0 0.0
    %523 = vmatpush1.msra.mxu0 0.0
    %524 = vmatprep.subr.mxu0 0.0
    %525 = vmatpush1.msra.mxu0 0.0
    %526 = vmatprep.subr.mxu0 0.0
    %527 = vmatpush1.msra.mxu0 0.0
    %528 = vmatprep.subr.mxu0 0.0
    %529 = vmatpush1.msra.mxu0 0.0
    %530 = vmatprep.subr.mxu0 0.0
    %531 = vmatpush1.msra.mxu0 0.0
    %532 = vmatprep.subr.mxu0 0.0
    %533 = vmatpush1.msra.mxu0 0.0
    %534 = vmatprep.subr.mxu0 0.0
    %535 = vmatpush1.msra.mxu0 0.0
    %536 = vmatprep.subr.mxu0 0.0
    %537 = vmatpush1.msra.mxu0 0.0
    %538 = vmatprep.subr.mxu0 0.0
    %539 = vmatpush1.msra.mxu0 0.0
    %540 = vmatprep.subr.mxu0 0.0
    %541 = vmatpush1.msra.mxu0 0.0
    %542 = vmatprep.subr.mxu0 0.0
    %543 = vmatpush1.msra.mxu0 0.0
    %544 = vmatprep.subr.mxu0 0.0
    %545 = vmatpush1.msra.mxu0 0.0
    %546 = vmatprep.subr.mxu0 0.0
    %547 = vmatpush1.msra.mxu0 0.0
    %548 = vmatprep.subr.mxu0 0.0
    %549 = vmatpush1.msra.mxu0 0.0
    %550 = vmatprep.subr.mxu0 0.0
    %551 = vmatpush1.msra.mxu0 0.0
    %552 = vmatprep.subr.mxu0 0.0
    %553 = vmatpush1.msra.mxu0 0.0
    %554 = vmatprep.subr.mxu0 0.0
    %555 = vmatpush1.msra.mxu0 0.0
    %556 = vmatprep.subr.mxu0 0.0
    %557 = vmatpush1.msra.mxu0 0.0
    %558 = vmatprep.mubr.f32.mxu0 0.0
    %559 = vmatmul.mubr.f32.gmra.mrb[0].mxu0 %v400
    %v560 = vpop.f32.mrb[0].mxu0
    %v561 = vadd.f32 %v492, %v560
    %v562 = vpop.f32.mrb[0].mxu0
    %563 = vmatprep.mubr.f32.mxu0 0.0
    %564 = vmatmul.mubr.f32.gmra.mrb[0].mxu0 %v403
    %v565 = vpop.f32.mrb[0].mxu0
    %v566 = vadd.f32 %v492, %v565
    %v567 = vpop.f32.mrb[0].mxu0
    %568 = vdwg.mxu0
    %569 = vst.msk [vmem:[#allocation3] sm:$0xff] %vm480, %v561
    %570 = vst.msk [vmem:[#allocation3 + $0x8] sm:$0xff] %vm480, %v566
    %v571 = vld [vmem:[#allocation16] sm:$0xff]
    %v572 = vld [vmem:[#allocation16 + $0x8] sm:$0xff]
    %v573 = vld [vmem:[#allocation16 + $0x10] sm:$0xff]
    %v574 = vld [vmem:[#allocation16 + $0x18] sm:$0xff]
    %v575 = vld [vmem:[#allocation16 + $0x20] sm:$0xff]
    %v576 = vld [vmem:[#allocation16 + $0x28] sm:$0xff]
    %v577 = vld [vmem:[#allocation16 + $0x30] sm:$0xff]
    %v578 = vld [vmem:[#allocation16 + $0x38] sm:$0xff]
    %v579 = vld [vmem:[#allocation16 + $0x40] sm:$0xff]
    %v580 = vld [vmem:[#allocation16 + $0x48] sm:$0xff]
    %v581 = vld [vmem:[#allocation16 + $0x50] sm:$0xff]
    %v582 = vld [vmem:[#allocation16 + $0x58] sm:$0xff]
    %v583 = vld [vmem:[#allocation16 + $0x60] sm:$0xff]
    %v584 = vld [vmem:[#allocation16 + $0x68] sm:$0xff]
    %v585 = vld [vmem:[#allocation16 + $0x70] sm:$0xff]
    %v586 = vld [vmem:[#allocation16 + $0x78] sm:$0xff]
    %v587 = vld [vmem:[#allocation17] sm:$0x1]
    %v588 = vld [vmem:[#allocation19] sm:$0x1]
    %v589 = vld [vmem:[#allocation2] sm:$0x3]
    %s590 = scalar_lea.vmem [#allocation3], 14
    %v591 = vld [vmem:[%s590] sm:$0x3]
    %vm592 = vcmask 523264
    %v594 = vsel %vm592, 0.0, 0
    %596 = vmatprep.subr.mxu0 %v572
    %597 = vmatpush1.msra.mxu0 %v571
    %598 = vmatprep.subr.mxu0 %v574
    %599 = vmatpush1.msra.mxu0 %v573
    %600 = vmatprep.subr.mxu0 %v576
    %601 = vmatpush1.msra.mxu0 %v575
    %602 = vmatprep.subr.mxu0 %v578
    %603 = vmatpush1.msra.mxu0 %v577
    %604 = vmatprep.subr.mxu0 %v580
    %605 = vmatpush1.msra.mxu0 %v579
    %606 = vmatprep.subr.mxu0 %v582
    %607 = vmatpush1.msra.mxu0 %v581
    %608 = vmatprep.subr.mxu0 %v584
    %609 = vmatpush1.msra.mxu0 %v583
    %610 = vmatprep.subr.mxu0 %v586
    %611 = vmatpush1.msra.mxu0 %v585
    %612 = vmatprep.subr.mxu0 0.0
    %613 = vmatpush1.msra.mxu0 0.0
    %614 = vmatprep.subr.mxu0 0.0
    %615 = vmatpush1.msra.mxu0 0.0
    %616 = vmatprep.subr.mxu0 0.0
    %617 = vmatpush1.msra.mxu0 0.0
    %618 = vmatprep.subr.mxu0 0.0
    %619 = vmatpush1.msra.mxu0 0.0
    %620 = vmatprep.subr.mxu0 0.0
    %621 = vmatpush1.msra.mxu0 0.0
    %622 = vmatprep.subr.mxu0 0.0
    %623 = vmatpush1.msra.mxu0 0.0
    %624 = vmatprep.subr.mxu0 0.0
    %625 = vmatpush1.msra.mxu0 0.0
    %626 = vmatprep.subr.mxu0 0.0
    %627 = vmatpush1.msra.mxu0 0.0
    %628 = vmatprep.subr.mxu0 0.0
    %629 = vmatpush1.msra.mxu0 0.0
    %630 = vmatprep.subr.mxu0 0.0
    %631 = vmatpush1.msra.mxu0 0.0
    %632 = vmatprep.subr.mxu0 0.0
    %633 = vmatpush1.msra.mxu0 0.0
    %634 = vmatprep.subr.mxu0 0.0
    %635 = vmatpush1.msra.mxu0 0.0
    %636 = vmatprep.subr.mxu0 0.0
    %637 = vmatpush1.msra.mxu0 0.0
    %638 = vmatprep.subr.mxu0 0.0
    %639 = vmatpush1.msra.mxu0 0.0
    %640 = vmatprep.subr.mxu0 0.0
    %641 = vmatpush1.msra.mxu0 0.0
    %642 = vmatprep.subr.mxu0 0.0
    %643 = vmatpush1.msra.mxu0 0.0
    %644 = vmatprep.subr.mxu0 0.0
    %645 = vmatpush1.msra.mxu0 0.0
    %646 = vmatprep.subr.mxu0 0.0
    %647 = vmatpush1.msra.mxu0 0.0
    %648 = vmatprep.subr.mxu0 0.0
    %649 = vmatpush1.msra.mxu0 0.0
    %650 = vmatprep.subr.mxu0 0.0
    %651 = vmatpush1.msra.mxu0 0.0
    %652 = vmatprep.subr.mxu0 0.0
    %653 = vmatpush1.msra.mxu0 0.0
    %654 = vmatprep.subr.mxu0 0.0
    %655 = vmatpush1.msra.mxu0 0.0
    %656 = vmatprep.subr.mxu0 0.0
    %657 = vmatpush1.msra.mxu0 0.0
    %658 = vmatprep.subr.mxu0 0.0
    %659 = vmatpush1.msra.mxu0 0.0
    %660 = vmatprep.mubr.f32.mxu0 0.0
    %661 = vmatmul.mubr.f32.gmra.mrb[0].mxu0 %v594
    %v662 = vpop.f32.mrb[0].mxu0
    %v663 = vadd.f32 0.0, %v662
    %v664 = vpop.f32.mrb[0].mxu0
    %v665 = vadd.f32 0.0, %v664
    %666 = vdwg.mxu0
    %v667 = vadd.f32 %v589, %v663
    %v668 = vxor.u32 %v667, 2147483648
    %v669 = vmul.f32 %v668, 1.442695
    %v670 = vpow.pop %v669
    %v671 = vadd.f32 %v670, 1.0
    %v672 = vrcp.pop %v671
    %v673 = vmul.f32 1.0, %v672
    %v675 = vlaneseq
    %v676 = vshrl.u32 %v675, 7
    %v677 = vsub.s32 0, %v676
    %v678 = vrot.slane %v587, %v677
    %679 = vrot.lane.b32.xlu0 %v678, 64
    %v680 = vpop.permute.xlu0 %679
    %v682 = vadd.f32 %v663, %v680
    %684 = vrot.lane.b32.xlu0 %v682, 64
    %v685 = vpop.permute.xlu0 %684
    %v687 = vmul.f32 %v673, %v685
    %689 = vrot.lane.b32.xlu0 %v687, 64
    %v690 = vpop.permute.xlu0 %689
    %v692 = vadd.f32 %v589, %v690
    %v693 = vtanh.pop %v692
    %v694 = vsub.f32 1.0, %v673
    %696 = vrot.lane.b32.xlu0 %v693, 96
    %v697 = vpop.permute.xlu0 %696
    %v699 = vmul.f32 %v694, %v697
    %v700 = vmul.f32 %v673, 0.0
    %v701 = vadd.f32 %v699, %v700
    %703 = vrot.lane.b32.xlu0 %v663, 32
    %v704 = vpop.permute.xlu0 %703
    %v706 = vadd.f32 %v591, %v704
    %v707 = vxor.u32 %v706, 2147483648
    %v708 = vmul.f32 %v707, 1.442695
    %v709 = vpow.pop %v708
    %v710 = vadd.f32 %v709, 1.0
    %v711 = vrcp.pop %v710
    %v712 = vmul.f32 1.0, %v711
    %714 = vrot.lane.b32.xlu0 %v665, 32
    %v715 = vpop.permute.xlu0 %714
    %v717 = vadd.f32 %v591, %v715
    %v718 = vxor.u32 %v717, 2147483648
    %v719 = vmul.f32 %v718, 1.442695
    %v720 = vpow.pop %v719
    %v721 = vadd.f32 %v720, 1.0
    %v722 = vrcp.pop %v721
    %v723 = vmul.f32 1.0, %v722
    %v725 = vlaneseq
    %v726 = vshrl.u32 %v725, 7
    %v727 = vsub.s32 0, %v726
    %v728 = vrot.slane %v588, %v727
    %729 = vrot.lane.b32.xlu0 %v728, 32
    %v730 = vpop.permute.xlu0 %729
    %v732 = vadd.f32 %v665, %v730
    %734 = vrot.lane.b32.xlu0 %v732, 96
    %v735 = vpop.permute.xlu0 %734
    %v737 = vmul.f32 %v712, %v735
    %739 = vrot.lane.b32.xlu0 %v737, 64
    %v740 = vpop.permute.xlu0 %739
    %v742 = vadd.f32 %v591, %v740
    %v743 = vtanh.pop %v742
    %v744 = vsub.f32 1.0, %v723
    %746 = vrot.lane.b32.xlu0 %v743, 96
    %v747 = vpop.permute.xlu0 %746
    %v749 = vmul.f32 %v744, %v747
    %v750 = vmul.f32 %v723, 0.0
    %v751 = vadd.f32 %v749, %v750
    %753 = vrot.lane.b32.xlu0 %v701, 96
    %v754 = vpop.permute.xlu0 %753
    %vm756 = vcmask 254976
    %757 = vst.msk [vmem:[#allocation4] sm:$0x3] %vm756, %v754
    %759 = vrot.lane.b32.xlu0 %v751, 96
    %v760 = vpop.permute.xlu0 %759
    %s762 = scalar_lea.vmem [#allocation5], 14
    %763 = vst.msk [vmem:[%s762] sm:$0x3] %vm756, %v760
    %s764 = scalar_lea.vmem [#allocation2], 2
    %v765 = vld [vmem:[%s764] sm:$0x3]
    %s766 = scalar_lea.vmem [#allocation3], 12
    %v767 = vld [vmem:[%s766] sm:$0x3]
    %v768 = vsel %vm398, %v754, %v751
    %v770 = vsel %vm592, %v768, 0
    %772 = vmatprep.subr.mxu0 %v572
    %773 = vmatpush1.msra.mxu0 %v571
    %774 = vmatprep.subr.mxu0 %v574
    %775 = vmatpush1.msra.mxu0 %v573
    %776 = vmatprep.subr.mxu0 %v576
    %777 = vmatpush1.msra.mxu0 %v575
    %778 = vmatprep.subr.mxu0 %v578
    %779 = vmatpush1.msra.mxu0 %v577
    %780 = vmatprep.subr.mxu0 %v580
    %781 = vmatpush1.msra.mxu0 %v579
    %782 = vmatprep.subr.mxu0 %v582
    %783 = vmatpush1.msra.mxu0 %v581
    %784 = vmatprep.subr.mxu0 %v584
    %785 = vmatpush1.msra.mxu0 %v583
    %786 = vmatprep.subr.mxu0 %v586
    %787 = vmatpush1.msra.mxu0 %v585
    %788 = vmatprep.subr.mxu0 0.0
    %789 = vmatpush1.msra.mxu0 0.0
    %790 = vmatprep.subr.mxu0 0.0
    %791 = vmatpush1.msra.mxu0 0.0
    %792 = vmatprep.subr.mxu0 0.0
    %793 = vmatpush1.msra.mxu0 0.0
    %794 = vmatprep.subr.mxu0 0.0
    %795 = vmatpush1.msra.mxu0 0.0
    %796 = vmatprep.subr.mxu0 0.0
    %797 = vmatpush1.msra.mxu0 0.0
    %798 = vmatprep.subr.mxu0 0.0
    %799 = vmatpush1.msra.mxu0 0.0
    %800 = vmatprep.subr.mxu0 0.0
    %801 = vmatpush1.msra.mxu0 0.0
    %802 = vmatprep.subr.mxu0 0.0
    %803 = vmatpush1.msra.mxu0 0.0
    %804 = vmatprep.subr.mxu0 0.0
    %805 = vmatpush1.msra.mxu0 0.0
    %806 = vmatprep.subr.mxu0 0.0
    %807 = vmatpush1.msra.mxu0 0.0
    %808 = vmatprep.subr.mxu0 0.0
    %809 = vmatpush1.msra.mxu0 0.0
    %810 = vmatprep.subr.mxu0 0.0
    %811 = vmatpush1.msra.mxu0 0.0
    %812 = vmatprep.subr.mxu0 0.0
    %813 = vmatpush1.msra.mxu0 0.0
    %814 = vmatprep.subr.mxu0 0.0
    %815 = vmatpush1.msra.mxu0 0.0
    %816 = vmatprep.subr.mxu0 0.0
    %817 = vmatpush1.msra.mxu0 0.0
    %818 = vmatprep.subr.mxu0 0.0
    %819 = vmatpush1.msra.mxu0 0.0
    %820 = vmatprep.subr.mxu0 0.0
    %821 = vmatpush1.msra.mxu0 0.0
    %822 = vmatprep.subr.mxu0 0.0
    %823 = vmatpush1.msra.mxu0 0.0
    %824 = vmatprep.subr.mxu0 0.0
    %825 = vmatpush1.msra.mxu0 0.0
    %826 = vmatprep.subr.mxu0 0.0
    %827 = vmatpush1.msra.mxu0 0.0
    %828 = vmatprep.subr.mxu0 0.0
    %829 = vmatpush1.msra.mxu0 0.0
    %830 = vmatprep.subr.mxu0 0.0
    %831 = vmatpush1.msra.mxu0 0.0
    %832 = vmatprep.subr.mxu0 0.0
    %833 = vmatpush1.msra.mxu0 0.0
    %834 = vmatprep.subr.mxu0 0.0
    %835 = vmatpush1.msra.mxu0 0.0
    %836 = vmatprep.mubr.f32.mxu0 0.0
    %837 = vmatmul.mubr.f32.gmra.mrb[0].mxu0 %v770
    %v838 = vpop.f32.mrb[0].mxu0
    %v839 = vadd.f32 0.0, %v838
    %v840 = vpop.f32.mrb[0].mxu0
    %v841 = vadd.f32 0.0, %v840
    %842 = vdwg.mxu0
    %v843 = vadd.f32 %v765, %v839
    %v844 = vxor.u32 %v843, 2147483648
    %v845 = vmul.f32 %v844, 1.442695
    %v846 = vpow.pop %v845
    %v847 = vadd.f32 %v846, 1.0
    %v848 = vrcp.pop %v847
    %v849 = vmul.f32 1.0, %v848
    %v850 = vadd.f32 %v839, %v680
    %852 = vrot.lane.b32.xlu0 %v850, 64
    %v853 = vpop.permute.xlu0 %852
    %v855 = vmul.f32 %v849, %v853
    %857 = vrot.lane.b32.xlu0 %v855, 64
    %v858 = vpop.permute.xlu0 %857
    %v860 = vadd.f32 %v765, %v858
    %v861 = vtanh.pop %v860
    %v862 = vsub.f32 1.0, %v849
    %864 = vrot.lane.b32.xlu0 %v861, 96
    %v865 = vpop.permute.xlu0 %864
    %v867 = vmul.f32 %v862, %v865
    %v868 = vmul.f32 %v849, %v701
    %v869 = vadd.f32 %v867, %v868
    %871 = vrot.lane.b32.xlu0 %v839, 32
    %v872 = vpop.permute.xlu0 %871
    %v874 = vadd.f32 %v767, %v872
    %v875 = vxor.u32 %v874, 2147483648
    %v876 = vmul.f32 %v875, 1.442695
    %v877 = vpow.pop %v876
    %v878 = vadd.f32 %v877, 1.0
    %v879 = vrcp.pop %v878
    %v880 = vmul.f32 1.0, %v879
    %882 = vrot.lane.b32.xlu0 %v841, 32
    %v883 = vpop.permute.xlu0 %882
    %v885 = vadd.f32 %v767, %v883
    %v886 = vxor.u32 %v885, 2147483648
    %v887 = vmul.f32 %v886, 1.442695
    %v888 = vpow.pop %v887
    %v889 = vadd.f32 %v888, 1.0
    %v890 = vrcp.pop %v889
    %v891 = vmul.f32 1.0, %v890
    %v892 = vadd.f32 %v841, %v730
    %894 = vrot.lane.b32.xlu0 %v892, 96
    %v895 = vpop.permute.xlu0 %894
    %v897 = vmul.f32 %v880, %v895
    %899 = vrot.lane.b32.xlu0 %v897, 64
    %v900 = vpop.permute.xlu0 %899
    %v902 = vadd.f32 %v767, %v900
    %v903 = vtanh.pop %v902
    %v904 = vsub.f32 1.0, %v891
    %906 = vrot.lane.b32.xlu0 %v903, 96
    %v907 = vpop.permute.xlu0 %906
    %v909 = vmul.f32 %v904, %v907
    %v910 = vmul.f32 %v891, %v751
    %v911 = vadd.f32 %v909, %v910
    %913 = vrot.lane.b32.xlu0 %v869, 96
    %v914 = vpop.permute.xlu0 %913
    %s916 = scalar_lea.vmem [#allocation4], 2
    %917 = vst.msk [vmem:[%s916] sm:$0x3] %vm756, %v914
    %919 = vrot.lane.b32.xlu0 %v911, 96
    %v920 = vpop.permute.xlu0 %919
    %s922 = scalar_lea.vmem [#allocation5], 12
    %923 = vst.msk [vmem:[%s922] sm:$0x3] %vm756, %v920
    %s924 = scalar_lea.vmem [#allocation2], 4
    %v925 = vld [vmem:[%s924] sm:$0x3]
    %s926 = scalar_lea.vmem [#allocation3], 10
    %v927 = vld [vmem:[%s926] sm:$0x3]
    %v928 = vsel %vm398, %v914, %v911
    %v930 = vsel %vm592, %v928, 0
    %932 = vmatprep.subr.mxu0 %v572
    %933 = vmatpush1.msra.mxu0 %v571
    %934 = vmatprep.subr.mxu0 %v574
    %935 = vmatpush1.msra.mxu0 %v573
    %936 = vmatprep.subr.mxu0 %v576
    %937 = vmatpush1.msra.mxu0 %v575
    %938 = vmatprep.subr.mxu0 %v578
    %939 = vmatpush1.msra.mxu0 %v577
    %940 = vmatprep.subr.mxu0 %v580
    %941 = vmatpush1.msra.mxu0 %v579
    %942 = vmatprep.subr.mxu0 %v582
    %943 = vmatpush1.msra.mxu0 %v581
    %944 = vmatprep.subr.mxu0 %v584
    %945 = vmatpush1.msra.mxu0 %v583
    %946 = vmatprep.subr.mxu0 %v586
    %947 = vmatpush1.msra.mxu0 %v585
    %948 = vmatprep.subr.mxu0 0.0
    %949 = vmatpush1.msra.mxu0 0.0
    %950 = vmatprep.subr.mxu0 0.0
    %951 = vmatpush1.msra.mxu0 0.0
    %952 = vmatprep.subr.mxu0 0.0
    %953 = vmatpush1.msra.mxu0 0.0
    %954 = vmatprep.subr.mxu0 0.0
    %955 = vmatpush1.msra.mxu0 0.0
    %956 = vmatprep.subr.mxu0 0.0
    %957 = vmatpush1.msra.mxu0 0.0
    %958 = vmatprep.subr.mxu0 0.0
    %959 = vmatpush1.msra.mxu0 0.0
    %960 = vmatprep.subr.mxu0 0.0
    %961 = vmatpush1.msra.mxu0 0.0
    %962 = vmatprep.subr.mxu0 0.0
    %963 = vmatpush1.msra.mxu0 0.0
    %964 = vmatprep.subr.mxu0 0.0
    %965 = vmatpush1.msra.mxu0 0.0
    %966 = vmatprep.subr.mxu0 0.0
    %967 = vmatpush1.msra.mxu0 0.0
    %968 = vmatprep.subr.mxu0 0.0
    %969 = vmatpush1.msra.mxu0 0.0
    %970 = vmatprep.subr.mxu0 0.0
    %971 = vmatpush1.msra.mxu0 0.0
    %972 = vmatprep.subr.mxu0 0.0
    %973 = vmatpush1.msra.mxu0 0.0
    %974 = vmatprep.subr.mxu0 0.0
    %975 = vmatpush1.msra.mxu0 0.0
    %976 = vmatprep.subr.mxu0 0.0
    %977 = vmatpush1.msra.mxu0 0.0
    %978 = vmatprep.subr.mxu0 0.0
    %979 = vmatpush1.msra.mxu0 0.0
    %980 = vmatprep.subr.mxu0 0.0
    %981 = vmatpush1.msra.mxu0 0.0
    %982 = vmatprep.subr.mxu0 0.0
    %983 = vmatpush1.msra.mxu0 0.0
    %984 = vmatprep.subr.mxu0 0.0
    %985 = vmatpush1.msra.mxu0 0.0
    %986 = vmatprep.subr.mxu0 0.0
    %987 = vmatpush1.msra.mxu0 0.0
    %988 = vmatprep.subr.mxu0 0.0
    %989 = vmatpush1.msra.mxu0 0.0
    %990 = vmatprep.subr.mxu0 0.0
    %991 = vmatpush1.msra.mxu0 0.0
    %992 = vmatprep.subr.mxu0 0.0
    %993 = vmatpush1.msra.mxu0 0.0
    %994 = vmatprep.subr.mxu0 0.0
    %995 = vmatpush1.msra.mxu0 0.0
    %996 = vmatprep.mubr.f32.mxu0 0.0
    %997 = vmatmul.mubr.f32.gmra.mrb[0].mxu0 %v930
    %v998 = vpop.f32.mrb[0].mxu0
    %v999 = vadd.f32 0.0, %v998
    %v1000 = vpop.f32.mrb[0].mxu0
    %v1001 = vadd.f32 0.0, %v1000
    %1002 = vdwg.mxu0
    %v1003 = vadd.f32 %v925, %v999
    %v1004 = vxor.u32 %v1003, 2147483648
    %v1005 = vmul.f32 %v1004, 1.442695
    %v1006 = vpow.pop %v1005
    %v1007 = vadd.f32 %v1006, 1.0
    %v1008 = vrcp.pop %v1007
    %v1009 = vmul.f32 1.0, %v1008
    %v1010 = vadd.f32 %v999, %v680
    %1012 = vrot.lane.b32.xlu0 %v1010, 64
    %v1013 = vpop.permute.xlu0 %1012
    %v1015 = vmul.f32 %v1009, %v1013
    %1017 = vrot.lane.b32.xlu0 %v1015, 64
    %v1018 = vpop.permute.xlu0 %1017
    %v1020 = vadd.f32 %v925, %v1018
    %v1021 = vtanh.pop %v1020
    %v1022 = vsub.f32 1.0, %v1009
    %1024 = vrot.lane.b32.xlu0 %v1021, 96
    %v1025 = vpop.permute.xlu0 %1024
    %v1027 = vmul.f32 %v1022, %v1025
    %v1028 = vmul.f32 %v1009, %v869
    %v1029 = vadd.f32 %v1027, %v1028
    %1031 = vrot.lane.b32.xlu0 %v999, 32
    %v1032 = vpop.permute.xlu0 %1031
    %v1034 = vadd.f32 %v927, %v1032
    %v1035 = vxor.u32 %v1034, 2147483648
    %v1036 = vmul.f32 %v1035, 1.442695
    %v1037 = vpow.pop %v1036
    %v1038 = vadd.f32 %v1037, 1.0
    %v1039 = vrcp.pop %v1038
    %v1040 = vmul.f32 1.0, %v1039
    %1042 = vrot.lane.b32.xlu0 %v1001, 32
    %v1043 = vpop.permute.xlu0 %1042
    %v1045 = vadd.f32 %v927, %v1043
    %v1046 = vxor.u32 %v1045, 2147483648
    %v1047 = vmul.f32 %v1046, 1.442695
    %v1048 = vpow.pop %v1047
    %v1049 = vadd.f32 %v1048, 1.0
    %v1050 = vrcp.pop %v1049
    %v1051 = vmul.f32 1.0, %v1050
    %v1052 = vadd.f32 %v1001, %v730
    %1054 = vrot.lane.b32.xlu0 %v1052, 96
    %v1055 = vpop.permute.xlu0 %1054
    %v1057 = vmul.f32 %v1040, %v1055
    %1059 = vrot.lane.b32.xlu0 %v1057, 64
    %v1060 = vpop.permute.xlu0 %1059
    %v1062 = vadd.f32 %v927, %v1060
    %v1063 = vtanh.pop %v1062
    %v1064 = vsub.f32 1.0, %v1051
    %1066 = vrot.lane.b32.xlu0 %v1063, 96
    %v1067 = vpop.permute.xlu0 %1066
    %v1069 = vmul.f32 %v1064, %v1067
    %v1070 = vmul.f32 %v1051, %v911
    %v1071 = vadd.f32 %v1069, %v1070
    %1073 = vrot.lane.b32.xlu0 %v1029, 96
    %v1074 = vpop.permute.xlu0 %1073
    %s1076 = scalar_lea.vmem [#allocation4], 4
    %1077 = vst.msk [vmem:[%s1076] sm:$0x3] %vm756, %v1074
    %1079 = vrot.lane.b32.xlu0 %v1071, 96
    %v1080 = vpop.permute.xlu0 %1079
    %s1082 = scalar_lea.vmem [#allocation5], 10
    %1083 = vst.msk [vmem:[%s1082] sm:$0x3] %vm756, %v1080
    %s1084 = scalar_lea.vmem [#allocation2], 6
    %v1085 = vld [vmem:[%s1084] sm:$0x3]
    %s1086 = scalar_lea.vmem [#allocation3], 8
    %v1087 = vld [vmem:[%s1086] sm:$0x3]
    %v1088 = vsel %vm398, %v1074, %v1071
    %v1090 = vsel %vm592, %v1088, 0
    %1092 = vmatprep.subr.mxu0 %v572
    %1093 = vmatpush1.msra.mxu0 %v571
    %1094 = vmatprep.subr.mxu0 %v574
    %1095 = vmatpush1.msra.mxu0 %v573
    %1096 = vmatprep.subr.mxu0 %v576
    %1097 = vmatpush1.msra.mxu0 %v575
    %1098 = vmatprep.subr.mxu0 %v578
    %1099 = vmatpush1.msra.mxu0 %v577
    %1100 = vmatprep.subr.mxu0 %v580
    %1101 = vmatpush1.msra.mxu0 %v579
    %1102 = vmatprep.subr.mxu0 %v582
    %1103 = vmatpush1.msra.mxu0 %v581
    %1104 = vmatprep.subr.mxu0 %v584
    %1105 = vmatpush1.msra.mxu0 %v583
    %1106 = vmatprep.subr.mxu0 %v586
    %1107 = vmatpush1.msra.mxu0 %v585
    %1108 = vmatprep.subr.mxu0 0.0
    %1109 = vmatpush1.msra.mxu0 0.0
    %1110 = vmatprep.subr.mxu0 0.0
    %1111 = vmatpush1.msra.mxu0 0.0
    %1112 = vmatprep.subr.mxu0 0.0
    %1113 = vmatpush1.msra.mxu0 0.0
    %1114 = vmatprep.subr.mxu0 0.0
    %1115 = vmatpush1.msra.mxu0 0.0
    %1116 = vmatprep.subr.mxu0 0.0
    %1117 = vmatpush1.msra.mxu0 0.0
    %1118 = vmatprep.subr.mxu0 0.0
    %1119 = vmatpush1.msra.mxu0 0.0
    %1120 = vmatprep.subr.mxu0 0.0
    %1121 = vmatpush1.msra.mxu0 0.0
    %1122 = vmatprep.subr.mxu0 0.0
    %1123 = vmatpush1.msra.mxu0 0.0
    %1124 = vmatprep.subr.mxu0 0.0
    %1125 = vmatpush1.msra.mxu0 0.0
    %1126 = vmatprep.subr.mxu0 0.0
    %1127 = vmatpush1.msra.mxu0 0.0
    %1128 = vmatprep.subr.mxu0 0.0
    %1129 = vmatpush1.msra.mxu0 0.0
    %1130 = vmatprep.subr.mxu0 0.0
    %1131 = vmatpush1.msra.mxu0 0.0
    %1132 = vmatprep.subr.mxu0 0.0
    %1133 = vmatpush1.msra.mxu0 0.0
    %1134 = vmatprep.subr.mxu0 0.0
    %1135 = vmatpush1.msra.mxu0 0.0
    %1136 = vmatprep.subr.mxu0 0.0
    %1137 = vmatpush1.msra.mxu0 0.0
    %1138 = vmatprep.subr.mxu0 0.0
    %1139 = vmatpush1.msra.mxu0 0.0
    %1140 = vmatprep.subr.mxu0 0.0
    %1141 = vmatpush1.msra.mxu0 0.0
    %1142 = vmatprep.subr.mxu0 0.0
    %1143 = vmatpush1.msra.mxu0 0.0
    %1144 = vmatprep.subr.mxu0 0.0
    %1145 = vmatpush1.msra.mxu0 0.0
    %1146 = vmatprep.subr.mxu0 0.0
    %1147 = vmatpush1.msra.mxu0 0.0
    %1148 = vmatprep.subr.mxu0 0.0
    %1149 = vmatpush1.msra.mxu0 0.0
    %1150 = vmatprep.subr.mxu0 0.0
    %1151 = vmatpush1.msra.mxu0 0.0
    %1152 = vmatprep.subr.mxu0 0.0
    %1153 = vmatpush1.msra.mxu0 0.0
    %1154 = vmatprep.subr.mxu0 0.0
    %1155 = vmatpush1.msra.mxu0 0.0
    %1156 = vmatprep.mubr.f32.mxu0 0.0
    %1157 = vmatmul.mubr.f32.gmra.mrb[0].mxu0 %v1090
    %v1158 = vpop.f32.mrb[0].mxu0
    %v1159 = vadd.f32 0.0, %v1158
    %v1160 = vpop.f32.mrb[0].mxu0
    %v1161 = vadd.f32 0.0, %v1160
    %1162 = vdwg.mxu0
    %v1163 = vadd.f32 %v1085, %v1159
    %v1164 = vxor.u32 %v1163, 2147483648
    %v1165 = vmul.f32 %v1164, 1.442695
    %v1166 = vpow.pop %v1165
    %v1167 = vadd.f32 %v1166, 1.0
    %v1168 = vrcp.pop %v1167
    %v1169 = vmul.f32 1.0, %v1168
    %v1170 = vadd.f32 %v1159, %v680
    %1172 = vrot.lane.b32.xlu0 %v1170, 64
    %v1173 = vpop.permute.xlu0 %1172
    %v1175 = vmul.f32 %v1169, %v1173
    %1177 = vrot.lane.b32.xlu0 %v1175, 64
    %v1178 = vpop.permute.xlu0 %1177
    %v1180 = vadd.f32 %v1085, %v1178
    %v1181 = vtanh.pop %v1180
    %v1182 = vsub.f32 1.0, %v1169
    %1184 = vrot.lane.b32.xlu0 %v1181, 96
    %v1185 = vpop.permute.xlu0 %1184
    %v1187 = vmul.f32 %v1182, %v1185
    %v1188 = vmul.f32 %v1169, %v1029
    %v1189 = vadd.f32 %v1187, %v1188
    %1191 = vrot.lane.b32.xlu0 %v1159, 32
    %v1192 = vpop.permute.xlu0 %1191
    %v1194 = vadd.f32 %v1087, %v1192
    %v1195 = vxor.u32 %v1194, 2147483648
    %v1196 = vmul.f32 %v1195, 1.442695
    %v1197 = vpow.pop %v1196
    %v1198 = vadd.f32 %v1197, 1.0
    %v1199 = vrcp.pop %v1198
    %v1200 = vmul.f32 1.0, %v1199
    %1202 = vrot.lane.b32.xlu0 %v1161, 32
    %v1203 = vpop.permute.xlu0 %1202
    %v1205 = vadd.f32 %v1087, %v1203
    %v1206 = vxor.u32 %v1205, 2147483648
    %v1207 = vmul.f32 %v1206, 1.442695
    %v1208 = vpow.pop %v1207
    %v1209 = vadd.f32 %v1208, 1.0
    %v1210 = vrcp.pop %v1209
    %v1211 = vmul.f32 1.0, %v1210
    %v1212 = vadd.f32 %v1161, %v730
    %1214 = vrot.lane.b32.xlu0 %v1212, 96
    %v1215 = vpop.permute.xlu0 %1214
    %v1217 = vmul.f32 %v1200, %v1215
    %1219 = vrot.lane.b32.xlu0 %v1217, 64
    %v1220 = vpop.permute.xlu0 %1219
    %v1222 = vadd.f32 %v1087, %v1220
    %v1223 = vtanh.pop %v1222
    %v1224 = vsub.f32 1.0, %v1211
    %1226 = vrot.lane.b32.xlu0 %v1223, 96
    %v1227 = vpop.permute.xlu0 %1226
    %v1229 = vmul.f32 %v1224, %v1227
    %v1230 = vmul.f32 %v1211, %v1071
    %v1231 = vadd.f32 %v1229, %v1230
    %1233 = vrot.lane.b32.xlu0 %v1189, 96
    %v1234 = vpop.permute.xlu0 %1233
    %s1236 = scalar_lea.vmem [#allocation4], 6
    %1237 = vst.msk [vmem:[%s1236] sm:$0x3] %vm756, %v1234
    %1239 = vrot.lane.b32.xlu0 %v1231, 96
    %v1240 = vpop.permute.xlu0 %1239
    %s1242 = scalar_lea.vmem [#allocation5], 8
    %1243 = vst.msk [vmem:[%s1242] sm:$0x3] %vm756, %v1240
    %s1244 = scalar_lea.vmem [#allocation2], 8
    %v1245 = vld [vmem:[%s1244] sm:$0x3]
    %s1246 = scalar_lea.vmem [#allocation3], 6
    %v1247 = vld [vmem:[%s1246] sm:$0x3]
    %v1248 = vsel %vm398, %v1234, %v1231
    %v1250 = vsel %vm592, %v1248, 0
    %1252 = vmatprep.subr.mxu0 %v572
    %1253 = vmatpush1.msra.mxu0 %v571
    %1254 = vmatprep.subr.mxu0 %v574
    %1255 = vmatpush1.msra.mxu0 %v573
    %1256 = vmatprep.subr.mxu0 %v576
    %1257 = vmatpush1.msra.mxu0 %v575
    %1258 = vmatprep.subr.mxu0 %v578
    %1259 = vmatpush1.msra.mxu0 %v577
    %1260 = vmatprep.subr.mxu0 %v580
    %1261 = vmatpush1.msra.mxu0 %v579
    %1262 = vmatprep.subr.mxu0 %v582
    %1263 = vmatpush1.msra.mxu0 %v581
    %1264 = vmatprep.subr.mxu0 %v584
    %1265 = vmatpush1.msra.mxu0 %v583
    %1266 = vmatprep.subr.mxu0 %v586
    %1267 = vmatpush1.msra.mxu0 %v585
    %1268 = vmatprep.subr.mxu0 0.0
    %1269 = vmatpush1.msra.mxu0 0.0
    %1270 = vmatprep.subr.mxu0 0.0
    %1271 = vmatpush1.msra.mxu0 0.0
    %1272 = vmatprep.subr.mxu0 0.0
    %1273 = vmatpush1.msra.mxu0 0.0
    %1274 = vmatprep.subr.mxu0 0.0
    %1275 = vmatpush1.msra.mxu0 0.0
    %1276 = vmatprep.subr.mxu0 0.0
    %1277 = vmatpush1.msra.mxu0 0.0
    %1278 = vmatprep.subr.mxu0 0.0
    %1279 = vmatpush1.msra.mxu0 0.0
    %1280 = vmatprep.subr.mxu0 0.0
    %1281 = vmatpush1.msra.mxu0 0.0
    %1282 = vmatprep.subr.mxu0 0.0
    %1283 = vmatpush1.msra.mxu0 0.0
    %1284 = vmatprep.subr.mxu0 0.0
    %1285 = vmatpush1.msra.mxu0 0.0
    %1286 = vmatprep.subr.mxu0 0.0
    %1287 = vmatpush1.msra.mxu0 0.0
    %1288 = vmatprep.subr.mxu0 0.0
    %1289 = vmatpush1.msra.mxu0 0.0
    %1290 = vmatprep.subr.mxu0 0.0
    %1291 = vmatpush1.msra.mxu0 0.0
    %1292 = vmatprep.subr.mxu0 0.0
    %1293 = vmatpush1.msra.mxu0 0.0
    %1294 = vmatprep.subr.mxu0 0.0
    %1295 = vmatpush1.msra.mxu0 0.0
    %1296 = vmatprep.subr.mxu0 0.0
    %1297 = vmatpush1.msra.mxu0 0.0
    %1298 = vmatprep.subr.mxu0 0.0
    %1299 = vmatpush1.msra.mxu0 0.0
    %1300 = vmatprep.subr.mxu0 0.0
    %1301 = vmatpush1.msra.mxu0 0.0
    %1302 = vmatprep.subr.mxu0 0.0
    %1303 = vmatpush1.msra.mxu0 0.0
    %1304 = vmatprep.subr.mxu0 0.0
    %1305 = vmatpush1.msra.mxu0 0.0
    %1306 = vmatprep.subr.mxu0 0.0
    %1307 = vmatpush1.msra.mxu0 0.0
    %1308 = vmatprep.subr.mxu0 0.0
    %1309 = vmatpush1.msra.mxu0 0.0
    %1310 = vmatprep.subr.mxu0 0.0
    %1311 = vmatpush1.msra.mxu0 0.0
    %1312 = vmatprep.subr.mxu0 0.0
    %1313 = vmatpush1.msra.mxu0 0.0
    %1314 = vmatprep.subr.mxu0 0.0
    %1315 = vmatpush1.msra.mxu0 0.0
    %1316 = vmatprep.mubr.f32.mxu0 0.0
    %1317 = vmatmul.mubr.f32.gmra.mrb[0].mxu0 %v1250
    %v1318 = vpop.f32.mrb[0].mxu0
    %v1319 = vadd.f32 0.0, %v1318
    %v1320 = vpop.f32.mrb[0].mxu0
    %v1321 = vadd.f32 0.0, %v1320
    %1322 = vdwg.mxu0
    %v1323 = vadd.f32 %v1245, %v1319
    %v1324 = vxor.u32 %v1323, 2147483648
    %v1325 = vmul.f32 %v1324, 1.442695
    %v1326 = vpow.pop %v1325
    %v1327 = vadd.f32 %v1326, 1.0
    %v1328 = vrcp.pop %v1327
    %v1329 = vmul.f32 1.0, %v1328
    %v1330 = vadd.f32 %v1319, %v680
    %1332 = vrot.lane.b32.xlu0 %v1330, 64
    %v1333 = vpop.permute.xlu0 %1332
    %v1335 = vmul.f32 %v1329, %v1333
    %1337 = vrot.lane.b32.xlu0 %v1335, 64
    %v1338 = vpop.permute.xlu0 %1337
    %v1340 = vadd.f32 %v1245, %v1338
    %v1341 = vtanh.pop %v1340
    %v1342 = vsub.f32 1.0, %v1329
    %1344 = vrot.lane.b32.xlu0 %v1341, 96
    %v1345 = vpop.permute.xlu0 %1344
    %v1347 = vmul.f32 %v1342, %v1345
    %v1348 = vmul.f32 %v1329, %v1189
    %v1349 = vadd.f32 %v1347, %v1348
    %1351 = vrot.lane.b32.xlu0 %v1319, 32
    %v1352 = vpop.permute.xlu0 %1351
    %v1354 = vadd.f32 %v1247, %v1352
    %v1355 = vxor.u32 %v1354, 2147483648
    %v1356 = vmul.f32 %v1355, 1.442695
    %v1357 = vpow.pop %v1356
    %v1358 = vadd.f32 %v1357, 1.0
    %v1359 = vrcp.pop %v1358
    %v1360 = vmul.f32 1.0, %v1359
    %1362 = vrot.lane.b32.xlu0 %v1321, 32
    %v1363 = vpop.permute.xlu0 %1362
    %v1365 = vadd.f32 %v1247, %v1363
    %v1366 = vxor.u32 %v1365, 2147483648
    %v1367 = vmul.f32 %v1366, 1.442695
    %v1368 = vpow.pop %v1367
    %v1369 = vadd.f32 %v1368, 1.0
    %v1370 = vrcp.pop %v1369
    %v1371 = vmul.f32 1.0, %v1370
    %v1372 = vadd.f32 %v1321, %v730
    %1374 = vrot.lane.b32.xlu0 %v1372, 96
    %v1375 = vpop.permute.xlu0 %1374
    %v1377 = vmul.f32 %v1360, %v1375
    %1379 = vrot.lane.b32.xlu0 %v1377, 64
    %v1380 = vpop.permute.xlu0 %1379
    %v1382 = vadd.f32 %v1247, %v1380
    %v1383 = vtanh.pop %v1382
    %v1384 = vsub.f32 1.0, %v1371
    %1386 = vrot.lane.b32.xlu0 %v1383, 96
    %v1387 = vpop.permute.xlu0 %1386
    %v1389 = vmul.f32 %v1384, %v1387
    %v1390 = vmul.f32 %v1371, %v1231
    %v1391 = vadd.f32 %v1389, %v1390
    %1393 = vrot.lane.b32.xlu0 %v1349, 96
    %v1394 = vpop.permute.xlu0 %1393
    %s1396 = scalar_lea.vmem [#allocation4], 8
    %1397 = vst.msk [vmem:[%s1396] sm:$0x3] %vm756, %v1394
    %1399 = vrot.lane.b32.xlu0 %v1391, 96
    %v1400 = vpop.permute.xlu0 %1399
    %s1402 = scalar_lea.vmem [#allocation5], 6
    %1403 = vst.msk [vmem:[%s1402] sm:$0x3] %vm756, %v1400
    %s1404 = scalar_lea.vmem [#allocation2], 10
    %v1405 = vld [vmem:[%s1404] sm:$0x3]
    %s1406 = scalar_lea.vmem [#allocation3], 4
    %v1407 = vld [vmem:[%s1406] sm:$0x3]
    %v1408 = vsel %vm398, %v1394, %v1391
    %v1410 = vsel %vm592, %v1408, 0
    %1412 = vmatprep.subr.mxu0 %v572
    %1413 = vmatpush1.msra.mxu0 %v571
    %1414 = vmatprep.subr.mxu0 %v574
    %1415 = vmatpush1.msra.mxu0 %v573
    %1416 = vmatprep.subr.mxu0 %v576
    %1417 = vmatpush1.msra.mxu0 %v575
    %1418 = vmatprep.subr.mxu0 %v578
    %1419 = vmatpush1.msra.mxu0 %v577
    %1420 = vmatprep.subr.mxu0 %v580
    %1421 = vmatpush1.msra.mxu0 %v579
    %1422 = vmatprep.subr.mxu0 %v582
    %1423 = vmatpush1.msra.mxu0 %v581
    %1424 = vmatprep.subr.mxu0 %v584
    %1425 = vmatpush1.msra.mxu0 %v583
    %1426 = vmatprep.subr.mxu0 %v586
    %1427 = vmatpush1.msra.mxu0 %v585
    %1428 = vmatprep.subr.mxu0 0.0
    %1429 = vmatpush1.msra.mxu0 0.0
    %1430 = vmatprep.subr.mxu0 0.0
    %1431 = vmatpush1.msra.mxu0 0.0
    %1432 = vmatprep.subr.mxu0 0.0
    %1433 = vmatpush1.msra.mxu0 0.0
    %1434 = vmatprep.subr.mxu0 0.0
    %1435 = vmatpush1.msra.mxu0 0.0
    %1436 = vmatprep.subr.mxu0 0.0
    %1437 = vmatpush1.msra.mxu0 0.0
    %1438 = vmatprep.subr.mxu0 0.0
    %1439 = vmatpush1.msra.mxu0 0.0
    %1440 = vmatprep.subr.mxu0 0.0
    %1441 = vmatpush1.msra.mxu0 0.0
    %1442 = vmatprep.subr.mxu0 0.0
    %1443 = vmatpush1.msra.mxu0 0.0
    %1444 = vmatprep.subr.mxu0 0.0
    %1445 = vmatpush1.msra.mxu0 0.0
    %1446 = vmatprep.subr.mxu0 0.0
    %1447 = vmatpush1.msra.mxu0 0.0
    %1448 = vmatprep.subr.mxu0 0.0
    %1449 = vmatpush1.msra.mxu0 0.0
    %1450 = vmatprep.subr.mxu0 0.0
    %1451 = vmatpush1.msra.mxu0 0.0
    %1452 = vmatprep.subr.mxu0 0.0
    %1453 = vmatpush1.msra.mxu0 0.0
    %1454 = vmatprep.subr.mxu0 0.0
    %1455 = vmatpush1.msra.mxu0 0.0
    %1456 = vmatprep.subr.mxu0 0.0
    %1457 = vmatpush1.msra.mxu0 0.0
    %1458 = vmatprep.subr.mxu0 0.0
    %1459 = vmatpush1.msra.mxu0 0.0
    %1460 = vmatprep.subr.mxu0 0.0
    %1461 = vmatpush1.msra.mxu0 0.0
    %1462 = vmatprep.subr.mxu0 0.0
    %1463 = vmatpush1.msra.mxu0 0.0
    %1464 = vmatprep.subr.mxu0 0.0
    %1465 = vmatpush1.msra.mxu0 0.0
    %1466 = vmatprep.subr.mxu0 0.0
    %1467 = vmatpush1.msra.mxu0 0.0
    %1468 = vmatprep.subr.mxu0 0.0
    %1469 = vmatpush1.msra.mxu0 0.0
    %1470 = vmatprep.subr.mxu0 0.0
    %1471 = vmatpush1.msra.mxu0 0.0
    %1472 = vmatprep.subr.mxu0 0.0
    %1473 = vmatpush1.msra.mxu0 0.0
    %1474 = vmatprep.subr.mxu0 0.0
    %1475 = vmatpush1.msra.mxu0 0.0
    %1476 = vmatprep.mubr.f32.mxu0 0.0
    %1477 = vmatmul.mubr.f32.gmra.mrb[0].mxu0 %v1410
    %v1478 = vpop.f32.mrb[0].mxu0
    %v1479 = vadd.f32 0.0, %v1478
    %v1480 = vpop.f32.mrb[0].mxu0
    %v1481 = vadd.f32 0.0, %v1480
    %1482 = vdwg.mxu0
    %v1483 = vadd.f32 %v1405, %v1479
    %v1484 = vxor.u32 %v1483, 2147483648
    %v1485 = vmul.f32 %v1484, 1.442695
    %v1486 = vpow.pop %v1485
    %v1487 = vadd.f32 %v1486, 1.0
    %v1488 = vrcp.pop %v1487
    %v1489 = vmul.f32 1.0, %v1488
    %v1490 = vadd.f32 %v1479, %v680
    %1492 = vrot.lane.b32.xlu0 %v1490, 64
    %v1493 = vpop.permute.xlu0 %1492
    %v1495 = vmul.f32 %v1489, %v1493
    %1497 = vrot.lane.b32.xlu0 %v1495, 64
    %v1498 = vpop.permute.xlu0 %1497
    %v1500 = vadd.f32 %v1405, %v1498
    %v1501 = vtanh.pop %v1500
    %v1502 = vsub.f32 1.0, %v1489
    %1504 = vrot.lane.b32.xlu0 %v1501, 96
    %v1505 = vpop.permute.xlu0 %1504
    %v1507 = vmul.f32 %v1502, %v1505
    %v1508 = vmul.f32 %v1489, %v1349
    %v1509 = vadd.f32 %v1507, %v1508
    %1511 = vrot.lane.b32.xlu0 %v1479, 32
    %v1512 = vpop.permute.xlu0 %1511
    %v1514 = vadd.f32 %v1407, %v1512
    %v1515 = vxor.u32 %v1514, 2147483648
    %v1516 = vmul.f32 %v1515, 1.442695
    %v1517 = vpow.pop %v1516
    %v1518 = vadd.f32 %v1517, 1.0
    %v1519 = vrcp.pop %v1518
    %v1520 = vmul.f32 1.0, %v1519
    %1522 = vrot.lane.b32.xlu0 %v1481, 32
    %v1523 = vpop.permute.xlu0 %1522
    %v1525 = vadd.f32 %v1407, %v1523
    %v1526 = vxor.u32 %v1525, 2147483648
    %v1527 = vmul.f32 %v1526, 1.442695
    %v1528 = vpow.pop %v1527
    %v1529 = vadd.f32 %v1528, 1.0
    %v1530 = vrcp.pop %v1529
    %v1531 = vmul.f32 1.0, %v1530
    %v1532 = vadd.f32 %v1481, %v730
    %1534 = vrot.lane.b32.xlu0 %v1532, 96
    %v1535 = vpop.permute.xlu0 %1534
    %v1537 = vmul.f32 %v1520, %v1535
    %1539 = vrot.lane.b32.xlu0 %v1537, 64
    %v1540 = vpop.permute.xlu0 %1539
    %v1542 = vadd.f32 %v1407, %v1540
    %v1543 = vtanh.pop %v1542
    %v1544 = vsub.f32 1.0, %v1531
    %1546 = vrot.lane.b32.xlu0 %v1543, 96
    %v1547 = vpop.permute.xlu0 %1546
    %v1549 = vmul.f32 %v1544, %v1547
    %v1550 = vmul.f32 %v1531, %v1391
    %v1551 = vadd.f32 %v1549, %v1550
    %1553 = vrot.lane.b32.xlu0 %v1509, 96
    %v1554 = vpop.permute.xlu0 %1553
    %s1556 = scalar_lea.vmem [#allocation4], 10
    %1557 = vst.msk [vmem:[%s1556] sm:$0x3] %vm756, %v1554
    %1559 = vrot.lane.b32.xlu0 %v1551, 96
    %v1560 = vpop.permute.xlu0 %1559
    %s1562 = scalar_lea.vmem [#allocation5], 4
    %1563 = vst.msk [vmem:[%s1562] sm:$0x3] %vm756, %v1560
    %s1564 = scalar_lea.vmem [#allocation2], 12
    %v1565 = vld [vmem:[%s1564] sm:$0x3]
    %s1566 = scalar_lea.vmem [#allocation3], 2
    %v1567 = vld [vmem:[%s1566] sm:$0x3]
    %v1568 = vsel %vm398, %v1554, %v1551
    %v1570 = vsel %vm592, %v1568, 0
    %1572 = vmatprep.subr.mxu0 %v572
    %1573 = vmatpush1.msra.mxu0 %v571
    %1574 = vmatprep.subr.mxu0 %v574
    %1575 = vmatpush1.msra.mxu0 %v573
    %1576 = vmatprep.subr.mxu0 %v576
    %1577 = vmatpush1.msra.mxu0 %v575
    %1578 = vmatprep.subr.mxu0 %v578
    %1579 = vmatpush1.msra.mxu0 %v577
    %1580 = vmatprep.subr.mxu0 %v580
    %1581 = vmatpush1.msra.mxu0 %v579
    %1582 = vmatprep.subr.mxu0 %v582
    %1583 = vmatpush1.msra.mxu0 %v581
    %1584 = vmatprep.subr.mxu0 %v584
    %1585 = vmatpush1.msra.mxu0 %v583
    %1586 = vmatprep.subr.mxu0 %v586
    %1587 = vmatpush1.msra.mxu0 %v585
    %1588 = vmatprep.subr.mxu0 0.0
    %1589 = vmatpush1.msra.mxu0 0.0
    %1590 = vmatprep.subr.mxu0 0.0
    %1591 = vmatpush1.msra.mxu0 0.0
    %1592 = vmatprep.subr.mxu0 0.0
    %1593 = vmatpush1.msra.mxu0 0.0
    %1594 = vmatprep.subr.mxu0 0.0
    %1595 = vmatpush1.msra.mxu0 0.0
    %1596 = vmatprep.subr.mxu0 0.0
    %1597 = vmatpush1.msra.mxu0 0.0
    %1598 = vmatprep.subr.mxu0 0.0
    %1599 = vmatpush1.msra.mxu0 0.0
    %1600 = vmatprep.subr.mxu0 0.0
    %1601 = vmatpush1.msra.mxu0 0.0
    %1602 = vmatprep.subr.mxu0 0.0
    %1603 = vmatpush1.msra.mxu0 0.0
    %1604 = vmatprep.subr.mxu0 0.0
    %1605 = vmatpush1.msra.mxu0 0.0
    %1606 = vmatprep.subr.mxu0 0.0
    %1607 = vmatpush1.msra.mxu0 0.0
    %1608 = vmatprep.subr.mxu0 0.0
    %1609 = vmatpush1.msra.mxu0 0.0
    %1610 = vmatprep.subr.mxu0 0.0
    %1611 = vmatpush1.msra.mxu0 0.0
    %1612 = vmatprep.subr.mxu0 0.0
    %1613 = vmatpush1.msra.mxu0 0.0
    %1614 = vmatprep.subr.mxu0 0.0
    %1615 = vmatpush1.msra.mxu0 0.0
    %1616 = vmatprep.subr.mxu0 0.0
    %1617 = vmatpush1.msra.mxu0 0.0
    %1618 = vmatprep.subr.mxu0 0.0
    %1619 = vmatpush1.msra.mxu0 0.0
    %1620 = vmatprep.subr.mxu0 0.0
    %1621 = vmatpush1.msra.mxu0 0.0
    %1622 = vmatprep.subr.mxu0 0.0
    %1623 = vmatpush1.msra.mxu0 0.0
    %1624 = vmatprep.subr.mxu0 0.0
    %1625 = vmatpush1.msra.mxu0 0.0
    %1626 = vmatprep.subr.mxu0 0.0
    %1627 = vmatpush1.msra.mxu0 0.0
    %1628 = vmatprep.subr.mxu0 0.0
    %1629 = vmatpush1.msra.mxu0 0.0
    %1630 = vmatprep.subr.mxu0 0.0
    %1631 = vmatpush1.msra.mxu0 0.0
    %1632 = vmatprep.subr.mxu0 0.0
    %1633 = vmatpush1.msra.mxu0 0.0
    %1634 = vmatprep.subr.mxu0 0.0
    %1635 = vmatpush1.msra.mxu0 0.0
    %1636 = vmatprep.mubr.f32.mxu0 0.0
    %1637 = vmatmul.mubr.f32.gmra.mrb[0].mxu0 %v1570
    %v1638 = vpop.f32.mrb[0].mxu0
    %v1639 = vadd.f32 0.0, %v1638
    %v1640 = vpop.f32.mrb[0].mxu0
    %v1641 = vadd.f32 0.0, %v1640
    %1642 = vdwg.mxu0
    %v1643 = vadd.f32 %v1565, %v1639
    %v1644 = vxor.u32 %v1643, 2147483648
    %v1645 = vmul.f32 %v1644, 1.442695
    %v1646 = vpow.pop %v1645
    %v1647 = vadd.f32 %v1646, 1.0
    %v1648 = vrcp.pop %v1647
    %v1649 = vmul.f32 1.0, %v1648
    %v1650 = vadd.f32 %v1639, %v680
    %1652 = vrot.lane.b32.xlu0 %v1650, 64
    %v1653 = vpop.permute.xlu0 %1652
    %v1655 = vmul.f32 %v1649, %v1653
    %1657 = vrot.lane.b32.xlu0 %v1655, 64
    %v1658 = vpop.permute.xlu0 %1657
    %v1660 = vadd.f32 %v1565, %v1658
    %v1661 = vtanh.pop %v1660
    %v1662 = vsub.f32 1.0, %v1649
    %1664 = vrot.lane.b32.xlu0 %v1661, 96
    %v1665 = vpop.permute.xlu0 %1664
    %v1667 = vmul.f32 %v1662, %v1665
    %v1668 = vmul.f32 %v1649, %v1509
    %v1669 = vadd.f32 %v1667, %v1668
    %1671 = vrot.lane.b32.xlu0 %v1639, 32
    %v1672 = vpop.permute.xlu0 %1671
    %v1674 = vadd.f32 %v1567, %v1672
    %v1675 = vxor.u32 %v1674, 2147483648
    %v1676 = vmul.f32 %v1675, 1.442695
    %v1677 = vpow.pop %v1676
    %v1678 = vadd.f32 %v1677, 1.0
    %v1679 = vrcp.pop %v1678
    %v1680 = vmul.f32 1.0, %v1679
    %1682 = vrot.lane.b32.xlu0 %v1641, 32
    %v1683 = vpop.permute.xlu0 %1682
    %v1685 = vadd.f32 %v1567, %v1683
    %v1686 = vxor.u32 %v1685, 2147483648
    %v1687 = vmul.f32 %v1686, 1.442695
    %v1688 = vpow.pop %v1687
    %v1689 = vadd.f32 %v1688, 1.0
    %v1690 = vrcp.pop %v1689
    %v1691 = vmul.f32 1.0, %v1690
    %v1692 = vadd.f32 %v1641, %v730
    %1694 = vrot.lane.b32.xlu0 %v1692, 96
    %v1695 = vpop.permute.xlu0 %1694
    %v1697 = vmul.f32 %v1680, %v1695
    %1699 = vrot.lane.b32.xlu0 %v1697, 64
    %v1700 = vpop.permute.xlu0 %1699
    %v1702 = vadd.f32 %v1567, %v1700
    %v1703 = vtanh.pop %v1702
    %v1704 = vsub.f32 1.0, %v1691
    %1706 = vrot.lane.b32.xlu0 %v1703, 96
    %v1707 = vpop.permute.xlu0 %1706
    %v1709 = vmul.f32 %v1704, %v1707
    %v1710 = vmul.f32 %v1691, %v1551
    %v1711 = vadd.f32 %v1709, %v1710
    %1713 = vrot.lane.b32.xlu0 %v1669, 96
    %v1714 = vpop.permute.xlu0 %1713
    %s1716 = scalar_lea.vmem [#allocation4], 12
    %1717 = vst.msk [vmem:[%s1716] sm:$0x3] %vm756, %v1714
    %1719 = vrot.lane.b32.xlu0 %v1711, 96
    %v1720 = vpop.permute.xlu0 %1719
    %s1722 = scalar_lea.vmem [#allocation5], 2
    %1723 = vst.msk [vmem:[%s1722] sm:$0x3] %vm756, %v1720
    %s1724 = scalar_lea.vmem [#allocation2], 14
    %v1725 = vld [vmem:[%s1724] sm:$0x3]
    %v1726 = vld [vmem:[#allocation3] sm:$0x3]
    %v1727 = vsel %vm398, %v1714, %v1711
    %v1729 = vsel %vm592, %v1727, 0
    %1731 = vmatprep.subr.mxu0 %v572
    %1732 = vmatpush1.msra.mxu0 %v571
    %1733 = vmatprep.subr.mxu0 %v574
    %1734 = vmatpush1.msra.mxu0 %v573
    %1735 = vmatprep.subr.mxu0 %v576
    %1736 = vmatpush1.msra.mxu0 %v575
    %1737 = vmatprep.subr.mxu0 %v578
    %1738 = vmatpush1.msra.mxu0 %v577
    %1739 = vmatprep.subr.mxu0 %v580
    %1740 = vmatpush1.msra.mxu0 %v579
    %1741 = vmatprep.subr.mxu0 %v582
    %1742 = vmatpush1.msra.mxu0 %v581
    %1743 = vmatprep.subr.mxu0 %v584
    %1744 = vmatpush1.msra.mxu0 %v583
    %1745 = vmatprep.subr.mxu0 %v586
    %1746 = vmatpush1.msra.mxu0 %v585
    %1747 = vmatprep.subr.mxu0 0.0
    %1748 = vmatpush1.msra.mxu0 0.0
    %1749 = vmatprep.subr.mxu0 0.0
    %1750 = vmatpush1.msra.mxu0 0.0
    %1751 = vmatprep.subr.mxu0 0.0
    %1752 = vmatpush1.msra.mxu0 0.0
    %1753 = vmatprep.subr.mxu0 0.0
    %1754 = vmatpush1.msra.mxu0 0.0
    %1755 = vmatprep.subr.mxu0 0.0
    %1756 = vmatpush1.msra.mxu0 0.0
    %1757 = vmatprep.subr.mxu0 0.0
    %1758 = vmatpush1.msra.mxu0 0.0
    %1759 = vmatprep.subr.mxu0 0.0
    %1760 = vmatpush1.msra.mxu0 0.0
    %1761 = vmatprep.subr.mxu0 0.0
    %1762 = vmatpush1.msra.mxu0 0.0
    %1763 = vmatprep.subr.mxu0 0.0
    %1764 = vmatpush1.msra.mxu0 0.0
    %1765 = vmatprep.subr.mxu0 0.0
    %1766 = vmatpush1.msra.mxu0 0.0
    %1767 = vmatprep.subr.mxu0 0.0
    %1768 = vmatpush1.msra.mxu0 0.0
    %1769 = vmatprep.subr.mxu0 0.0
    %1770 = vmatpush1.msra.mxu0 0.0
    %1771 = vmatprep.subr.mxu0 0.0
    %1772 = vmatpush1.msra.mxu0 0.0
    %1773 = vmatprep.subr.mxu0 0.0
    %1774 = vmatpush1.msra.mxu0 0.0
    %1775 = vmatprep.subr.mxu0 0.0
    %1776 = vmatpush1.msra.mxu0 0.0
    %1777 = vmatprep.subr.mxu0 0.0
    %1778 = vmatpush1.msra.mxu0 0.0
    %1779 = vmatprep.subr.mxu0 0.0
    %1780 = vmatpush1.msra.mxu0 0.0
    %1781 = vmatprep.subr.mxu0 0.0
    %1782 = vmatpush1.msra.mxu0 0.0
    %1783 = vmatprep.subr.mxu0 0.0
    %1784 = vmatpush1.msra.mxu0 0.0
    %1785 = vmatprep.subr.mxu0 0.0
    %1786 = vmatpush1.msra.mxu0 0.0
    %1787 = vmatprep.subr.mxu0 0.0
    %1788 = vmatpush1.msra.mxu0 0.0
    %1789 = vmatprep.subr.mxu0 0.0
    %1790 = vmatpush1.msra.mxu0 0.0
    %1791 = vmatprep.subr.mxu0 0.0
    %1792 = vmatpush1.msra.mxu0 0.0
    %1793 = vmatprep.subr.mxu0 0.0
    %1794 = vmatpush1.msra.mxu0 0.0
    %1795 = vmatprep.mubr.f32.mxu0 0.0
    %1796 = vmatmul.mubr.f32.gmra.mrb[0].mxu0 %v1729
    %v1797 = vpop.f32.mrb[0].mxu0
    %v1798 = vadd.f32 0.0, %v1797
    %v1799 = vpop.f32.mrb[0].mxu0
    %v1800 = vadd.f32 0.0, %v1799
    %1801 = vdwg.mxu0
    %v1802 = vadd.f32 %v1725, %v1798
    %v1803 = vxor.u32 %v1802, 2147483648
    %v1804 = vmul.f32 %v1803, 1.442695
    %v1805 = vpow.pop %v1804
    %v1806 = vadd.f32 %v1805, 1.0
    %v1807 = vrcp.pop %v1806
    %v1808 = vmul.f32 1.0, %v1807
    %v1809 = vadd.f32 %v1798, %v680
    %1811 = vrot.lane.b32.xlu0 %v1809, 64
    %v1812 = vpop.permute.xlu0 %1811
    %v1814 = vmul.f32 %v1808, %v1812
    %1816 = vrot.lane.b32.xlu0 %v1814, 64
    %v1817 = vpop.permute.xlu0 %1816
    %v1819 = vadd.f32 %v1725, %v1817
    %v1820 = vtanh.pop %v1819
    %v1821 = vsub.f32 1.0, %v1808
    %1823 = vrot.lane.b32.xlu0 %v1820, 96
    %v1824 = vpop.permute.xlu0 %1823
    %v1826 = vmul.f32 %v1821, %v1824
    %v1827 = vmul.f32 %v1808, %v1669
    %v1828 = vadd.f32 %v1826, %v1827
    %1830 = vrot.lane.b32.xlu0 %v1798, 32
    %v1831 = vpop.permute.xlu0 %1830
    %v1833 = vadd.f32 %v1726, %v1831
    %v1834 = vxor.u32 %v1833, 2147483648
    %v1835 = vmul.f32 %v1834, 1.442695
    %v1836 = vpow.pop %v1835
    %v1837 = vadd.f32 %v1836, 1.0
    %v1838 = vrcp.pop %v1837
    %v1839 = vmul.f32 1.0, %v1838
    %1841 = vrot.lane.b32.xlu0 %v1800, 32
    %v1842 = vpop.permute.xlu0 %1841
    %v1844 = vadd.f32 %v1726, %v1842
    %v1845 = vxor.u32 %v1844, 2147483648
    %v1846 = vmul.f32 %v1845, 1.442695
    %v1847 = vpow.pop %v1846
    %v1848 = vadd.f32 %v1847, 1.0
    %v1849 = vrcp.pop %v1848
    %v1850 = vmul.f32 1.0, %v1849
    %v1851 = vadd.f32 %v1800, %v730
    %1853 = vrot.lane.b32.xlu0 %v1851, 96
    %v1854 = vpop.permute.xlu0 %1853
    %v1856 = vmul.f32 %v1839, %v1854
    %1858 = vrot.lane.b32.xlu0 %v1856, 64
    %v1859 = vpop.permute.xlu0 %1858
    %v1861 = vadd.f32 %v1726, %v1859
    %v1862 = vtanh.pop %v1861
    %v1863 = vsub.f32 1.0, %v1850
    %1865 = vrot.lane.b32.xlu0 %v1862, 96
    %v1866 = vpop.permute.xlu0 %1865
    %v1868 = vmul.f32 %v1863, %v1866
    %v1869 = vmul.f32 %v1850, %v1711
    %v1870 = vadd.f32 %v1868, %v1869
    %1872 = vrot.lane.b32.xlu0 %v1828, 96
    %v1873 = vpop.permute.xlu0 %1872
    %s1875 = scalar_lea.vmem [#allocation4], 14
    %1876 = vst.msk [vmem:[%s1875] sm:$0x3] %vm756, %v1873
    %1878 = vrot.lane.b32.xlu0 %v1870, 96
    %v1879 = vpop.permute.xlu0 %1878
    %1881 = vst.msk [vmem:[#allocation5] sm:$0x3] %vm756, %v1879
    %v1882 = vld [vmem:[#allocation4] sm:$0xff]
    %v1883 = vld [vmem:[#allocation4 + $0x8] sm:$0xff]
    %v1884 = vld [vmem:[#allocation5] sm:$0xff]
    %v1885 = vld [vmem:[#allocation5 + $0x8] sm:$0xff]
    %v1886 = vld [vmem:[#allocation20] sm:$0xff]
    %v1887 = vld [vmem:[#allocation20 + $0x8] sm:$0xff]
    %v1888 = vld [vmem:[#allocation20 + $0x10] sm:$0xff]
    %v1889 = vld [vmem:[#allocation20 + $0x18] sm:$0xff]
    %v1890 = vld [vmem:[#allocation22] sm:$0xff]
    %v1891 = vld [vmem:[#allocation22 + $0x8] sm:$0xff]
    %v1892 = vld [vmem:[#allocation22 + $0x10] sm:$0xff]
    %v1893 = vld [vmem:[#allocation22 + $0x18] sm:$0xff]
    %v1895 = vsel %vm398, %v1884, 0
    %v1898 = vsel %vm398, %v1885, 0
    %1900 = vmatprep.subr.mxu0 0.0
    %1901 = vmatpush1.msra.mxu0 %v1890
    %1902 = vmatprep.subr.mxu0 0.0
    %1903 = vmatpush1.msra.mxu0 %v1891
    %1904 = vmatprep.subr.mxu0 0.0
    %1905 = vmatpush1.msra.mxu0 %v1892
    %1906 = vmatprep.subr.mxu0 0.0
    %1907 = vmatpush1.msra.mxu0 %v1893
    %1908 = vmatprep.subr.mxu0 0.0
    %1909 = vmatpush1.msra.mxu0 0.0
    %1910 = vmatprep.subr.mxu0 0.0
    %1911 = vmatpush1.msra.mxu0 0.0
    %1912 = vmatprep.subr.mxu0 0.0
    %1913 = vmatpush1.msra.mxu0 0.0
    %1914 = vmatprep.subr.mxu0 0.0
    %1915 = vmatpush1.msra.mxu0 0.0
    %1916 = vmatprep.subr.mxu0 0.0
    %1917 = vmatpush1.msra.mxu0 0.0
    %1918 = vmatprep.subr.mxu0 0.0
    %1919 = vmatpush1.msra.mxu0 0.0
    %1920 = vmatprep.subr.mxu0 0.0
    %1921 = vmatpush1.msra.mxu0 0.0
    %1922 = vmatprep.subr.mxu0 0.0
    %1923 = vmatpush1.msra.mxu0 0.0
    %1924 = vmatprep.subr.mxu0 0.0
    %1925 = vmatpush1.msra.mxu0 0.0
    %1926 = vmatprep.subr.mxu0 0.0
    %1927 = vmatpush1.msra.mxu0 0.0
    %1928 = vmatprep.subr.mxu0 0.0
    %1929 = vmatpush1.msra.mxu0 0.0
    %1930 = vmatprep.subr.mxu0 0.0
    %1931 = vmatpush1.msra.mxu0 0.0
    %1932 = vmatprep.subr.mxu0 0.0
    %1933 = vmatpush1.msra.mxu0 0.0
    %1934 = vmatprep.subr.mxu0 0.0
    %1935 = vmatpush1.msra.mxu0 0.0
    %1936 = vmatprep.subr.mxu0 0.0
    %1937 = vmatpush1.msra.mxu0 0.0
    %1938 = vmatprep.subr.mxu0 0.0
    %1939 = vmatpush1.msra.mxu0 0.0
    %1940 = vmatprep.subr.mxu0 0.0
    %1941 = vmatpush1.msra.mxu0 0.0
    %1942 = vmatprep.subr.mxu0 0.0
    %1943 = vmatpush1.msra.mxu0 0.0
    %1944 = vmatprep.subr.mxu0 0.0
    %1945 = vmatpush1.msra.mxu0 0.0
    %1946 = vmatprep.subr.mxu0 0.0
    %1947 = vmatpush1.msra.mxu0 0.0
    %1948 = vmatprep.subr.mxu0 0.0
    %1949 = vmatpush1.msra.mxu0 0.0
    %1950 = vmatprep.subr.mxu0 0.0
    %1951 = vmatpush1.msra.mxu0 0.0
    %1952 = vmatprep.subr.mxu0 0.0
    %1953 = vmatpush1.msra.mxu0 0.0
    %1954 = vmatprep.subr.mxu0 0.0
    %1955 = vmatpush1.msra.mxu0 0.0
    %1956 = vmatprep.subr.mxu0 0.0
    %1957 = vmatpush1.msra.mxu0 0.0
    %1958 = vmatprep.subr.mxu0 0.0
    %1959 = vmatpush1.msra.mxu0 0.0
    %1960 = vmatprep.subr.mxu0 0.0
    %1961 = vmatpush1.msra.mxu0 0.0
    %1962 = vmatprep.subr.mxu0 0.0
    %1963 = vmatpush1.msra.mxu0 0.0
    %1964 = vmatprep.mubr.f32.mxu0 0.0
    %1965 = vmatmul.mubr.f32.gmra.mrb[0].mxu0 %v1895
    %v1966 = vpop.f32.mrb[0].mxu0
    %v1967 = vadd.f32 0.0, %v1966
    %v1968 = vpop.f32.mrb[0].mxu0
    %1969 = vmatprep.mubr.f32.mxu0 0.0
    %1970 = vmatmul.mubr.f32.gmra.mrb[0].mxu0 %v1898
    %v1971 = vpop.f32.mrb[0].mxu0
    %v1972 = vadd.f32 0.0, %v1971
    %v1973 = vpop.f32.mrb[0].mxu0
    %1974 = vdwg.mxu0
    %v1976 = vsel %vm398, %v1882, 0
    %v1979 = vsel %vm398, %v1883, 0
    %1981 = vmatprep.subr.mxu0 0.0
    %1982 = vmatpush1.msra.mxu0 %v1886
    %1983 = vmatprep.subr.mxu0 0.0
    %1984 = vmatpush1.msra.mxu0 %v1887
    %1985 = vmatprep.subr.mxu0 0.0
    %1986 = vmatpush1.msra.mxu0 %v1888
    %1987 = vmatprep.subr.mxu0 0.0
    %1988 = vmatpush1.msra.mxu0 %v1889
    %1989 = vmatprep.subr.mxu0 0.0
    %1990 = vmatpush1.msra.mxu0 0.0
    %1991 = vmatprep.subr.mxu0 0.0
    %1992 = vmatpush1.msra.mxu0 0.0
    %1993 = vmatprep.subr.mxu0 0.0
    %1994 = vmatpush1.msra.mxu0 0.0
    %1995 = vmatprep.subr.mxu0 0.0
    %1996 = vmatpush1.msra.mxu0 0.0
    %1997 = vmatprep.subr.mxu0 0.0
    %1998 = vmatpush1.msra.mxu0 0.0
    %1999 = vmatprep.subr.mxu0 0.0
    %2000 = vmatpush1.msra.mxu0 0.0
    %2001 = vmatprep.subr.mxu0 0.0
    %2002 = vmatpush1.msra.mxu0 0.0
    %2003 = vmatprep.subr.mxu0 0.0
    %2004 = vmatpush1.msra.mxu0 0.0
    %2005 = vmatprep.subr.mxu0 0.0
    %2006 = vmatpush1.msra.mxu0 0.0
    %2007 = vmatprep.subr.mxu0 0.0
    %2008 = vmatpush1.msra.mxu0 0.0
    %2009 = vmatprep.subr.mxu0 0.0
    %2010 = vmatpush1.msra.mxu0 0.0
    %2011 = vmatprep.subr.mxu0 0.0
    %2012 = vmatpush1.msra.mxu0 0.0
    %2013 = vmatprep.subr.mxu0 0.0
    %2014 = vmatpush1.msra.mxu0 0.0
    %2015 = vmatprep.subr.mxu0 0.0
    %2016 = vmatpush1.msra.mxu0 0.0
    %2017 = vmatprep.subr.mxu0 0.0
    %2018 = vmatpush1.msra.mxu0 0.0
    %2019 = vmatprep.subr.mxu0 0.0
    %2020 = vmatpush1.msra.mxu0 0.0
    %2021 = vmatprep.subr.mxu0 0.0
    %2022 = vmatpush1.msra.mxu0 0.0
    %2023 = vmatprep.subr.mxu0 0.0
    %2024 = vmatpush1.msra.mxu0 0.0
    %2025 = vmatprep.subr.mxu0 0.0
    %2026 = vmatpush1.msra.mxu0 0.0
    %2027 = vmatprep.subr.mxu0 0.0
    %2028 = vmatpush1.msra.mxu0 0.0
    %2029 = vmatprep.subr.mxu0 0.0
    %2030 = vmatpush1.msra.mxu0 0.0
    %2031 = vmatprep.subr.mxu0 0.0
    %2032 = vmatpush1.msra.mxu0 0.0
    %2033 = vmatprep.subr.mxu0 0.0
    %2034 = vmatpush1.msra.mxu0 0.0
    %2035 = vmatprep.subr.mxu0 0.0
    %2036 = vmatpush1.msra.mxu0 0.0
    %2037 = vmatprep.subr.mxu0 0.0
    %2038 = vmatpush1.msra.mxu0 0.0
    %2039 = vmatprep.subr.mxu0 0.0
    %2040 = vmatpush1.msra.mxu0 0.0
    %2041 = vmatprep.subr.mxu0 0.0
    %2042 = vmatpush1.msra.mxu0 0.0
    %2043 = vmatprep.subr.mxu0 0.0
    %2044 = vmatpush1.msra.mxu0 0.0
    %2045 = vmatprep.mubr.f32.mxu0 0.0
    %2046 = vmatmul.mubr.f32.gmra.mrb[0].mxu0 %v1976
    %v2047 = vpop.f32.mrb[0].mxu0
    %v2048 = vadd.f32 %v1967, %v2047
    %v2049 = vpop.f32.mrb[0].mxu0
    %2050 = vmatprep.mubr.f32.mxu0 0.0
    %2051 = vmatmul.mubr.f32.gmra.mrb[0].mxu0 %v1979
    %v2052 = vpop.f32.mrb[0].mxu0
    %v2053 = vadd.f32 %v1972, %v2052
    %v2054 = vpop.f32.mrb[0].mxu0
    %2055 = vdwg.mxu0
    %v2056 = vld [vmem:[#allocation23] sm:$0x1]
    %v2058 = vlaneseq
    %v2059 = vshrl.u32 %v2058, 7
    %v2060 = vsub.s32 0, %v2059
    %v2061 = vrot.slane %v2056, %v2060
    %v2063 = vadd.f32 %v2048, %v2061
    %v2064 = vadd.f32 %v2053, %v2061
    %2065 = vst.msk [vmem:[#allocation2] sm:$0xff] %vm480, %v2063
    %2066 = vst.msk [vmem:[#allocation2 + $0x8] sm:$0xff] %vm480, %v2064
    %v2067 = vld [vmem:[#allocation25] sm:$0xff]
    %v2068 = vld [vmem:[#allocation25 + $0x8] sm:$0xff]
    %v2069 = vld [vmem:[#allocation25 + $0x10] sm:$0xff]
    %v2070 = vld [vmem:[#allocation25 + $0x18] sm:$0xff]
    %v2071 = vld [vmem:[#allocation26] sm:$0xff]
    %v2072 = vld [vmem:[#allocation26 + $0x8] sm:$0xff]
    %v2073 = vld [vmem:[#allocation26 + $0x10] sm:$0xff]
    %v2074 = vld [vmem:[#allocation26 + $0x18] sm:$0xff]
    %2075 = vmatprep.subr.mxu0 0.0
    %2076 = vmatpush1.msra.mxu0 %v2071
    %2077 = vmatprep.subr.mxu0 0.0
    %2078 = vmatpush1.msra.mxu0 %v2072
    %2079 = vmatprep.subr.mxu0 0.0
    %2080 = vmatpush1.msra.mxu0 %v2073
    %2081 = vmatprep.subr.mxu0 0.0
    %2082 = vmatpush1.msra.mxu0 %v2074
    %2083 = vmatprep.subr.mxu0 0.0
    %2084 = vmatpush1.msra.mxu0 0.0
    %2085 = vmatprep.subr.mxu0 0.0
    %2086 = vmatpush1.msra.mxu0 0.0
    %2087 = vmatprep.subr.mxu0 0.0
    %2088 = vmatpush1.msra.mxu0 0.0
    %2089 = vmatprep.subr.mxu0 0.0
    %2090 = vmatpush1.msra.mxu0 0.0
    %2091 = vmatprep.subr.mxu0 0.0
    %2092 = vmatpush1.msra.mxu0 0.0
    %2093 = vmatprep.subr.mxu0 0.0
    %2094 = vmatpush1.msra.mxu0 0.0
    %2095 = vmatprep.subr.mxu0 0.0
    %2096 = vmatpush1.msra.mxu0 0.0
    %2097 = vmatprep.subr.mxu0 0.0
    %2098 = vmatpush1.msra.mxu0 0.0
    %2099 = vmatprep.subr.mxu0 0.0
    %2100 = vmatpush1.msra.mxu0 0.0
    %2101 = vmatprep.subr.mxu0 0.0
    %2102 = vmatpush1.msra.mxu0 0.0
    %2103 = vmatprep.subr.mxu0 0.0
    %2104 = vmatpush1.msra.mxu0 0.0
    %2105 = vmatprep.subr.mxu0 0.0
    %2106 = vmatpush1.msra.mxu0 0.0
    %2107 = vmatprep.subr.mxu0 0.0
    %2108 = vmatpush1.msra.mxu0 0.0
    %2109 = vmatprep.subr.mxu0 0.0
    %2110 = vmatpush1.msra.mxu0 0.0
    %2111 = vmatprep.subr.mxu0 0.0
    %2112 = vmatpush1.msra.mxu0 0.0
    %2113 = vmatprep.subr.mxu0 0.0
    %2114 = vmatpush1.msra.mxu0 0.0
    %2115 = vmatprep.subr.mxu0 0.0
    %2116 = vmatpush1.msra.mxu0 0.0
    %2117 = vmatprep.subr.mxu0 0.0
    %2118 = vmatpush1.msra.mxu0 0.0
    %2119 = vmatprep.subr.mxu0 0.0
    %2120 = vmatpush1.msra.mxu0 0.0
    %2121 = vmatprep.subr.mxu0 0.0
    %2122 = vmatpush1.msra.mxu0 0.0
    %2123 = vmatprep.subr.mxu0 0.0
    %2124 = vmatpush1.msra.mxu0 0.0
    %2125 = vmatprep.subr.mxu0 0.0
    %2126 = vmatpush1.msra.mxu0 0.0
    %2127 = vmatprep.subr.mxu0 0.0
    %2128 = vmatpush1.msra.mxu0 0.0
    %2129 = vmatprep.subr.mxu0 0.0
    %2130 = vmatpush1.msra.mxu0 0.0
    %2131 = vmatprep.subr.mxu0 0.0
    %2132 = vmatpush1.msra.mxu0 0.0
    %2133 = vmatprep.subr.mxu0 0.0
    %2134 = vmatpush1.msra.mxu0 0.0
    %2135 = vmatprep.subr.mxu0 0.0
    %2136 = vmatpush1.msra.mxu0 0.0
    %2137 = vmatprep.subr.mxu0 0.0
    %2138 = vmatpush1.msra.mxu0 0.0
    %2139 = vmatprep.mubr.f32.mxu0 0.0
    %2140 = vmatmul.mubr.f32.gmra.mrb[0].mxu0 %v1895
    %v2141 = vpop.f32.mrb[0].mxu0
    %v2142 = vadd.f32 0.0, %v2141
    %v2143 = vpop.f32.mrb[0].mxu0
    %2144 = vmatprep.mubr.f32.mxu0 0.0
    %2145 = vmatmul.mubr.f32.gmra.mrb[0].mxu0 %v1898
    %v2146 = vpop.f32.mrb[0].mxu0
    %v2147 = vadd.f32 0.0, %v2146
    %v2148 = vpop.f32.mrb[0].mxu0
    %2149 = vdwg.mxu0
    %2150 = vmatprep.subr.mxu0 0.0
    %2151 = vmatpush1.msra.mxu0 %v2067
    %2152 = vmatprep.subr.mxu0 0.0
    %2153 = vmatpush1.msra.mxu0 %v2068
    %2154 = vmatprep.subr.mxu0 0.0
    %2155 = vmatpush1.msra.mxu0 %v2069
    %2156 = vmatprep.subr.mxu0 0.0
    %2157 = vmatpush1.msra.mxu0 %v2070
    %2158 = vmatprep.subr.mxu0 0.0
    %2159 = vmatpush1.msra.mxu0 0.0
    %2160 = vmatprep.subr.mxu0 0.0
    %2161 = vmatpush1.msra.mxu0 0.0
    %2162 = vmatprep.subr.mxu0 0.0
    %2163 = vmatpush1.msra.mxu0 0.0
    %2164 = vmatprep.subr.mxu0 0.0
    %2165 = vmatpush1.msra.mxu0 0.0
    %2166 = vmatprep.subr.mxu0 0.0
    %2167 = vmatpush1.msra.mxu0 0.0
    %2168 = vmatprep.subr.mxu0 0.0
    %2169 = vmatpush1.msra.mxu0 0.0
    %2170 = vmatprep.subr.mxu0 0.0
    %2171 = vmatpush1.msra.mxu0 0.0
    %2172 = vmatprep.subr.mxu0 0.0
    %2173 = vmatpush1.msra.mxu0 0.0
    %2174 = vmatprep.subr.mxu0 0.0
    %2175 = vmatpush1.msra.mxu0 0.0
    %2176 = vmatprep.subr.mxu0 0.0
    %2177 = vmatpush1.msra.mxu0 0.0
    %2178 = vmatprep.subr.mxu0 0.0
    %2179 = vmatpush1.msra.mxu0 0.0
    %2180 = vmatprep.subr.mxu0 0.0
    %2181 = vmatpush1.msra.mxu0 0.0
    %2182 = vmatprep.subr.mxu0 0.0
    %2183 = vmatpush1.msra.mxu0 0.0
    %2184 = vmatprep.subr.mxu0 0.0
    %2185 = vmatpush1.msra.mxu0 0.0
    %2186 = vmatprep.subr.mxu0 0.0
    %2187 = vmatpush1.msra.mxu0 0.0
    %2188 = vmatprep.subr.mxu0 0.0
    %2189 = vmatpush1.msra.mxu0 0.0
    %2190 = vmatprep.subr.mxu0 0.0
    %2191 = vmatpush1.msra.mxu0 0.0
    %2192 = vmatprep.subr.mxu0 0.0
    %2193 = vmatpush1.msra.mxu0 0.0
    %2194 = vmatprep.subr.mxu0 0.0
    %2195 = vmatpush1.msra.mxu0 0.0
    %2196 = vmatprep.subr.mxu0 0.0
    %2197 = vmatpush1.msra.mxu0 0.0
    %2198 = vmatprep.subr.mxu0 0.0
    %2199 = vmatpush1.msra.mxu0 0.0
    %2200 = vmatprep.subr.mxu0 0.0
    %2201 = vmatpush1.msra.mxu0 0.0
    %2202 = vmatprep.subr.mxu0 0.0
    %2203 = vmatpush1.msra.mxu0 0.0
    %2204 = vmatprep.subr.mxu0 0.0
    %2205 = vmatpush1.msra.mxu0 0.0
    %2206 = vmatprep.subr.mxu0 0.0
    %2207 = vmatpush1.msra.mxu0 0.0
    %2208 = vmatprep.subr.mxu0 0.0
    %2209 = vmatpush1.msra.mxu0 0.0
    %2210 = vmatprep.subr.mxu0 0.0
    %2211 = vmatpush1.msra.mxu0 0.0
    %2212 = vmatprep.subr.mxu0 0.0
    %2213 = vmatpush1.msra.mxu0 0.0
    %2214 = vmatprep.mubr.f32.mxu0 0.0
    %2215 = vmatmul.mubr.f32.gmra.mrb[0].mxu0 %v1976
    %v2216 = vpop.f32.mrb[0].mxu0
    %v2217 = vadd.f32 %v2142, %v2216
    %v2218 = vpop.f32.mrb[0].mxu0
    %2219 = vmatprep.mubr.f32.mxu0 0.0
    %2220 = vmatmul.mubr.f32.gmra.mrb[0].mxu0 %v1979
    %v2221 = vpop.f32.mrb[0].mxu0
    %v2222 = vadd.f32 %v2147, %v2221
    %v2223 = vpop.f32.mrb[0].mxu0
    %2224 = vdwg.mxu0
    %v2225 = vld [vmem:[#allocation28] sm:$0x1]
    %v2227 = vlaneseq
    %v2228 = vshrl.u32 %v2227, 7
    %v2229 = vsub.s32 0, %v2228
    %v2230 = vrot.slane %v2225, %v2229
    %v2232 = vadd.f32 %v2217, %v2230
    %v2233 = vadd.f32 %v2222, %v2230
    %2234 = vst.msk [vmem:[#allocation3] sm:$0xff] %vm480, %v2232
    %2235 = vst.msk [vmem:[#allocation3 + $0x8] sm:$0xff] %vm480, %v2233
    %v2236 = vld [vmem:[#allocation29] sm:$0xff]
    %v2237 = vld [vmem:[#allocation29 + $0x8] sm:$0xff]
    %v2238 = vld [vmem:[#allocation29 + $0x10] sm:$0xff]
    %v2239 = vld [vmem:[#allocation29 + $0x18] sm:$0xff]
    %v2240 = vld [vmem:[#allocation29 + $0x20] sm:$0xff]
    %v2241 = vld [vmem:[#allocation29 + $0x28] sm:$0xff]
    %v2242 = vld [vmem:[#allocation29 + $0x30] sm:$0xff]
    %v2243 = vld [vmem:[#allocation29 + $0x38] sm:$0xff]
    %v2244 = vld [vmem:[#allocation29 + $0x40] sm:$0xff]
    %v2245 = vld [vmem:[#allocation29 + $0x48] sm:$0xff]
    %v2246 = vld [vmem:[#allocation29 + $0x50] sm:$0xff]
    %v2247 = vld [vmem:[#allocation29 + $0x58] sm:$0xff]
    %v2248 = vld [vmem:[#allocation29 + $0x60] sm:$0xff]
    %v2249 = vld [vmem:[#allocation29 + $0x68] sm:$0xff]
    %v2250 = vld [vmem:[#allocation29 + $0x70] sm:$0xff]
    %v2251 = vld [vmem:[#allocation29 + $0x78] sm:$0xff]
    %v2252 = vld [vmem:[#allocation31] sm:$0x1]
    %v2253 = vld [vmem:[%s18] sm:$0x1]
    %v2254 = vld [vmem:[#allocation2] sm:$0x3]
    %v2255 = vld [vmem:[%s590] sm:$0x3]
    %2256 = vmatprep.subr.mxu0 %v2237
    %2257 = vmatpush1.msra.mxu0 %v2236
    %2258 = vmatprep.subr.mxu0 %v2239
    %2259 = vmatpush1.msra.mxu0 %v2238
    %2260 = vmatprep.subr.mxu0 %v2241
    %2261 = vmatpush1.msra.mxu0 %v2240
    %2262 = vmatprep.subr.mxu0 %v2243
    %2263 = vmatpush1.msra.mxu0 %v2242
    %2264 = vmatprep.subr.mxu0 %v2245
    %2265 = vmatpush1.msra.mxu0 %v2244
    %2266 = vmatprep.subr.mxu0 %v2247
    %2267 = vmatpush1.msra.mxu0 %v2246
    %2268 = vmatprep.subr.mxu0 %v2249
    %2269 = vmatpush1.msra.mxu0 %v2248
    %2270 = vmatprep.subr.mxu0 %v2251
    %2271 = vmatpush1.msra.mxu0 %v2250
    %2272 = vmatprep.subr.mxu0 0.0
    %2273 = vmatpush1.msra.mxu0 0.0
    %2274 = vmatprep.subr.mxu0 0.0
    %2275 = vmatpush1.msra.mxu0 0.0
    %2276 = vmatprep.subr.mxu0 0.0
    %2277 = vmatpush1.msra.mxu0 0.0
    %2278 = vmatprep.subr.mxu0 0.0
    %2279 = vmatpush1.msra.mxu0 0.0
    %2280 = vmatprep.subr.mxu0 0.0
    %2281 = vmatpush1.msra.mxu0 0.0
    %2282 = vmatprep.subr.mxu0 0.0
    %2283 = vmatpush1.msra.mxu0 0.0
    %2284 = vmatprep.subr.mxu0 0.0
    %2285 = vmatpush1.msra.mxu0 0.0
    %2286 = vmatprep.subr.mxu0 0.0
    %2287 = vmatpush1.msra.mxu0 0.0
    %2288 = vmatprep.subr.mxu0 0.0
    %2289 = vmatpush1.msra.mxu0 0.0
    %2290 = vmatprep.subr.mxu0 0.0
    %2291 = vmatpush1.msra.mxu0 0.0
    %2292 = vmatprep.subr.mxu0 0.0
    %2293 = vmatpush1.msra.mxu0 0.0
    %2294 = vmatprep.subr.mxu0 0.0
    %2295 = vmatpush1.msra.mxu0 0.0
    %2296 = vmatprep.subr.mxu0 0.0
    %2297 = vmatpush1.msra.mxu0 0.0
    %2298 = vmatprep.subr.mxu0 0.0
    %2299 = vmatpush1.msra.mxu0 0.0
    %2300 = vmatprep.subr.mxu0 0.0
    %2301 = vmatpush1.msra.mxu0 0.0
    %2302 = vmatprep.subr.mxu0 0.0
    %2303 = vmatpush1.msra.mxu0 0.0
    %2304 = vmatprep.subr.mxu0 0.0
    %2305 = vmatpush1.msra.mxu0 0.0
    %2306 = vmatprep.subr.mxu0 0.0
    %2307 = vmatpush1.msra.mxu0 0.0
    %2308 = vmatprep.subr.mxu0 0.0
    %2309 = vmatpush1.msra.mxu0 0.0
    %2310 = vmatprep.subr.mxu0 0.0
    %2311 = vmatpush1.msra.mxu0 0.0
    %2312 = vmatprep.subr.mxu0 0.0
    %2313 = vmatpush1.msra.mxu0 0.0
    %2314 = vmatprep.subr.mxu0 0.0
    %2315 = vmatpush1.msra.mxu0 0.0
    %2316 = vmatprep.subr.mxu0 0.0
    %2317 = vmatpush1.msra.mxu0 0.0
    %2318 = vmatprep.subr.mxu0 0.0
    %2319 = vmatpush1.msra.mxu0 0.0
    %2320 = vmatprep.mubr.f32.mxu0 0.0
    %2321 = vmatmul.mubr.f32.gmra.mrb[0].mxu0 %v594
    %v2322 = vpop.f32.mrb[0].mxu0
    %v2323 = vadd.f32 0.0, %v2322
    %v2324 = vpop.f32.mrb[0].mxu0
    %v2325 = vadd.f32 0.0, %v2324
    %2326 = vdwg.mxu0
    %v2327 = vadd.f32 %v2254, %v2323
    %v2328 = vxor.u32 %v2327, 2147483648
    %v2329 = vmul.f32 %v2328, 1.442695
    %v2330 = vpow.pop %v2329
    %v2331 = vadd.f32 %v2330, 1.0
    %v2332 = vrcp.pop %v2331
    %v2333 = vmul.f32 1.0, %v2332
    %v2335 = vlaneseq
    %v2336 = vshrl.u32 %v2335, 7
    %v2337 = vsub.s32 0, %v2336
    %v2338 = vrot.slane %v2252, %v2337
    %2339 = vrot.lane.b32.xlu0 %v2338, 64
    %v2340 = vpop.permute.xlu0 %2339
    %v2342 = vadd.f32 %v2323, %v2340
    %2344 = vrot.lane.b32.xlu0 %v2342, 64
    %v2345 = vpop.permute.xlu0 %2344
    %v2347 = vmul.f32 %v2333, %v2345
    %2349 = vrot.lane.b32.xlu0 %v2347, 64
    %v2350 = vpop.permute.xlu0 %2349
    %v2352 = vadd.f32 %v2254, %v2350
    %v2353 = vtanh.pop %v2352
    %v2354 = vsub.f32 1.0, %v2333
    %2356 = vrot.lane.b32.xlu0 %v2353, 96
    %v2357 = vpop.permute.xlu0 %2356
    %v2359 = vmul.f32 %v2354, %v2357
    %v2360 = vmul.f32 %v2333, 0.0
    %v2361 = vadd.f32 %v2359, %v2360
    %2363 = vrot.lane.b32.xlu0 %v2323, 32
    %v2364 = vpop.permute.xlu0 %2363
    %v2366 = vadd.f32 %v2255, %v2364
    %v2367 = vxor.u32 %v2366, 2147483648
    %v2368 = vmul.f32 %v2367, 1.442695
    %v2369 = vpow.pop %v2368
    %v2370 = vadd.f32 %v2369, 1.0
    %v2371 = vrcp.pop %v2370
    %v2372 = vmul.f32 1.0, %v2371
    %2374 = vrot.lane.b32.xlu0 %v2325, 32
    %v2375 = vpop.permute.xlu0 %2374
    %v2377 = vadd.f32 %v2255, %v2375
    %v2378 = vxor.u32 %v2377, 2147483648
    %v2379 = vmul.f32 %v2378, 1.442695
    %v2380 = vpow.pop %v2379
    %v2381 = vadd.f32 %v2380, 1.0
    %v2382 = vrcp.pop %v2381
    %v2383 = vmul.f32 1.0, %v2382
    %v2385 = vlaneseq
    %v2386 = vshrl.u32 %v2385, 7
    %v2387 = vsub.s32 0, %v2386
    %v2388 = vrot.slane %v2253, %v2387
    %2389 = vrot.lane.b32.xlu0 %v2388, 32
    %v2390 = vpop.permute.xlu0 %2389
    %v2392 = vadd.f32 %v2325, %v2390
    %2394 = vrot.lane.b32.xlu0 %v2392, 96
    %v2395 = vpop.permute.xlu0 %2394
    %v2397 = vmul.f32 %v2372, %v2395
    %2399 = vrot.lane.b32.xlu0 %v2397, 64
    %v2400 = vpop.permute.xlu0 %2399
    %v2402 = vadd.f32 %v2255, %v2400
    %v2403 = vtanh.pop %v2402
    %v2404 = vsub.f32 1.0, %v2383
    %2406 = vrot.lane.b32.xlu0 %v2403, 96
    %v2407 = vpop.permute.xlu0 %2406
    %v2409 = vmul.f32 %v2404, %v2407
    %v2410 = vmul.f32 %v2383, 0.0
    %v2411 = vadd.f32 %v2409, %v2410
    %2413 = vrot.lane.b32.xlu0 %v2361, 96
    %v2414 = vpop.permute.xlu0 %2413
    %2416 = vst.msk [vmem:[#allocation4] sm:$0x3] %vm756, %v2414
    %2418 = vrot.lane.b32.xlu0 %v2411, 96
    %v2419 = vpop.permute.xlu0 %2418
    %2421 = vst.msk [vmem:[%s762] sm:$0x3] %vm756, %v2419
    %v2422 = vld [vmem:[%s764] sm:$0x3]
    %v2423 = vld [vmem:[%s766] sm:$0x3]
    %v2424 = vsel %vm398, %v2414, %v2411
    %v2426 = vsel %vm592, %v2424, 0
    %2428 = vmatprep.subr.mxu0 %v2237
    %2429 = vmatpush1.msra.mxu0 %v2236
    %2430 = vmatprep.subr.mxu0 %v2239
    %2431 = vmatpush1.msra.mxu0 %v2238
    %2432 = vmatprep.subr.mxu0 %v2241
    %2433 = vmatpush1.msra.mxu0 %v2240
    %2434 = vmatprep.subr.mxu0 %v2243
    %2435 = vmatpush1.msra.mxu0 %v2242
    %2436 = vmatprep.subr.mxu0 %v2245
    %2437 = vmatpush1.msra.mxu0 %v2244
    %2438 = vmatprep.subr.mxu0 %v2247
    %2439 = vmatpush1.msra.mxu0 %v2246
    %2440 = vmatprep.subr.mxu0 %v2249
    %2441 = vmatpush1.msra.mxu0 %v2248
    %2442 = vmatprep.subr.mxu0 %v2251
    %2443 = vmatpush1.msra.mxu0 %v2250
    %2444 = vmatprep.subr.mxu0 0.0
    %2445 = vmatpush1.msra.mxu0 0.0
    %2446 = vmatprep.subr.mxu0 0.0
    %2447 = vmatpush1.msra.mxu0 0.0
    %2448 = vmatprep.subr.mxu0 0.0
    %2449 = vmatpush1.msra.mxu0 0.0
    %2450 = vmatprep.subr.mxu0 0.0
    %2451 = vmatpush1.msra.mxu0 0.0
    %2452 = vmatprep.subr.mxu0 0.0
    %2453 = vmatpush1.msra.mxu0 0.0
    %2454 = vmatprep.subr.mxu0 0.0
    %2455 = vmatpush1.msra.mxu0 0.0
    %2456 = vmatprep.subr.mxu0 0.0
    %2457 = vmatpush1.msra.mxu0 0.0
    %2458 = vmatprep.subr.mxu0 0.0
    %2459 = vmatpush1.msra.mxu0 0.0
    %2460 = vmatprep.subr.mxu0 0.0
    %2461 = vmatpush1.msra.mxu0 0.0
    %2462 = vmatprep.subr.mxu0 0.0
    %2463 = vmatpush1.msra.mxu0 0.0
    %2464 = vmatprep.subr.mxu0 0.0
    %2465 = vmatpush1.msra.mxu0 0.0
    %2466 = vmatprep.subr.mxu0 0.0
    %2467 = vmatpush1.msra.mxu0 0.0
    %2468 = vmatprep.subr.mxu0 0.0
    %2469 = vmatpush1.msra.mxu0 0.0
    %2470 = vmatprep.subr.mxu0 0.0
    %2471 = vmatpush1.msra.mxu0 0.0
    %2472 = vmatprep.subr.mxu0 0.0
    %2473 = vmatpush1.msra.mxu0 0.0
    %2474 = vmatprep.subr.mxu0 0.0
    %2475 = vmatpush1.msra.mxu0 0.0
    %2476 = vmatprep.subr.mxu0 0.0
    %2477 = vmatpush1.msra.mxu0 0.0
    %2478 = vmatprep.subr.mxu0 0.0
    %2479 = vmatpush1.msra.mxu0 0.0
    %2480 = vmatprep.subr.mxu0 0.0
    %2481 = vmatpush1.msra.mxu0 0.0
    %2482 = vmatprep.subr.mxu0 0.0
    %2483 = vmatpush1.msra.mxu0 0.0
    %2484 = vmatprep.subr.mxu0 0.0
    %2485 = vmatpush1.msra.mxu0 0.0
    %2486 = vmatprep.subr.mxu0 0.0
    %2487 = vmatpush1.msra.mxu0 0.0
    %2488 = vmatprep.subr.mxu0 0.0
    %2489 = vmatpush1.msra.mxu0 0.0
    %2490 = vmatprep.subr.mxu0 0.0
    %2491 = vmatpush1.msra.mxu0 0.0
    %2492 = vmatprep.mubr.f32.mxu0 0.0
    %2493 = vmatmul.mubr.f32.gmra.mrb[0].mxu0 %v2426
    %v2494 = vpop.f32.mrb[0].mxu0
    %v2495 = vadd.f32 0.0, %v2494
    %v2496 = vpop.f32.mrb[0].mxu0
    %v2497 = vadd.f32 0.0, %v2496
    %2498 = vdwg.mxu0
    %v2499 = vadd.f32 %v2422, %v2495
    %v2500 = vxor.u32 %v2499, 2147483648
    %v2501 = vmul.f32 %v2500, 1.442695
    %v2502 = vpow.pop %v2501
    %v2503 = vadd.f32 %v2502, 1.0
    %v2504 = vrcp.pop %v2503
    %v2505 = vmul.f32 1.0, %v2504
    %v2506 = vadd.f32 %v2495, %v2340
    %2508 = vrot.lane.b32.xlu0 %v2506, 64
    %v2509 = vpop.permute.xlu0 %2508
    %v2511 = vmul.f32 %v2505, %v2509
    %2513 = vrot.lane.b32.xlu0 %v2511, 64
    %v2514 = vpop.permute.xlu0 %2513
    %v2516 = vadd.f32 %v2422, %v2514
    %v2517 = vtanh.pop %v2516
    %v2518 = vsub.f32 1.0, %v2505
    %2520 = vrot.lane.b32.xlu0 %v2517, 96
    %v2521 = vpop.permute.xlu0 %2520
    %v2523 = vmul.f32 %v2518, %v2521
    %v2524 = vmul.f32 %v2505, %v2361
    %v2525 = vadd.f32 %v2523, %v2524
    %2527 = vrot.lane.b32.xlu0 %v2495, 32
    %v2528 = vpop.permute.xlu0 %2527
    %v2530 = vadd.f32 %v2423, %v2528
    %v2531 = vxor.u32 %v2530, 2147483648
    %v2532 = vmul.f32 %v2531, 1.442695
    %v2533 = vpow.pop %v2532
    %v2534 = vadd.f32 %v2533, 1.0
    %v2535 = vrcp.pop %v2534
    %v2536 = vmul.f32 1.0, %v2535
    %2538 = vrot.lane.b32.xlu0 %v2497, 32
    %v2539 = vpop.permute.xlu0 %2538
    %v2541 = vadd.f32 %v2423, %v2539
    %v2542 = vxor.u32 %v2541, 2147483648
    %v2543 = vmul.f32 %v2542, 1.442695
    %v2544 = vpow.pop %v2543
    %v2545 = vadd.f32 %v2544, 1.0
    %v2546 = vrcp.pop %v2545
    %v2547 = vmul.f32 1.0, %v2546
    %v2548 = vadd.f32 %v2497, %v2390
    %2550 = vrot.lane.b32.xlu0 %v2548, 96
    %v2551 = vpop.permute.xlu0 %2550
    %v2553 = vmul.f32 %v2536, %v2551
    %2555 = vrot.lane.b32.xlu0 %v2553, 64
    %v2556 = vpop.permute.xlu0 %2555
    %v2558 = vadd.f32 %v2423, %v2556
    %v2559 = vtanh.pop %v2558
    %v2560 = vsub.f32 1.0, %v2547
    %2562 = vrot.lane.b32.xlu0 %v2559, 96
    %v2563 = vpop.permute.xlu0 %2562
    %v2565 = vmul.f32 %v2560, %v2563
    %v2566 = vmul.f32 %v2547, %v2411
    %v2567 = vadd.f32 %v2565, %v2566
    %2569 = vrot.lane.b32.xlu0 %v2525, 96
    %v2570 = vpop.permute.xlu0 %2569
    %2572 = vst.msk [vmem:[%s916] sm:$0x3] %vm756, %v2570
    %2574 = vrot.lane.b32.xlu0 %v2567, 96
    %v2575 = vpop.permute.xlu0 %2574
    %2577 = vst.msk [vmem:[%s922] sm:$0x3] %vm756, %v2575
    %v2578 = vld [vmem:[%s924] sm:$0x3]
    %v2579 = vld [vmem:[%s926] sm:$0x3]
    %v2580 = vsel %vm398, %v2570, %v2567
    %v2582 = vsel %vm592, %v2580, 0
    %2584 = vmatprep.subr.mxu0 %v2237
    %2585 = vmatpush1.msra.mxu0 %v2236
    %2586 = vmatprep.subr.mxu0 %v2239
    %2587 = vmatpush1.msra.mxu0 %v2238
    %2588 = vmatprep.subr.mxu0 %v2241
    %2589 = vmatpush1.msra.mxu0 %v2240
    %2590 = vmatprep.subr.mxu0 %v2243
    %2591 = vmatpush1.msra.mxu0 %v2242
    %2592 = vmatprep.subr.mxu0 %v2245
    %2593 = vmatpush1.msra.mxu0 %v2244
    %2594 = vmatprep.subr.mxu0 %v2247
    %2595 = vmatpush1.msra.mxu0 %v2246
    %2596 = vmatprep.subr.mxu0 %v2249
    %2597 = vmatpush1.msra.mxu0 %v2248
    %2598 = vmatprep.subr.mxu0 %v2251
    %2599 = vmatpush1.msra.mxu0 %v2250
    %2600 = vmatprep.subr.mxu0 0.0
    %2601 = vmatpush1.msra.mxu0 0.0
    %2602 = vmatprep.subr.mxu0 0.0
    %2603 = vmatpush1.msra.mxu0 0.0
    %2604 = vmatprep.subr.mxu0 0.0
    %2605 = vmatpush1.msra.mxu0 0.0
    %2606 = vmatprep.subr.mxu0 0.0
    %2607 = vmatpush1.msra.mxu0 0.0
    %2608 = vmatprep.subr.mxu0 0.0
    %2609 = vmatpush1.msra.mxu0 0.0
    %2610 = vmatprep.subr.mxu0 0.0
    %2611 = vmatpush1.msra.mxu0 0.0
    %2612 = vmatprep.subr.mxu0 0.0
    %2613 = vmatpush1.msra.mxu0 0.0
    %2614 = vmatprep.subr.mxu0 0.0
    %2615 = vmatpush1.msra.mxu0 0.0
    %2616 = vmatprep.subr.mxu0 0.0
    %2617 = vmatpush1.msra.mxu0 0.0
    %2618 = vmatprep.subr.mxu0 0.0
    %2619 = vmatpush1.msra.mxu0 0.0
    %2620 = vmatprep.subr.mxu0 0.0
    %2621 = vmatpush1.msra.mxu0 0.0
    %2622 = vmatprep.subr.mxu0 0.0
    %2623 = vmatpush1.msra.mxu0 0.0
    %2624 = vmatprep.subr.mxu0 0.0
    %2625 = vmatpush1.msra.mxu0 0.0
    %2626 = vmatprep.subr.mxu0 0.0
    %2627 = vmatpush1.msra.mxu0 0.0
    %2628 = vmatprep.subr.mxu0 0.0
    %2629 = vmatpush1.msra.mxu0 0.0
    %2630 = vmatprep.subr.mxu0 0.0
    %2631 = vmatpush1.msra.mxu0 0.0
    %2632 = vmatprep.subr.mxu0 0.0
    %2633 = vmatpush1.msra.mxu0 0.0
    %2634 = vmatprep.subr.mxu0 0.0
    %2635 = vmatpush1.msra.mxu0 0.0
    %2636 = vmatprep.subr.mxu0 0.0
    %2637 = vmatpush1.msra.mxu0 0.0
    %2638 = vmatprep.subr.mxu0 0.0
    %2639 = vmatpush1.msra.mxu0 0.0
    %2640 = vmatprep.subr.mxu0 0.0
    %2641 = vmatpush1.msra.mxu0 0.0
    %2642 = vmatprep.subr.mxu0 0.0
    %2643 = vmatpush1.msra.mxu0 0.0
    %2644 = vmatprep.subr.mxu0 0.0
    %2645 = vmatpush1.msra.mxu0 0.0
    %2646 = vmatprep.subr.mxu0 0.0
    %2647 = vmatpush1.msra.mxu0 0.0
    %2648 = vmatprep.mubr.f32.mxu0 0.0
    %2649 = vmatmul.mubr.f32.gmra.mrb[0].mxu0 %v2582
    %v2650 = vpop.f32.mrb[0].mxu0
    %v2651 = vadd.f32 0.0, %v2650
    %v2652 = vpop.f32.mrb[0].mxu0
    %v2653 = vadd.f32 0.0, %v2652
    %2654 = vdwg.mxu0
    %v2655 = vadd.f32 %v2578, %v2651
    %v2656 = vxor.u32 %v2655, 2147483648
    %v2657 = vmul.f32 %v2656, 1.442695
    %v2658 = vpow.pop %v2657
    %v2659 = vadd.f32 %v2658, 1.0
    %v2660 = vrcp.pop %v2659
    %v2661 = vmul.f32 1.0, %v2660
    %v2662 = vadd.f32 %v2651, %v2340
    %2664 = vrot.lane.b32.xlu0 %v2662, 64
    %v2665 = vpop.permute.xlu0 %2664
    %v2667 = vmul.f32 %v2661, %v2665
    %2669 = vrot.lane.b32.xlu0 %v2667, 64
    %v2670 = vpop.permute.xlu0 %2669
    %v2672 = vadd.f32 %v2578, %v2670
    %v2673 = vtanh.pop %v2672
    %v2674 = vsub.f32 1.0, %v2661
    %2676 = vrot.lane.b32.xlu0 %v2673, 96
    %v2677 = vpop.permute.xlu0 %2676
    %v2679 = vmul.f32 %v2674, %v2677
    %v2680 = vmul.f32 %v2661, %v2525
    %v2681 = vadd.f32 %v2679, %v2680
    %2683 = vrot.lane.b32.xlu0 %v2651, 32
    %v2684 = vpop.permute.xlu0 %2683
    %v2686 = vadd.f32 %v2579, %v2684
    %v2687 = vxor.u32 %v2686, 2147483648
    %v2688 = vmul.f32 %v2687, 1.442695
    %v2689 = vpow.pop %v2688
    %v2690 = vadd.f32 %v2689, 1.0
    %v2691 = vrcp.pop %v2690
    %v2692 = vmul.f32 1.0, %v2691
    %2694 = vrot.lane.b32.xlu0 %v2653, 32
    %v2695 = vpop.permute.xlu0 %2694
    %v2697 = vadd.f32 %v2579, %v2695
    %v2698 = vxor.u32 %v2697, 2147483648
    %v2699 = vmul.f32 %v2698, 1.442695
    %v2700 = vpow.pop %v2699
    %v2701 = vadd.f32 %v2700, 1.0
    %v2702 = vrcp.pop %v2701
    %v2703 = vmul.f32 1.0, %v2702
    %v2704 = vadd.f32 %v2653, %v2390
    %2706 = vrot.lane.b32.xlu0 %v2704, 96
    %v2707 = vpop.permute.xlu0 %2706
    %v2709 = vmul.f32 %v2692, %v2707
    %2711 = vrot.lane.b32.xlu0 %v2709, 64
    %v2712 = vpop.permute.xlu0 %2711
    %v2714 = vadd.f32 %v2579, %v2712
    %v2715 = vtanh.pop %v2714
    %v2716 = vsub.f32 1.0, %v2703
    %2718 = vrot.lane.b32.xlu0 %v2715, 96
    %v2719 = vpop.permute.xlu0 %2718
    %v2721 = vmul.f32 %v2716, %v2719
    %v2722 = vmul.f32 %v2703, %v2567
    %v2723 = vadd.f32 %v2721, %v2722
    %2725 = vrot.lane.b32.xlu0 %v2681, 96
    %v2726 = vpop.permute.xlu0 %2725
    %2728 = vst.msk [vmem:[%s1076] sm:$0x3] %vm756, %v2726
    %2730 = vrot.lane.b32.xlu0 %v2723, 96
    %v2731 = vpop.permute.xlu0 %2730
    %2733 = vst.msk [vmem:[%s1082] sm:$0x3] %vm756, %v2731
    %v2734 = vld [vmem:[%s1084] sm:$0x3]
    %v2735 = vld [vmem:[%s1086] sm:$0x3]
    %v2736 = vsel %vm398, %v2726, %v2723
    %v2738 = vsel %vm592, %v2736, 0
    %2740 = vmatprep.subr.mxu0 %v2237
    %2741 = vmatpush1.msra.mxu0 %v2236
    %2742 = vmatprep.subr.mxu0 %v2239
    %2743 = vmatpush1.msra.mxu0 %v2238
    %2744 = vmatprep.subr.mxu0 %v2241
    %2745 = vmatpush1.msra.mxu0 %v2240
    %2746 = vmatprep.subr.mxu0 %v2243
    %2747 = vmatpush1.msra.mxu0 %v2242
    %2748 = vmatprep.subr.mxu0 %v2245
    %2749 = vmatpush1.msra.mxu0 %v2244
    %2750 = vmatprep.subr.mxu0 %v2247
    %2751 = vmatpush1.msra.mxu0 %v2246
    %2752 = vmatprep.subr.mxu0 %v2249
    %2753 = vmatpush1.msra.mxu0 %v2248
    %2754 = vmatprep.subr.mxu0 %v2251
    %2755 = vmatpush1.msra.mxu0 %v2250
    %2756 = vmatprep.subr.mxu0 0.0
    %2757 = vmatpush1.msra.mxu0 0.0
    %2758 = vmatprep.subr.mxu0 0.0
    %2759 = vmatpush1.msra.mxu0 0.0
    %2760 = vmatprep.subr.mxu0 0.0
    %2761 = vmatpush1.msra.mxu0 0.0
    %2762 = vmatprep.subr.mxu0 0.0
    %2763 = vmatpush1.msra.mxu0 0.0
    %2764 = vmatprep.subr.mxu0 0.0
    %2765 = vmatpush1.msra.mxu0 0.0
    %2766 = vmatprep.subr.mxu0 0.0
    %2767 = vmatpush1.msra.mxu0 0.0
    %2768 = vmatprep.subr.mxu0 0.0
    %2769 = vmatpush1.msra.mxu0 0.0
    %2770 = vmatprep.subr.mxu0 0.0
    %2771 = vmatpush1.msra.mxu0 0.0
    %2772 = vmatprep.subr.mxu0 0.0
    %2773 = vmatpush1.msra.mxu0 0.0
    %2774 = vmatprep.subr.mxu0 0.0
    %2775 = vmatpush1.msra.mxu0 0.0
    %2776 = vmatprep.subr.mxu0 0.0
    %2777 = vmatpush1.msra.mxu0 0.0
    %2778 = vmatprep.subr.mxu0 0.0
    %2779 = vmatpush1.msra.mxu0 0.0
    %2780 = vmatprep.subr.mxu0 0.0
    %2781 = vmatpush1.msra.mxu0 0.0
    %2782 = vmatprep.subr.mxu0 0.0
    %2783 = vmatpush1.msra.mxu0 0.0
    %2784 = vmatprep.subr.mxu0 0.0
    %2785 = vmatpush1.msra.mxu0 0.0
    %2786 = vmatprep.subr.mxu0 0.0
    %2787 = vmatpush1.msra.mxu0 0.0
    %2788 = vmatprep.subr.mxu0 0.0
    %2789 = vmatpush1.msra.mxu0 0.0
    %2790 = vmatprep.subr.mxu0 0.0
    %2791 = vmatpush1.msra.mxu0 0.0
    %2792 = vmatprep.subr.mxu0 0.0
    %2793 = vmatpush1.msra.mxu0 0.0
    %2794 = vmatprep.subr.mxu0 0.0
    %2795 = vmatpush1.msra.mxu0 0.0
    %2796 = vmatprep.subr.mxu0 0.0
    %2797 = vmatpush1.msra.mxu0 0.0
    %2798 = vmatprep.subr.mxu0 0.0
    %2799 = vmatpush1.msra.mxu0 0.0
    %2800 = vmatprep.subr.mxu0 0.0
    %2801 = vmatpush1.msra.mxu0 0.0
    %2802 = vmatprep.subr.mxu0 0.0
    %2803 = vmatpush1.msra.mxu0 0.0
    %2804 = vmatprep.mubr.f32.mxu0 0.0
    %2805 = vmatmul.mubr.f32.gmra.mrb[0].mxu0 %v2738
    %v2806 = vpop.f32.mrb[0].mxu0
    %v2807 = vadd.f32 0.0, %v2806
    %v2808 = vpop.f32.mrb[0].mxu0
    %v2809 = vadd.f32 0.0, %v2808
    %2810 = vdwg.mxu0
    %v2811 = vadd.f32 %v2734, %v2807
    %v2812 = vxor.u32 %v2811, 2147483648
    %v2813 = vmul.f32 %v2812, 1.442695
    %v2814 = vpow.pop %v2813
    %v2815 = vadd.f32 %v2814, 1.0
    %v2816 = vrcp.pop %v2815
    %v2817 = vmul.f32 1.0, %v2816
    %v2818 = vadd.f32 %v2807, %v2340
    %2820 = vrot.lane.b32.xlu0 %v2818, 64
    %v2821 = vpop.permute.xlu0 %2820
    %v2823 = vmul.f32 %v2817, %v2821
    %2825 = vrot.lane.b32.xlu0 %v2823, 64
    %v2826 = vpop.permute.xlu0 %2825
    %v2828 = vadd.f32 %v2734, %v2826
    %v2829 = vtanh.pop %v2828
    %v2830 = vsub.f32 1.0, %v2817
    %2832 = vrot.lane.b32.xlu0 %v2829, 96
    %v2833 = vpop.permute.xlu0 %2832
    %v2835 = vmul.f32 %v2830, %v2833
    %v2836 = vmul.f32 %v2817, %v2681
    %v2837 = vadd.f32 %v2835, %v2836
    %2839 = vrot.lane.b32.xlu0 %v2807, 32
    %v2840 = vpop.permute.xlu0 %2839
    %v2842 = vadd.f32 %v2735, %v2840
    %v2843 = vxor.u32 %v2842, 2147483648
    %v2844 = vmul.f32 %v2843, 1.442695
    %v2845 = vpow.pop %v2844
    %v2846 = vadd.f32 %v2845, 1.0
    %v2847 = vrcp.pop %v2846
    %v2848 = vmul.f32 1.0, %v2847
    %2850 = vrot.lane.b32.xlu0 %v2809, 32
    %v2851 = vpop.permute.xlu0 %2850
    %v2853 = vadd.f32 %v2735, %v2851
    %v2854 = vxor.u32 %v2853, 2147483648
    %v2855 = vmul.f32 %v2854, 1.442695
    %v2856 = vpow.pop %v2855
    %v2857 = vadd.f32 %v2856, 1.0
    %v2858 = vrcp.pop %v2857
    %v2859 = vmul.f32 1.0, %v2858
    %v2860 = vadd.f32 %v2809, %v2390
    %2862 = vrot.lane.b32.xlu0 %v2860, 96
    %v2863 = vpop.permute.xlu0 %2862
    %v2865 = vmul.f32 %v2848, %v2863
    %2867 = vrot.lane.b32.xlu0 %v2865, 64
    %v2868 = vpop.permute.xlu0 %2867
    %v2870 = vadd.f32 %v2735, %v2868
    %v2871 = vtanh.pop %v2870
    %v2872 = vsub.f32 1.0, %v2859
    %2874 = vrot.lane.b32.xlu0 %v2871, 96
    %v2875 = vpop.permute.xlu0 %2874
    %v2877 = vmul.f32 %v2872, %v2875
    %v2878 = vmul.f32 %v2859, %v2723
    %v2879 = vadd.f32 %v2877, %v2878
    %2881 = vrot.lane.b32.xlu0 %v2837, 96
    %v2882 = vpop.permute.xlu0 %2881
    %2884 = vst.msk [vmem:[%s1236] sm:$0x3] %vm756, %v2882
    %2886 = vrot.lane.b32.xlu0 %v2879, 96
    %v2887 = vpop.permute.xlu0 %2886
    %2889 = vst.msk [vmem:[%s1242] sm:$0x3] %vm756, %v2887
    %v2890 = vld [vmem:[%s1244] sm:$0x3]
    %v2891 = vld [vmem:[%s1246] sm:$0x3]
    %v2892 = vsel %vm398, %v2882, %v2879
    %v2894 = vsel %vm592, %v2892, 0
    %2896 = vmatprep.subr.mxu0 %v2237
    %2897 = vmatpush1.msra.mxu0 %v2236
    %2898 = vmatprep.subr.mxu0 %v2239
    %2899 = vmatpush1.msra.mxu0 %v2238
    %2900 = vmatprep.subr.mxu0 %v2241
    %2901 = vmatpush1.msra.mxu0 %v2240
    %2902 = vmatprep.subr.mxu0 %v2243
    %2903 = vmatpush1.msra.mxu0 %v2242
    %2904 = vmatprep.subr.mxu0 %v2245
    %2905 = vmatpush1.msra.mxu0 %v2244
    %2906 = vmatprep.subr.mxu0 %v2247
    %2907 = vmatpush1.msra.mxu0 %v2246
    %2908 = vmatprep.subr.mxu0 %v2249
    %2909 = vmatpush1.msra.mxu0 %v2248
    %2910 = vmatprep.subr.mxu0 %v2251
    %2911 = vmatpush1.msra.mxu0 %v2250
    %2912 = vmatprep.subr.mxu0 0.0
    %2913 = vmatpush1.msra.mxu0 0.0
    %2914 = vmatprep.subr.mxu0 0.0
    %2915 = vmatpush1.msra.mxu0 0.0
    %2916 = vmatprep.subr.mxu0 0.0
    %2917 = vmatpush1.msra.mxu0 0.0
    %2918 = vmatprep.subr.mxu0 0.0
    %2919 = vmatpush1.msra.mxu0 0.0
    %2920 = vmatprep.subr.mxu0 0.0
    %2921 = vmatpush1.msra.mxu0 0.0
    %2922 = vmatprep.subr.mxu0 0.0
    %2923 = vmatpush1.msra.mxu0 0.0
    %2924 = vmatprep.subr.mxu0 0.0
    %2925 = vmatpush1.msra.mxu0 0.0
    %2926 = vmatprep.subr.mxu0 0.0
    %2927 = vmatpush1.msra.mxu0 0.0
    %2928 = vmatprep.subr.mxu0 0.0
    %2929 = vmatpush1.msra.mxu0 0.0
    %2930 = vmatprep.subr.mxu0 0.0
    %2931 = vmatpush1.msra.mxu0 0.0
    %2932 = vmatprep.subr.mxu0 0.0
    %2933 = vmatpush1.msra.mxu0 0.0
    %2934 = vmatprep.subr.mxu0 0.0
    %2935 = vmatpush1.msra.mxu0 0.0
    %2936 = vmatprep.subr.mxu0 0.0
    %2937 = vmatpush1.msra.mxu0 0.0
    %2938 = vmatprep.subr.mxu0 0.0
    %2939 = vmatpush1.msra.mxu0 0.0
    %2940 = vmatprep.subr.mxu0 0.0
    %2941 = vmatpush1.msra.mxu0 0.0
    %2942 = vmatprep.subr.mxu0 0.0
    %2943 = vmatpush1.msra.mxu0 0.0
    %2944 = vmatprep.subr.mxu0 0.0
    %2945 = vmatpush1.msra.mxu0 0.0
    %2946 = vmatprep.subr.mxu0 0.0
    %2947 = vmatpush1.msra.mxu0 0.0
    %2948 = vmatprep.subr.mxu0 0.0
    %2949 = vmatpush1.msra.mxu0 0.0
    %2950 = vmatprep.subr.mxu0 0.0
    %2951 = vmatpush1.msra.mxu0 0.0
    %2952 = vmatprep.subr.mxu0 0.0
    %2953 = vmatpush1.msra.mxu0 0.0
    %2954 = vmatprep.subr.mxu0 0.0
    %2955 = vmatpush1.msra.mxu0 0.0
    %2956 = vmatprep.subr.mxu0 0.0
    %2957 = vmatpush1.msra.mxu0 0.0
    %2958 = vmatprep.subr.mxu0 0.0
    %2959 = vmatpush1.msra.mxu0 0.0
    %2960 = vmatprep.mubr.f32.mxu0 0.0
    %2961 = vmatmul.mubr.f32.gmra.mrb[0].mxu0 %v2894
    %v2962 = vpop.f32.mrb[0].mxu0
    %v2963 = vadd.f32 0.0, %v2962
    %v2964 = vpop.f32.mrb[0].mxu0
    %v2965 = vadd.f32 0.0, %v2964
    %2966 = vdwg.mxu0
    %v2967 = vadd.f32 %v2890, %v2963
    %v2968 = vxor.u32 %v2967, 2147483648
    %v2969 = vmul.f32 %v2968, 1.442695
    %v2970 = vpow.pop %v2969
    %v2971 = vadd.f32 %v2970, 1.0
    %v2972 = vrcp.pop %v2971
    %v2973 = vmul.f32 1.0, %v2972
    %v2974 = vadd.f32 %v2963, %v2340
    %2976 = vrot.lane.b32.xlu0 %v2974, 64
    %v2977 = vpop.permute.xlu0 %2976
    %v2979 = vmul.f32 %v2973, %v2977
    %2981 = vrot.lane.b32.xlu0 %v2979, 64
    %v2982 = vpop.permute.xlu0 %2981
    %v2984 = vadd.f32 %v2890, %v2982
    %v2985 = vtanh.pop %v2984
    %v2986 = vsub.f32 1.0, %v2973
    %2988 = vrot.lane.b32.xlu0 %v2985, 96
    %v2989 = vpop.permute.xlu0 %2988
    %v2991 = vmul.f32 %v2986, %v2989
    %v2992 = vmul.f32 %v2973, %v2837
    %v2993 = vadd.f32 %v2991, %v2992
    %2995 = vrot.lane.b32.xlu0 %v2963, 32
    %v2996 = vpop.permute.xlu0 %2995
    %v2998 = vadd.f32 %v2891, %v2996
    %v2999 = vxor.u32 %v2998, 2147483648
    %v3000 = vmul.f32 %v2999, 1.442695
    %v3001 = vpow.pop %v3000
    %v3002 = vadd.f32 %v3001, 1.0
    %v3003 = vrcp.pop %v3002
    %v3004 = vmul.f32 1.0, %v3003
    %3006 = vrot.lane.b32.xlu0 %v2965, 32
    %v3007 = vpop.permute.xlu0 %3006
    %v3009 = vadd.f32 %v2891, %v3007
    %v3010 = vxor.u32 %v3009, 2147483648
    %v3011 = vmul.f32 %v3010, 1.442695
    %v3012 = vpow.pop %v3011
    %v3013 = vadd.f32 %v3012, 1.0
    %v3014 = vrcp.pop %v3013
    %v3015 = vmul.f32 1.0, %v3014
    %v3016 = vadd.f32 %v2965, %v2390
    %3018 = vrot.lane.b32.xlu0 %v3016, 96
    %v3019 = vpop.permute.xlu0 %3018
    %v3021 = vmul.f32 %v3004, %v3019
    %3023 = vrot.lane.b32.xlu0 %v3021, 64
    %v3024 = vpop.permute.xlu0 %3023
    %v3026 = vadd.f32 %v2891, %v3024
    %v3027 = vtanh.pop %v3026
    %v3028 = vsub.f32 1.0, %v3015
    %3030 = vrot.lane.b32.xlu0 %v3027, 96
    %v3031 = vpop.permute.xlu0 %3030
    %v3033 = vmul.f32 %v3028, %v3031
    %v3034 = vmul.f32 %v3015, %v2879
    %v3035 = vadd.f32 %v3033, %v3034
    %3037 = vrot.lane.b32.xlu0 %v2993, 96
    %v3038 = vpop.permute.xlu0 %3037
    %3040 = vst.msk [vmem:[%s1396] sm:$0x3] %vm756, %v3038
    %3042 = vrot.lane.b32.xlu0 %v3035, 96
    %v3043 = vpop.permute.xlu0 %3042
    %3045 = vst.msk [vmem:[%s1402] sm:$0x3] %vm756, %v3043
    %v3046 = vld [vmem:[%s1404] sm:$0x3]
    %v3047 = vld [vmem:[%s1406] sm:$0x3]
    %v3048 = vsel %vm398, %v3038, %v3035
    %v3050 = vsel %vm592, %v3048, 0
    %3052 = vmatprep.subr.mxu0 %v2237
    %3053 = vmatpush1.msra.mxu0 %v2236
    %3054 = vmatprep.subr.mxu0 %v2239
    %3055 = vmatpush1.msra.mxu0 %v2238
    %3056 = vmatprep.subr.mxu0 %v2241
    %3057 = vmatpush1.msra.mxu0 %v2240
    %3058 = vmatprep.subr.mxu0 %v2243
    %3059 = vmatpush1.msra.mxu0 %v2242
    %3060 = vmatprep.subr.mxu0 %v2245
    %3061 = vmatpush1.msra.mxu0 %v2244
    %3062 = vmatprep.subr.mxu0 %v2247
    %3063 = vmatpush1.msra.mxu0 %v2246
    %3064 = vmatprep.subr.mxu0 %v2249
    %3065 = vmatpush1.msra.mxu0 %v2248
    %3066 = vmatprep.subr.mxu0 %v2251
    %3067 = vmatpush1.msra.mxu0 %v2250
    %3068 = vmatprep.subr.mxu0 0.0
    %3069 = vmatpush1.msra.mxu0 0.0
    %3070 = vmatprep.subr.mxu0 0.0
    %3071 = vmatpush1.msra.mxu0 0.0
    %3072 = vmatprep.subr.mxu0 0.0
    %3073 = vmatpush1.msra.mxu0 0.0
    %3074 = vmatprep.subr.mxu0 0.0
    %3075 = vmatpush1.msra.mxu0 0.0
    %3076 = vmatprep.subr.mxu0 0.0
    %3077 = vmatpush1.msra.mxu0 0.0
    %3078 = vmatprep.subr.mxu0 0.0
    %3079 = vmatpush1.msra.mxu0 0.0
    %3080 = vmatprep.subr.mxu0 0.0
    %3081 = vmatpush1.msra.mxu0 0.0
    %3082 = vmatprep.subr.mxu0 0.0
    %3083 = vmatpush1.msra.mxu0 0.0
    %3084 = vmatprep.subr.mxu0 0.0
    %3085 = vmatpush1.msra.mxu0 0.0
    %3086 = vmatprep.subr.mxu0 0.0
    %3087 = vmatpush1.msra.mxu0 0.0
    %3088 = vmatprep.subr.mxu0 0.0
    %3089 = vmatpush1.msra.mxu0 0.0
    %3090 = vmatprep.subr.mxu0 0.0
    %3091 = vmatpush1.msra.mxu0 0.0
    %3092 = vmatprep.subr.mxu0 0.0
    %3093 = vmatpush1.msra.mxu0 0.0
    %3094 = vmatprep.subr.mxu0 0.0
    %3095 = vmatpush1.msra.mxu0 0.0
    %3096 = vmatprep.subr.mxu0 0.0
    %3097 = vmatpush1.msra.mxu0 0.0
    %3098 = vmatprep.subr.mxu0 0.0
    %3099 = vmatpush1.msra.mxu0 0.0
    %3100 = vmatprep.subr.mxu0 0.0
    %3101 = vmatpush1.msra.mxu0 0.0
    %3102 = vmatprep.subr.mxu0 0.0
    %3103 = vmatpush1.msra.mxu0 0.0
    %3104 = vmatprep.subr.mxu0 0.0
    %3105 = vmatpush1.msra.mxu0 0.0
    %3106 = vmatprep.subr.mxu0 0.0
    %3107 = vmatpush1.msra.mxu0 0.0
    %3108 = vmatprep.subr.mxu0 0.0
    %3109 = vmatpush1.msra.mxu0 0.0
    %3110 = vmatprep.subr.mxu0 0.0
    %3111 = vmatpush1.msra.mxu0 0.0
    %3112 = vmatprep.subr.mxu0 0.0
    %3113 = vmatpush1.msra.mxu0 0.0
    %3114 = vmatprep.subr.mxu0 0.0
    %3115 = vmatpush1.msra.mxu0 0.0
    %3116 = vmatprep.mubr.f32.mxu0 0.0
    %3117 = vmatmul.mubr.f32.gmra.mrb[0].mxu0 %v3050
    %v3118 = vpop.f32.mrb[0].mxu0
    %v3119 = vadd.f32 0.0, %v3118
    %v3120 = vpop.f32.mrb[0].mxu0
    %v3121 = vadd.f32 0.0, %v3120
    %3122 = vdwg.mxu0
    %v3123 = vadd.f32 %v3046, %v3119
    %v3124 = vxor.u32 %v3123, 2147483648
    %v3125 = vmul.f32 %v3124, 1.442695
    %v3126 = vpow.pop %v3125
    %v3127 = vadd.f32 %v3126, 1.0
    %v3128 = vrcp.pop %v3127
    %v3129 = vmul.f32 1.0, %v3128
    %v3130 = vadd.f32 %v3119, %v2340
    %3132 = vrot.lane.b32.xlu0 %v3130, 64
    %v3133 = vpop.permute.xlu0 %3132
    %v3135 = vmul.f32 %v3129, %v3133
    %3137 = vrot.lane.b32.xlu0 %v3135, 64
    %v3138 = vpop.permute.xlu0 %3137
    %v3140 = vadd.f32 %v3046, %v3138
    %v3141 = vtanh.pop %v3140
    %v3142 = vsub.f32 1.0, %v3129
    %3144 = vrot.lane.b32.xlu0 %v3141, 96
    %v3145 = vpop.permute.xlu0 %3144
    %v3147 = vmul.f32 %v3142, %v3145
    %v3148 = vmul.f32 %v3129, %v2993
    %v3149 = vadd.f32 %v3147, %v3148
    %3151 = vrot.lane.b32.xlu0 %v3119, 32
    %v3152 = vpop.permute.xlu0 %3151
    %v3154 = vadd.f32 %v3047, %v3152
    %v3155 = vxor.u32 %v3154, 2147483648
    %v3156 = vmul.f32 %v3155, 1.442695
    %v3157 = vpow.pop %v3156
    %v3158 = vadd.f32 %v3157, 1.0
    %v3159 = vrcp.pop %v3158
    %v3160 = vmul.f32 1.0, %v3159
    %3162 = vrot.lane.b32.xlu0 %v3121, 32
    %v3163 = vpop.permute.xlu0 %3162
    %v3165 = vadd.f32 %v3047, %v3163
    %v3166 = vxor.u32 %v3165, 2147483648
    %v3167 = vmul.f32 %v3166, 1.442695
    %v3168 = vpow.pop %v3167
    %v3169 = vadd.f32 %v3168, 1.0
    %v3170 = vrcp.pop %v3169
    %v3171 = vmul.f32 1.0, %v3170
    %v3172 = vadd.f32 %v3121, %v2390
    %3174 = vrot.lane.b32.xlu0 %v3172, 96
    %v3175 = vpop.permute.xlu0 %3174
    %v3177 = vmul.f32 %v3160, %v3175
    %3179 = vrot.lane.b32.xlu0 %v3177, 64
    %v3180 = vpop.permute.xlu0 %3179
    %v3182 = vadd.f32 %v3047, %v3180
    %v3183 = vtanh.pop %v3182
    %v3184 = vsub.f32 1.0, %v3171
    %3186 = vrot.lane.b32.xlu0 %v3183, 96
    %v3187 = vpop.permute.xlu0 %3186
    %v3189 = vmul.f32 %v3184, %v3187
    %v3190 = vmul.f32 %v3171, %v3035
    %v3191 = vadd.f32 %v3189, %v3190
    %3193 = vrot.lane.b32.xlu0 %v3149, 96
    %v3194 = vpop.permute.xlu0 %3193
    %3196 = vst.msk [vmem:[%s1556] sm:$0x3] %vm756, %v3194
    %3198 = vrot.lane.b32.xlu0 %v3191, 96
    %v3199 = vpop.permute.xlu0 %3198
    %3201 = vst.msk [vmem:[%s1562] sm:$0x3] %vm756, %v3199
    %v3202 = vld [vmem:[%s1564] sm:$0x3]
    %v3203 = vld [vmem:[%s1566] sm:$0x3]
    %v3204 = vsel %vm398, %v3194, %v3191
    %v3206 = vsel %vm592, %v3204, 0
    %3208 = vmatprep.subr.mxu0 %v2237
    %3209 = vmatpush1.msra.mxu0 %v2236
    %3210 = vmatprep.subr.mxu0 %v2239
    %3211 = vmatpush1.msra.mxu0 %v2238
    %3212 = vmatprep.subr.mxu0 %v2241
    %3213 = vmatpush1.msra.mxu0 %v2240
    %3214 = vmatprep.subr.mxu0 %v2243
    %3215 = vmatpush1.msra.mxu0 %v2242
    %3216 = vmatprep.subr.mxu0 %v2245
    %3217 = vmatpush1.msra.mxu0 %v2244
    %3218 = vmatprep.subr.mxu0 %v2247
    %3219 = vmatpush1.msra.mxu0 %v2246
    %3220 = vmatprep.subr.mxu0 %v2249
    %3221 = vmatpush1.msra.mxu0 %v2248
    %3222 = vmatprep.subr.mxu0 %v2251
    %3223 = vmatpush1.msra.mxu0 %v2250
    %3224 = vmatprep.subr.mxu0 0.0
    %3225 = vmatpush1.msra.mxu0 0.0
    %3226 = vmatprep.subr.mxu0 0.0
    %3227 = vmatpush1.msra.mxu0 0.0
    %3228 = vmatprep.subr.mxu0 0.0
    %3229 = vmatpush1.msra.mxu0 0.0
    %3230 = vmatprep.subr.mxu0 0.0
    %3231 = vmatpush1.msra.mxu0 0.0
    %3232 = vmatprep.subr.mxu0 0.0
    %3233 = vmatpush1.msra.mxu0 0.0
    %3234 = vmatprep.subr.mxu0 0.0
    %3235 = vmatpush1.msra.mxu0 0.0
    %3236 = vmatprep.subr.mxu0 0.0
    %3237 = vmatpush1.msra.mxu0 0.0
    %3238 = vmatprep.subr.mxu0 0.0
    %3239 = vmatpush1.msra.mxu0 0.0
    %3240 = vmatprep.subr.mxu0 0.0
    %3241 = vmatpush1.msra.mxu0 0.0
    %3242 = vmatprep.subr.mxu0 0.0
    %3243 = vmatpush1.msra.mxu0 0.0
    %3244 = vmatprep.subr.mxu0 0.0
    %3245 = vmatpush1.msra.mxu0 0.0
    %3246 = vmatprep.subr.mxu0 0.0
    %3247 = vmatpush1.msra.mxu0 0.0
    %3248 = vmatprep.subr.mxu0 0.0
    %3249 = vmatpush1.msra.mxu0 0.0
    %3250 = vmatprep.subr.mxu0 0.0
    %3251 = vmatpush1.msra.mxu0 0.0
    %3252 = vmatprep.subr.mxu0 0.0
    %3253 = vmatpush1.msra.mxu0 0.0
    %3254 = vmatprep.subr.mxu0 0.0
    %3255 = vmatpush1.msra.mxu0 0.0
    %3256 = vmatprep.subr.mxu0 0.0
    %3257 = vmatpush1.msra.mxu0 0.0
    %3258 = vmatprep.subr.mxu0 0.0
    %3259 = vmatpush1.msra.mxu0 0.0
    %3260 = vmatprep.subr.mxu0 0.0
    %3261 = vmatpush1.msra.mxu0 0.0
    %3262 = vmatprep.subr.mxu0 0.0
    %3263 = vmatpush1.msra.mxu0 0.0
    %3264 = vmatprep.subr.mxu0 0.0
    %3265 = vmatpush1.msra.mxu0 0.0
    %3266 = vmatprep.subr.mxu0 0.0
    %3267 = vmatpush1.msra.mxu0 0.0
    %3268 = vmatprep.subr.mxu0 0.0
    %3269 = vmatpush1.msra.mxu0 0.0
    %3270 = vmatprep.subr.mxu0 0.0
    %3271 = vmatpush1.msra.mxu0 0.0
    %3272 = vmatprep.mubr.f32.mxu0 0.0
    %3273 = vmatmul.mubr.f32.gmra.mrb[0].mxu0 %v3206
    %v3274 = vpop.f32.mrb[0].mxu0
    %v3275 = vadd.f32 0.0, %v3274
    %v3276 = vpop.f32.mrb[0].mxu0
    %v3277 = vadd.f32 0.0, %v3276
    %3278 = vdwg.mxu0
    %v3279 = vadd.f32 %v3202, %v3275
    %v3280 = vxor.u32 %v3279, 2147483648
    %v3281 = vmul.f32 %v3280, 1.442695
    %v3282 = vpow.pop %v3281
    %v3283 = vadd.f32 %v3282, 1.0
    %v3284 = vrcp.pop %v3283
    %v3285 = vmul.f32 1.0, %v3284
    %v3286 = vadd.f32 %v3275, %v2340
    %3288 = vrot.lane.b32.xlu0 %v3286, 64
    %v3289 = vpop.permute.xlu0 %3288
    %v3291 = vmul.f32 %v3285, %v3289
    %3293 = vrot.lane.b32.xlu0 %v3291, 64
    %v3294 = vpop.permute.xlu0 %3293
    %v3296 = vadd.f32 %v3202, %v3294
    %v3297 = vtanh.pop %v3296
    %v3298 = vsub.f32 1.0, %v3285
    %3300 = vrot.lane.b32.xlu0 %v3297, 96
    %v3301 = vpop.permute.xlu0 %3300
    %v3303 = vmul.f32 %v3298, %v3301
    %v3304 = vmul.f32 %v3285, %v3149
    %v3305 = vadd.f32 %v3303, %v3304
    %3307 = vrot.lane.b32.xlu0 %v3275, 32
    %v3308 = vpop.permute.xlu0 %3307
    %v3310 = vadd.f32 %v3203, %v3308
    %v3311 = vxor.u32 %v3310, 2147483648
    %v3312 = vmul.f32 %v3311, 1.442695
    %v3313 = vpow.pop %v3312
    %v3314 = vadd.f32 %v3313, 1.0
    %v3315 = vrcp.pop %v3314
    %v3316 = vmul.f32 1.0, %v3315
    %3318 = vrot.lane.b32.xlu0 %v3277, 32
    %v3319 = vpop.permute.xlu0 %3318
    %v3321 = vadd.f32 %v3203, %v3319
    %v3322 = vxor.u32 %v3321, 2147483648
    %v3323 = vmul.f32 %v3322, 1.442695
    %v3324 = vpow.pop %v3323
    %v3325 = vadd.f32 %v3324, 1.0
    %v3326 = vrcp.pop %v3325
    %v3327 = vmul.f32 1.0, %v3326
    %v3328 = vadd.f32 %v3277, %v2390
    %3330 = vrot.lane.b32.xlu0 %v3328, 96
    %v3331 = vpop.permute.xlu0 %3330
    %v3333 = vmul.f32 %v3316, %v3331
    %3335 = vrot.lane.b32.xlu0 %v3333, 64
    %v3336 = vpop.permute.xlu0 %3335
    %v3338 = vadd.f32 %v3203, %v3336
    %v3339 = vtanh.pop %v3338
    %v3340 = vsub.f32 1.0, %v3327
    %3342 = vrot.lane.b32.xlu0 %v3339, 96
    %v3343 = vpop.permute.xlu0 %3342
    %v3345 = vmul.f32 %v3340, %v3343
    %v3346 = vmul.f32 %v3327, %v3191
    %v3347 = vadd.f32 %v3345, %v3346
    %3349 = vrot.lane.b32.xlu0 %v3305, 96
    %v3350 = vpop.permute.xlu0 %3349
    %3352 = vst.msk [vmem:[%s1716] sm:$0x3] %vm756, %v3350
    %3354 = vrot.lane.b32.xlu0 %v3347, 96
    %v3355 = vpop.permute.xlu0 %3354
    %3357 = vst.msk [vmem:[%s1722] sm:$0x3] %vm756, %v3355
    %v3358 = vld [vmem:[%s1724] sm:$0x3]
    %v3359 = vld [vmem:[#allocation3] sm:$0x3]
    %v3360 = vsel %vm398, %v3350, %v3347
    %v3362 = vsel %vm592, %v3360, 0
    %3364 = vmatprep.subr.mxu0 %v2237
    %3365 = vmatpush1.msra.mxu0 %v2236
    %3366 = vmatprep.subr.mxu0 %v2239
    %3367 = vmatpush1.msra.mxu0 %v2238
    %3368 = vmatprep.subr.mxu0 %v2241
    %3369 = vmatpush1.msra.mxu0 %v2240
    %3370 = vmatprep.subr.mxu0 %v2243
    %3371 = vmatpush1.msra.mxu0 %v2242
    %3372 = vmatprep.subr.mxu0 %v2245
    %3373 = vmatpush1.msra.mxu0 %v2244
    %3374 = vmatprep.subr.mxu0 %v2247
    %3375 = vmatpush1.msra.mxu0 %v2246
    %3376 = vmatprep.subr.mxu0 %v2249
    %3377 = vmatpush1.msra.mxu0 %v2248
    %3378 = vmatprep.subr.mxu0 %v2251
    %3379 = vmatpush1.msra.mxu0 %v2250
    %3380 = vmatprep.subr.mxu0 0.0
    %3381 = vmatpush1.msra.mxu0 0.0
    %3382 = vmatprep.subr.mxu0 0.0
    %3383 = vmatpush1.msra.mxu0 0.0
    %3384 = vmatprep.subr.mxu0 0.0
    %3385 = vmatpush1.msra.mxu0 0.0
    %3386 = vmatprep.subr.mxu0 0.0
    %3387 = vmatpush1.msra.mxu0 0.0
    %3388 = vmatprep.subr.mxu0 0.0
    %3389 = vmatpush1.msra.mxu0 0.0
    %3390 = vmatprep.subr.mxu0 0.0
    %3391 = vmatpush1.msra.mxu0 0.0
    %3392 = vmatprep.subr.mxu0 0.0
    %3393 = vmatpush1.msra.mxu0 0.0
    %3394 = vmatprep.subr.mxu0 0.0
    %3395 = vmatpush1.msra.mxu0 0.0
    %3396 = vmatprep.subr.mxu0 0.0
    %3397 = vmatpush1.msra.mxu0 0.0
    %3398 = vmatprep.subr.mxu0 0.0
    %3399 = vmatpush1.msra.mxu0 0.0
    %3400 = vmatprep.subr.mxu0 0.0
    %3401 = vmatpush1.msra.mxu0 0.0
    %3402 = vmatprep.subr.mxu0 0.0
    %3403 = vmatpush1.msra.mxu0 0.0
    %3404 = vmatprep.subr.mxu0 0.0
    %3405 = vmatpush1.msra.mxu0 0.0
    %3406 = vmatprep.subr.mxu0 0.0
    %3407 = vmatpush1.msra.mxu0 0.0
    %3408 = vmatprep.subr.mxu0 0.0
    %3409 = vmatpush1.msra.mxu0 0.0
    %3410 = vmatprep.subr.mxu0 0.0
    %3411 = vmatpush1.msra.mxu0 0.0
    %3412 = vmatprep.subr.mxu0 0.0
    %3413 = vmatpush1.msra.mxu0 0.0
    %3414 = vmatprep.subr.mxu0 0.0
    %3415 = vmatpush1.msra.mxu0 0.0
    %3416 = vmatprep.subr.mxu0 0.0
    %3417 = vmatpush1.msra.mxu0 0.0
    %3418 = vmatprep.subr.mxu0 0.0
    %3419 = vmatpush1.msra.mxu0 0.0
    %3420 = vmatprep.subr.mxu0 0.0
    %3421 = vmatpush1.msra.mxu0 0.0
    %3422 = vmatprep.subr.mxu0 0.0
    %3423 = vmatpush1.msra.mxu0 0.0
    %3424 = vmatprep.subr.mxu0 0.0
    %3425 = vmatpush1.msra.mxu0 0.0
    %3426 = vmatprep.subr.mxu0 0.0
    %3427 = vmatpush1.msra.mxu0 0.0
    %3428 = vmatprep.mubr.f32.mxu0 0.0
    %3429 = vmatmul.mubr.f32.gmra.mrb[0].mxu0 %v3362
    %v3430 = vpop.f32.mrb[0].mxu0
    %v3431 = vadd.f32 0.0, %v3430
    %v3432 = vpop.f32.mrb[0].mxu0
    %v3433 = vadd.f32 0.0, %v3432
    %3434 = vdwg.mxu0
    %v3435 = vadd.f32 %v3358, %v3431
    %v3436 = vxor.u32 %v3435, 2147483648
    %v3437 = vmul.f32 %v3436, 1.442695
    %v3438 = vpow.pop %v3437
    %v3439 = vadd.f32 %v3438, 1.0
    %v3440 = vrcp.pop %v3439
    %v3441 = vmul.f32 1.0, %v3440
    %v3442 = vadd.f32 %v3431, %v2340
    %3444 = vrot.lane.b32.xlu0 %v3442, 64
    %v3445 = vpop.permute.xlu0 %3444
    %v3447 = vmul.f32 %v3441, %v3445
    %3449 = vrot.lane.b32.xlu0 %v3447, 64
    %v3450 = vpop.permute.xlu0 %3449
    %v3452 = vadd.f32 %v3358, %v3450
    %v3453 = vtanh.pop %v3452
    %v3454 = vsub.f32 1.0, %v3441
    %3456 = vrot.lane.b32.xlu0 %v3453, 96
    %v3457 = vpop.permute.xlu0 %3456
    %v3459 = vmul.f32 %v3454, %v3457
    %v3460 = vmul.f32 %v3441, %v3305
    %v3461 = vadd.f32 %v3459, %v3460
    %3463 = vrot.lane.b32.xlu0 %v3431, 32
    %v3464 = vpop.permute.xlu0 %3463
    %v3466 = vadd.f32 %v3359, %v3464
    %v3467 = vxor.u32 %v3466, 2147483648
    %v3468 = vmul.f32 %v3467, 1.442695
    %v3469 = vpow.pop %v3468
    %v3470 = vadd.f32 %v3469, 1.0
    %v3471 = vrcp.pop %v3470
    %v3472 = vmul.f32 1.0, %v3471
    %3474 = vrot.lane.b32.xlu0 %v3433, 32
    %v3475 = vpop.permute.xlu0 %3474
    %v3477 = vadd.f32 %v3359, %v3475
    %v3478 = vxor.u32 %v3477, 2147483648
    %v3479 = vmul.f32 %v3478, 1.442695
    %v3480 = vpow.pop %v3479
    %v3481 = vadd.f32 %v3480, 1.0
    %v3482 = vrcp.pop %v3481
    %v3483 = vmul.f32 1.0, %v3482
    %v3484 = vadd.f32 %v3433, %v2390
    %3486 = vrot.lane.b32.xlu0 %v3484, 96
    %v3487 = vpop.permute.xlu0 %3486
    %v3489 = vmul.f32 %v3472, %v3487
    %3491 = vrot.lane.b32.xlu0 %v3489, 64
    %v3492 = vpop.permute.xlu0 %3491
    %v3494 = vadd.f32 %v3359, %v3492
    %v3495 = vtanh.pop %v3494
    %v3496 = vsub.f32 1.0, %v3483
    %3498 = vrot.lane.b32.xlu0 %v3495, 96
    %v3499 = vpop.permute.xlu0 %3498
    %v3501 = vmul.f32 %v3496, %v3499
    %v3502 = vmul.f32 %v3483, %v3347
    %v3503 = vadd.f32 %v3501, %v3502
    %3505 = vrot.lane.b32.xlu0 %v3461, 96
    %v3506 = vpop.permute.xlu0 %3505
    %3508 = vst.msk [vmem:[%s1875] sm:$0x3] %vm756, %v3506
    %3510 = vrot.lane.b32.xlu0 %v3503, 96
    %v3511 = vpop.permute.xlu0 %3510
    %3513 = vst.msk [vmem:[#allocation5] sm:$0x3] %vm756, %v3511
    %v3514 = vld [vmem:[#allocation4] sm:$0xff]
    %v3515 = vld [vmem:[#allocation4 + $0x8] sm:$0xff]
    %v3516 = vld [vmem:[%s19] sm:$0xff]
    %v3517 = vld [vmem:[%s19 + $0x8] sm:$0xff]
    %v3518 = vld [vmem:[%s19 + $0x10] sm:$0xff]
    %v3519 = vld [vmem:[%s19 + $0x18] sm:$0xff]
    %v3520 = vld [vmem:[#allocation5] sm:$0xff]
    %v3521 = vld [vmem:[#allocation5 + $0x8] sm:$0xff]
    %v3522 = vld [vmem:[%s20] sm:$0xff]
    %v3523 = vld [vmem:[%s20 + $0x8] sm:$0xff]
    %v3524 = vld [vmem:[%s20 + $0x10] sm:$0xff]
    %v3525 = vld [vmem:[%s20 + $0x18] sm:$0xff]
    %v3527 = vsel %vm398, %v3520, 0
    %v3530 = vsel %vm398, %v3521, 0
    %3532 = vmatprep.subr.mxu0 0.0
    %3533 = vmatpush1.msra.mxu0 %v3522
    %3534 = vmatprep.subr.mxu0 0.0
    %3535 = vmatpush1.msra.mxu0 %v3523
    %3536 = vmatprep.subr.mxu0 0.0
    %3537 = vmatpush1.msra.mxu0 %v3524
    %3538 = vmatprep.subr.mxu0 0.0
    %3539 = vmatpush1.msra.mxu0 %v3525
    %3540 = vmatprep.subr.mxu0 0.0
    %3541 = vmatpush1.msra.mxu0 0.0
    %3542 = vmatprep.subr.mxu0 0.0
    %3543 = vmatpush1.msra.mxu0 0.0
    %3544 = vmatprep.subr.mxu0 0.0
    %3545 = vmatpush1.msra.mxu0 0.0
    %3546 = vmatprep.subr.mxu0 0.0
    %3547 = vmatpush1.msra.mxu0 0.0
    %3548 = vmatprep.subr.mxu0 0.0
    %3549 = vmatpush1.msra.mxu0 0.0
    %3550 = vmatprep.subr.mxu0 0.0
    %3551 = vmatpush1.msra.mxu0 0.0
    %3552 = vmatprep.subr.mxu0 0.0
    %3553 = vmatpush1.msra.mxu0 0.0
    %3554 = vmatprep.subr.mxu0 0.0
    %3555 = vmatpush1.msra.mxu0 0.0
    %3556 = vmatprep.subr.mxu0 0.0
    %3557 = vmatpush1.msra.mxu0 0.0
    %3558 = vmatprep.subr.mxu0 0.0
    %3559 = vmatpush1.msra.mxu0 0.0
    %3560 = vmatprep.subr.mxu0 0.0
    %3561 = vmatpush1.msra.mxu0 0.0
    %3562 = vmatprep.subr.mxu0 0.0
    %3563 = vmatpush1.msra.mxu0 0.0
    %3564 = vmatprep.subr.mxu0 0.0
    %3565 = vmatpush1.msra.mxu0 0.0
    %3566 = vmatprep.subr.mxu0 0.0
    %3567 = vmatpush1.msra.mxu0 0.0
    %3568 = vmatprep.subr.mxu0 0.0
    %3569 = vmatpush1.msra.mxu0 0.0
    %3570 = vmatprep.subr.mxu0 0.0
    %3571 = vmatpush1.msra.mxu0 0.0
    %3572 = vmatprep.subr.mxu0 0.0
    %3573 = vmatpush1.msra.mxu0 0.0
    %3574 = vmatprep.subr.mxu0 0.0
    %3575 = vmatpush1.msra.mxu0 0.0
    %3576 = vmatprep.subr.mxu0 0.0
    %3577 = vmatpush1.msra.mxu0 0.0
    %3578 = vmatprep.subr.mxu0 0.0
    %3579 = vmatpush1.msra.mxu0 0.0
    %3580 = vmatprep.subr.mxu0 0.0
    %3581 = vmatpush1.msra.mxu0 0.0
    %3582 = vmatprep.subr.mxu0 0.0
    %3583 = vmatpush1.msra.mxu0 0.0
    %3584 = vmatprep.subr.mxu0 0.0
    %3585 = vmatpush1.msra.mxu0 0.0
    %3586 = vmatprep.subr.mxu0 0.0
    %3587 = vmatpush1.msra.mxu0 0.0
    %3588 = vmatprep.subr.mxu0 0.0
    %3589 = vmatpush1.msra.mxu0 0.0
    %3590 = vmatprep.subr.mxu0 0.0
    %3591 = vmatpush1.msra.mxu0 0.0
    %3592 = vmatprep.subr.mxu0 0.0
    %3593 = vmatpush1.msra.mxu0 0.0
    %3594 = vmatprep.subr.mxu0 0.0
    %3595 = vmatpush1.msra.mxu0 0.0
    %3596 = vmatprep.mubr.f32.mxu0 0.0
    %3597 = vmatmul.mubr.f32.gmra.mrb[0].mxu0 %v3527
    %v3598 = vpop.f32.mrb[0].mxu0
    %v3599 = vadd.f32 0.0, %v3598
    %v3600 = vpop.f32.mrb[0].mxu0
    %3601 = vmatprep.mubr.f32.mxu0 0.0
    %3602 = vmatmul.mubr.f32.gmra.mrb[0].mxu0 %v3530
    %v3603 = vpop.f32.mrb[0].mxu0
    %v3604 = vadd.f32 0.0, %v3603
    %v3605 = vpop.f32.mrb[0].mxu0
    %3606 = vdwg.mxu0
    %v3608 = vsel %vm398, %v3514, 0
    %v3611 = vsel %vm398, %v3515, 0
    %3613 = vmatprep.subr.mxu0 0.0
    %3614 = vmatpush1.msra.mxu0 %v3516
    %3615 = vmatprep.subr.mxu0 0.0
    %3616 = vmatpush1.msra.mxu0 %v3517
    %3617 = vmatprep.subr.mxu0 0.0
    %3618 = vmatpush1.msra.mxu0 %v3518
    %3619 = vmatprep.subr.mxu0 0.0
    %3620 = vmatpush1.msra.mxu0 %v3519
    %3621 = vmatprep.subr.mxu0 0.0
    %3622 = vmatpush1.msra.mxu0 0.0
    %3623 = vmatprep.subr.mxu0 0.0
    %3624 = vmatpush1.msra.mxu0 0.0
    %3625 = vmatprep.subr.mxu0 0.0
    %3626 = vmatpush1.msra.mxu0 0.0
    %3627 = vmatprep.subr.mxu0 0.0
    %3628 = vmatpush1.msra.mxu0 0.0
    %3629 = vmatprep.subr.mxu0 0.0
    %3630 = vmatpush1.msra.mxu0 0.0
    %3631 = vmatprep.subr.mxu0 0.0
    %3632 = vmatpush1.msra.mxu0 0.0
    %3633 = vmatprep.subr.mxu0 0.0
    %3634 = vmatpush1.msra.mxu0 0.0
    %3635 = vmatprep.subr.mxu0 0.0
    %3636 = vmatpush1.msra.mxu0 0.0
    %3637 = vmatprep.subr.mxu0 0.0
    %3638 = vmatpush1.msra.mxu0 0.0
    %3639 = vmatprep.subr.mxu0 0.0
    %3640 = vmatpush1.msra.mxu0 0.0
    %3641 = vmatprep.subr.mxu0 0.0
    %3642 = vmatpush1.msra.mxu0 0.0
    %3643 = vmatprep.subr.mxu0 0.0
    %3644 = vmatpush1.msra.mxu0 0.0
    %3645 = vmatprep.subr.mxu0 0.0
    %3646 = vmatpush1.msra.mxu0 0.0
    %3647 = vmatprep.subr.mxu0 0.0
    %3648 = vmatpush1.msra.mxu0 0.0
    %3649 = vmatprep.subr.mxu0 0.0
    %3650 = vmatpush1.msra.mxu0 0.0
    %3651 = vmatprep.subr.mxu0 0.0
    %3652 = vmatpush1.msra.mxu0 0.0
    %3653 = vmatprep.subr.mxu0 0.0
    %3654 = vmatpush1.msra.mxu0 0.0
    %3655 = vmatprep.subr.mxu0 0.0
    %3656 = vmatpush1.msra.mxu0 0.0
    %3657 = vmatprep.subr.mxu0 0.0
    %3658 = vmatpush1.msra.mxu0 0.0
    %3659 = vmatprep.subr.mxu0 0.0
    %3660 = vmatpush1.msra.mxu0 0.0
    %3661 = vmatprep.subr.mxu0 0.0
    %3662 = vmatpush1.msra.mxu0 0.0
    %3663 = vmatprep.subr.mxu0 0.0
    %3664 = vmatpush1.msra.mxu0 0.0
    %3665 = vmatprep.subr.mxu0 0.0
    %3666 = vmatpush1.msra.mxu0 0.0
    %3667 = vmatprep.subr.mxu0 0.0
    %3668 = vmatpush1.msra.mxu0 0.0
    %3669 = vmatprep.subr.mxu0 0.0
    %3670 = vmatpush1.msra.mxu0 0.0
    %3671 = vmatprep.subr.mxu0 0.0
    %3672 = vmatpush1.msra.mxu0 0.0
    %3673 = vmatprep.subr.mxu0 0.0
    %3674 = vmatpush1.msra.mxu0 0.0
    %3675 = vmatprep.subr.mxu0 0.0
    %3676 = vmatpush1.msra.mxu0 0.0
    %3677 = vmatprep.mubr.f32.mxu0 0.0
    %3678 = vmatmul.mubr.f32.gmra.mrb[0].mxu0 %v3608
    %v3679 = vpop.f32.mrb[0].mxu0
    %v3680 = vadd.f32 %v3599, %v3679
    %v3681 = vpop.f32.mrb[0].mxu0
    %3682 = vmatprep.mubr.f32.mxu0 0.0
    %3683 = vmatmul.mubr.f32.gmra.mrb[0].mxu0 %v3611
    %v3684 = vpop.f32.mrb[0].mxu0
    %v3685 = vadd.f32 %v3604, %v3684
    %v3686 = vpop.f32.mrb[0].mxu0
    %3687 = vdwg.mxu0
    %v3688 = vld [vmem:[%s21] sm:$0x1]
    %v3690 = vlaneseq
    %v3691 = vshrl.u32 %v3690, 7
    %v3692 = vsub.s32 0, %v3691
    %v3693 = vrot.slane %v3688, %v3692
    %v3695 = vadd.f32 %v3680, %v3693
    %v3696 = vadd.f32 %v3685, %v3693
    %v3697 = vmax.f32 %v3695, 0.0
    %v3698 = vmax.f32 %v3696, 0.0
    %v3699 = vld [vmem:[%s22] sm:$0xff]
    %v3700 = vld [vmem:[%s22 + $0x8] sm:$0xff]
    %v3701 = vld [vmem:[%s22 + $0x10] sm:$0xff]
    %v3702 = vld [vmem:[%s22 + $0x18] sm:$0xff]
    %v3703 = vld [vmem:[%s23] sm:$0x1]
    %v3705 = vlaneseq
    %v3706 = vshrl.u32 %v3705, 7
    %v3707 = vsub.s32 0, %v3706
    %v3708 = vrot.slane %v3703, %v3707
    %v3711 = vsel %vm398, %v3697, 0
    %v3714 = vsel %vm398, %v3698, 0
    %3716 = vmatprep.subr.mxu0 0.0
    %3717 = vmatpush1.msra.mxu0 %v3699
    %3718 = vmatprep.subr.mxu0 0.0
    %3719 = vmatpush1.msra.mxu0 %v3700
    %3720 = vmatprep.subr.mxu0 0.0
    %3721 = vmatpush1.msra.mxu0 %v3701
    %3722 = vmatprep.subr.mxu0 0.0
    %3723 = vmatpush1.msra.mxu0 %v3702
    %3724 = vmatprep.subr.mxu0 0.0
    %3725 = vmatpush1.msra.mxu0 0.0
    %3726 = vmatprep.subr.mxu0 0.0
    %3727 = vmatpush1.msra.mxu0 0.0
    %3728 = vmatprep.subr.mxu0 0.0
    %3729 = vmatpush1.msra.mxu0 0.0
    %3730 = vmatprep.subr.mxu0 0.0
    %3731 = vmatpush1.msra.mxu0 0.0
    %3732 = vmatprep.subr.mxu0 0.0
    %3733 = vmatpush1.msra.mxu0 0.0
    %3734 = vmatprep.subr.mxu0 0.0
    %3735 = vmatpush1.msra.mxu0 0.0
    %3736 = vmatprep.subr.mxu0 0.0
    %3737 = vmatpush1.msra.mxu0 0.0
    %3738 = vmatprep.subr.mxu0 0.0
    %3739 = vmatpush1.msra.mxu0 0.0
    %3740 = vmatprep.subr.mxu0 0.0
    %3741 = vmatpush1.msra.mxu0 0.0
    %3742 = vmatprep.subr.mxu0 0.0
    %3743 = vmatpush1.msra.mxu0 0.0
    %3744 = vmatprep.subr.mxu0 0.0
    %3745 = vmatpush1.msra.mxu0 0.0
    %3746 = vmatprep.subr.mxu0 0.0
    %3747 = vmatpush1.msra.mxu0 0.0
    %3748 = vmatprep.subr.mxu0 0.0
    %3749 = vmatpush1.msra.mxu0 0.0
    %3750 = vmatprep.subr.mxu0 0.0
    %3751 = vmatpush1.msra.mxu0 0.0
    %3752 = vmatprep.subr.mxu0 0.0
    %3753 = vmatpush1.msra.mxu0 0.0
    %3754 = vmatprep.subr.mxu0 0.0
    %3755 = vmatpush1.msra.mxu0 0.0
    %3756 = vmatprep.subr.mxu0 0.0
    %3757 = vmatpush1.msra.mxu0 0.0
    %3758 = vmatprep.subr.mxu0 0.0
    %3759 = vmatpush1.msra.mxu0 0.0
    %3760 = vmatprep.subr.mxu0 0.0
    %3761 = vmatpush1.msra.mxu0 0.0
    %3762 = vmatprep.subr.mxu0 0.0
    %3763 = vmatpush1.msra.mxu0 0.0
    %3764 = vmatprep.subr.mxu0 0.0
    %3765 = vmatpush1.msra.mxu0 0.0
    %3766 = vmatprep.subr.mxu0 0.0
    %3767 = vmatpush1.msra.mxu0 0.0
    %3768 = vmatprep.subr.mxu0 0.0
    %3769 = vmatpush1.msra.mxu0 0.0
    %3770 = vmatprep.subr.mxu0 0.0
    %3771 = vmatpush1.msra.mxu0 0.0
    %3772 = vmatprep.subr.mxu0 0.0
    %3773 = vmatpush1.msra.mxu0 0.0
    %3774 = vmatprep.subr.mxu0 0.0
    %3775 = vmatpush1.msra.mxu0 0.0
    %3776 = vmatprep.subr.mxu0 0.0
    %3777 = vmatpush1.msra.mxu0 0.0
    %3778 = vmatprep.subr.mxu0 0.0
    %3779 = vmatpush1.msra.mxu0 0.0
    %3780 = vmatprep.mubr.f32.mxu0 0.0
    %3781 = vmatmul.mubr.f32.gmra.mrb[0].mxu0 %v3711
    %v3782 = vpop.f32.mrb[0].mxu0
    %v3783 = vadd.f32 %v3708, %v3782
    %v3784 = vpop.f32.mrb[0].mxu0
    %3785 = vmatprep.mubr.f32.mxu0 0.0
    %3786 = vmatmul.mubr.f32.gmra.mrb[0].mxu0 %v3714
    %v3787 = vpop.f32.mrb[0].mxu0
    %v3788 = vadd.f32 %v3708, %v3787
    %v3789 = vpop.f32.mrb[0].mxu0
    %3790 = vdwg.mxu0
    %v3791 = vtanh.pop %v3783
    %v3792 = vtanh.pop %v3788
    %3793 = vst.msk [vmem:[%s24] sm:$0xff] %vm299, %v3791
    %3794 = vst.msk [vmem:[%s24 + $0x8] sm:$0xff] %vm299, %v3792
    // Predicated region
    $region166: #{_lambda_.1} parent=1 // pred_check
      _
    $region167: #{_lambda_.1} parent=1 // pred_check_branch
      %3796 = sbr.rel (0) target = $region169
    $region168: #{_lambda_.1} parent=1 // pred_region
      _
    $region169: #{_lambda_.1} parent=1 // pred_fallthru
      _
    // Predicated region
    $region170: #{_lambda_.1} parent=1 // pred_check
      _
    $region171: #{_lambda_.1} parent=1 // pred_check_branch
      %3798 = sbr.rel (0) target = $region173
    $region172: #{_lambda_.1} parent=1 // pred_region
      _
    $region173: #{_lambda_.1} parent=1 // pred_fallthru
      _
    %3799 = vsyncpa [#allocation7], 1
    %3800 = vsyncpa [#allocation9], 1
    %3801 = vsyncpa [#allocation12], 1
    %3802 = vsyncpa [#allocation15], 1
    %3803 = vsyncpa [#allocation18], 1
    %3804 = vsyncpa [#allocation21], 1
    %3805 = vsyncpa [#allocation24], 1
    %3806 = vsyncpa [#allocation27], 1
    %3807 = vsyncpa [#allocation30], 1

</llo_original>
